<compile_context>
chip_gen: v7x
topology: tpu7x:2x2x1
jax: 0.10.0
libtpu: 0.0.40
codegen_flags: <defaults>
</compile_context>

<pallas_src>
import functools
import numpy as np

import jax
import jax.numpy as jnp
from jax import lax
from jax.experimental import pallas as pl
from jax.experimental.pallas import tpu as pltpu

START_TAG = "<START>"
STOP_TAG = "<STOP>"

TS_PAD = 128   # lane-dense padded tag axis ("next" tag)
TS_SUB = 8     # sublane-padded "prev" tag axis for the Viterbi recursion
NEG = -10000.0


# ---------------------------------------------------------------------------
# Fused kernel: BiLSTM (single layer, batch=1) + hidden2tag + Viterbi max-plus
# ---------------------------------------------------------------------------
def _bilstm_crf_kernel(x_ref, wxall_ref, ball_ref, whf_ref, whb_ref, h0_ref, c0_ref,
                       w2f_ref, w2b_ref, b2_ref, transTp_ref, stoprow_ref,
                       feats_ref, bp_ref, term_ref,
                       xp_scr, fwd_scr, bwd_scr, *, start_idx):
    T = x_ref.shape[0]
    Hh = h0_ref.shape[1]
    G = whf_ref.shape[1]                 # 4 * Hh, packed gate order (i, f, o, g)
    Tp = feats_ref.shape[1]              # lane-padded tag axis (128)
    Ps = transTp_ref.shape[0]            # sublane-padded prev-tag axis (8)

    # ---- hoisted input projection for BOTH directions, biases folded in ----
    xp_scr[...] = (jnp.dot(x_ref[...], wxall_ref[...],
                           preferred_element_type=jnp.float32) + ball_ref[...])

    wh_f = whf_ref[...]                  # (Hh, 4Hh)
    wh_b = whb_ref[...]                  # (Hh, 4Hh)

    def cell(g, c):
        # packed gate order: [i | f | o | g]
        sg = jax.nn.sigmoid(g)
        th = jnp.tanh(g)
        i_g = sg[:, 0 * Hh:1 * Hh]
        f_g = sg[:, 1 * Hh:2 * Hh]
        o_g = sg[:, 2 * Hh:3 * Hh]
        g_g = th[:, 3 * Hh:4 * Hh]
        c_new = f_g * c + i_g * g_g
        h_new = o_g * jnp.tanh(c_new)
        return h_new, c_new

    # ---- interleaved forward / backward recurrence (one loop, two carries) ----
    def lstm_step(s, carry):
        h_f, c_f, h_b, c_b = carry
        tb = T - 1 - s
        xp_f = xp_scr[pl.ds(s, 1), :]            # (1, 2G)
        xp_b = xp_scr[pl.ds(tb, 1), :]
        g_f = xp_f[:, :G] + jnp.dot(h_f, wh_f, preferred_element_type=jnp.float32)
        g_b = xp_b[:, G:] + jnp.dot(h_b, wh_b, preferred_element_type=jnp.float32)
        h_f, c_f = cell(g_f, c_f)
        h_b, c_b = cell(g_b, c_b)
        fwd_scr[pl.ds(s, 1), :] = h_f
        bwd_scr[pl.ds(tb, 1), :] = h_b
        return (h_f, c_f, h_b, c_b)

    lax.fori_loop(
        0, T, lstm_step,
        (h0_ref[0:1, :], c0_ref[0:1, :], h0_ref[1:2, :], c0_ref[1:2, :]),
        unroll=True)

    # ---- hidden2tag: (T,Hh)@(Hh,128) x2, lane-dense output ----
    feats = (jnp.dot(fwd_scr[...], w2f_ref[...], preferred_element_type=jnp.float32)
             + jnp.dot(bwd_scr[...], w2b_ref[...], preferred_element_type=jnp.float32)
             + b2_ref[...])
    feats_ref[...] = feats

    # ---- Viterbi max-plus recursion on a single (8,128) vreg per step ----
    transTp = transTp_ref[...]                                   # transTp[prev, next]
    sub_i = lax.broadcasted_iota(jnp.int32, (Ps, Tp), 0)
    lane_i = lax.broadcasted_iota(jnp.int32, (Ps, Tp), 1)
    eye8 = (sub_i == lane_i).astype(jnp.float32)                 # lanes->sublanes relayout helper
    fv0 = jnp.where(lax.broadcasted_iota(jnp.int32, (Ps, 1), 0) == start_idx,
                    jnp.float32(0.0), jnp.float32(NEG))          # (Ps, 1), indexed by prev tag
    vrow0 = jnp.full((1, Tp), NEG, jnp.float32)

    def vit_step(t, carry):
        fv_col, _ = carry
        M = fv_col + transTp                                     # (Ps, Tp): M[prev, next]
        mx = jnp.max(M, axis=0, keepdims=True)                   # (1, Tp)  best score per next
        # first-occurrence argmax over prev
        bp = jnp.min(jnp.where(M >= mx, sub_i, Ps), axis=0, keepdims=True).astype(jnp.int32)
        bp_ref[pl.ds(t, 1), :] = bp                              # lane-dense (1,128) store
        v_row = mx + feats_ref[pl.ds(t, 1), :]                   # (1, Tp)
        fv_new = jnp.sum(v_row * eye8, axis=1, keepdims=True)    # (Ps,1): v_row[0,p] for p < Ps
        return (fv_new, v_row)

    _, v_last = lax.fori_loop(0, T, vit_step, (fv0, vrow0), unroll=True)
    # terminal_var = forward_var + transitions[STOP]
    term_ref[...] = v_last + stoprow_ref[...]


def bilstm_crf_fused(x, kp, start_idx):
    T = x.shape[0]
    Hh = kp["h0"].shape[1]
    G8 = kp["wx_all"].shape[1]           # 8 * Hh
    vmem = pl.BlockSpec(memory_space=pltpu.MemorySpace.VMEM)
    feats, bp, term = pl.pallas_call(
        functools.partial(_bilstm_crf_kernel, start_idx=start_idx),
        out_shape=(jax.ShapeDtypeStruct((T, TS_PAD), jnp.float32),
                   jax.ShapeDtypeStruct((T, TS_PAD), jnp.int32),
                   jax.ShapeDtypeStruct((1, TS_PAD), jnp.float32)),
        in_specs=[vmem] * 12,
        out_specs=(vmem, vmem, vmem),
        scratch_shapes=[pltpu.VMEM((T, G8), jnp.float32),
                        pltpu.VMEM((T, Hh), jnp.float32),
                        pltpu.VMEM((T, Hh), jnp.float32)],
    )(x, kp["wx_all"], kp["b_all"], kp["wh_f"], kp["wh_b"], kp["h0"], kp["c0"],
      kp["w2f"], kp["w2b"], kp["b2row"], kp["transT_p"], kp["stop_row"])
    return feats, bp, term


def decode_path(bp, term, Ts):
    """Tiny scalar backtrace kept as plain-JAX glue (index chasing)."""
    term_v = term[0, :Ts]
    best_tag = jnp.argmax(term_v).astype(jnp.int32)
    score = term_v[best_tag]

    def body(cur, row):
        nxt = row[cur]
        return nxt, nxt

    _, prevs = lax.scan(body, best_tag, bp[1:][::-1])
    path = jnp.concatenate([prevs[::-1], best_tag[None]])
    return score, path


# ---------------------------------------------------------------------------
# Parameter construction (shapes per the PyTorch module) + kernel-side packing
# ---------------------------------------------------------------------------
def init_params(key, E, H, Ts, start_idx, stop_idx):
    Hh = H // 2
    ks = jax.random.split(key, 16)

    def rnd(k, shape, scale=0.1):
        return scale * jax.random.normal(k, shape, jnp.float32)

    raw = {}
    for d, off in (("f", 0), ("b", 4)):
        raw[f"w_ih_{d}"] = rnd(ks[off + 0], (4 * Hh, E))      # PyTorch gate order i,f,g,o
        raw[f"w_hh_{d}"] = rnd(ks[off + 1], (4 * Hh, Hh))
        raw[f"b_{d}"] = rnd(ks[off + 2], (4 * Hh,)) + rnd(ks[off + 3], (4 * Hh,))
    raw["h0"] = jax.random.normal(ks[8], (2, Hh), jnp.float32)   # init_hidden()
    raw["c0"] = jax.random.normal(ks[9], (2, Hh), jnp.float32)
    raw["w2"] = rnd(ks[10], (Ts, H))
    raw["b2"] = rnd(ks[11], (Ts,))
    trans = jax.random.normal(ks[12], (Ts, Ts), jnp.float32)     # transitions[next, prev]
    trans = trans.at[start_idx, :].set(NEG)
    trans = trans.at[:, stop_idx].set(NEG)
    raw["trans"] = trans
    return raw


def pack_params(raw, E, H, Ts, stop_idx):
    Hh = H // 2
    order = jnp.array([0, 1, 3, 2])      # PyTorch (i,f,g,o) -> packed (i,f,o,g)

    def pack_ih(w_ih):
        w = w_ih.reshape(4, Hh, E)[order]                 # (gate, h_out, e)
        return jnp.transpose(w, (2, 0, 1)).reshape(E, 4 * Hh)

    def pack_hh(w_hh):
        w = w_hh.reshape(4, Hh, Hh)[order]                # (gate, h_out, h_in)
        return jnp.transpose(w, (2, 0, 1)).reshape(Hh, 4 * Hh)

    def pack_b(b):
        return b.reshape(4, Hh)[order].reshape(4 * Hh)

    kp = {}
    kp["wx_all"] = jnp.concatenate([pack_ih(raw["w_ih_f"]), pack_ih(raw["w_ih_b"])], axis=1)
    kp["b_all"] = jnp.concatenate([pack_b(raw["b_f"]), pack_b(raw["b_b"])])[None, :]
    kp["wh_f"] = pack_hh(raw["w_hh_f"])
    kp["wh_b"] = pack_hh(raw["w_hh_b"])
    kp["h0"] = raw["h0"]
    kp["c0"] = raw["c0"]

    w2t = raw["w2"].T                                     # (H, Ts)
    kp["w2f"] = jnp.zeros((Hh, TS_PAD), jnp.float32).at[:, :Ts].set(w2t[:Hh])
    kp["w2b"] = jnp.zeros((Hh, TS_PAD), jnp.float32).at[:, :Ts].set(w2t[Hh:])
    kp["b2row"] = jnp.full((1, TS_PAD), NEG, jnp.float32).at[0, :Ts].set(raw["b2"])

    trans = raw["trans"]
    # transT_p[prev, next] = trans[next, prev]; padded tags get -10000 so they never win.
    kp["transT_p"] = jnp.full((TS_SUB, TS_PAD), NEG, jnp.float32).at[:Ts, :Ts].set(trans.T)
    kp["stop_row"] = jnp.full((1, TS_PAD), NEG, jnp.float32).at[0, :Ts].set(trans[stop_idx])
    return kp


# ---------------------------------------------------------------------------
# Pure JAX / NumPy reference (same math) for a correctness sanity check
# ---------------------------------------------------------------------------
def ref_forward(x, raw, start_idx, stop_idx):
    T, E = x.shape
    Hh = raw["h0"].shape[1]

    def run_dir(w_ih, w_hh, b, h0, c0, reverse):
        wxs = w_ih.reshape(4, Hh, E)
        whs = w_hh.reshape(4, Hh, Hh)
        bs = b.reshape(4, Hh)
        idxs = range(T - 1, -1, -1) if reverse else range(T)
        h, c = h0[None, :], c0[None, :]
        outs = [None] * T
        for t in idxs:
            x_t = x[t:t + 1]
            g = [x_t @ wxs[k].T + h @ whs[k].T + bs[k:k + 1] for k in range(4)]
            i = jax.nn.sigmoid(g[0]); f = jax.nn.sigmoid(g[1])
            gg = jnp.tanh(g[2]); o = jax.nn.sigmoid(g[3])
            c = f * c + i * gg
            h = o * jnp.tanh(c)
            outs[t] = h
        return jnp.concatenate(outs, axis=0)

    fwd = run_dir(raw["w_ih_f"], raw["w_hh_f"], raw["b_f"], raw["h0"][0], raw["c0"][0], False)
    bwd = run_dir(raw["w_ih_b"], raw["w_hh_b"], raw["b_b"], raw["h0"][1], raw["c0"][1], True)
    feats = jnp.concatenate([fwd, bwd], axis=1) @ raw["w2"].T + raw["b2"][None, :]

    feats_np = np.array(feats)
    trans_np = np.array(raw["trans"])
    Ts = trans_np.shape[0]
    fv = np.full((Ts,), NEG, np.float32)
    fv[start_idx] = 0.0
    bps = []
    for t in range(T):
        M = fv[None, :] + trans_np              # M[next, prev]
        bps.append(M.argmax(axis=1))
        fv = M.max(axis=1) + feats_np[t]
    term = fv + trans_np[stop_idx]
    best = int(term.argmax())
    score = float(term[best])
    path = [best]
    for bp in reversed(bps):
        best = int(bp[best])
        path.append(best)
    start = path.pop()
    assert start == start_idx
    path.reverse()
    return score, path, feats


# ---------------------------------------------------------------------------
if __name__ == "__main__":
    T, E, H = 8, 32, 32                      # seq len, embedding_dim, hidden_dim
    biluo_code = {"O": 0, "B": 1, "I": 2, "L": 3, "U": 4, START_TAG: 5, STOP_TAG: 6}
    Ts = len(biluo_code)
    start_idx, stop_idx = biluo_code[START_TAG], biluo_code[STOP_TAG]
    assert Ts <= TS_SUB and start_idx < TS_SUB

    key = jax.random.PRNGKey(0)
    kx, kp_key = jax.random.split(key)
    x = jax.random.normal(kx, (T, E), jnp.float32)   # synthetic "SciBERT" embeddings
    raw = init_params(kp_key, E, H, Ts, start_idx, stop_idx)
    kp = pack_params(raw, E, H, Ts, stop_idx)

    feats_pad, bp, term = bilstm_crf_fused(x, kp, start_idx)
    score, path = decode_path(bp, term, Ts)
    jax.block_until_ready((feats_pad, bp, term, score, path))

    ref_score, ref_path, ref_feats = ref_forward(x, raw, start_idx, stop_idx)
    assert jnp.allclose(feats_pad[:, :Ts], ref_feats, atol=1e-3), "lstm feature mismatch"
    assert abs(float(score) - ref_score) < 1e-2, "viterbi score mismatch"
    assert [int(v) for v in path] == ref_path, "viterbi path mismatch"

    print("KERNEL_OK")
</pallas_src>

<mosaic_0001>
module attributes {stable_mosaic.version = 11 : i64} {
  func.func @_bilstm_crf_kernel(%arg0: memref<8x32xf32, #tpu.memory_space<vmem>>, %arg1: memref<32x128xf32, #tpu.memory_space<vmem>>, %arg2: memref<1x128xf32, #tpu.memory_space<vmem>>, %arg3: memref<16x64xf32, #tpu.memory_space<vmem>>, %arg4: memref<16x64xf32, #tpu.memory_space<vmem>>, %arg5: memref<2x16xf32, #tpu.memory_space<vmem>>, %arg6: memref<2x16xf32, #tpu.memory_space<vmem>>, %arg7: memref<16x128xf32, #tpu.memory_space<vmem>>, %arg8: memref<16x128xf32, #tpu.memory_space<vmem>>, %arg9: memref<1x128xf32, #tpu.memory_space<vmem>>, %arg10: memref<8x128xf32, #tpu.memory_space<vmem>>, %arg11: memref<1x128xf32, #tpu.memory_space<vmem>>, %arg12: memref<8x128xf32, #tpu.memory_space<vmem>>, %arg13: memref<8x128xi32, #tpu.memory_space<vmem>>, %arg14: memref<1x128xf32, #tpu.memory_space<vmem>>, %arg15: memref<8x128xf32, #tpu.memory_space<vmem>>, %arg16: memref<8x16xf32, #tpu.memory_space<vmem>>, %arg17: memref<8x16xf32, #tpu.memory_space<vmem>>) attributes {dimension_semantics = [], scalar_prefetch = 0 : i64, scratch_operands = 3 : i64, tpu.core_type = #tpu.core_type<tc>} {
    %c0 = arith.constant 0 : index
    %c0_0 = arith.constant 0 : index
    %0 = vector.load %arg0[%c0, %c0_0] : memref<8x32xf32, #tpu.memory_space<vmem>>, vector<8x32xf32>
    %c0_1 = arith.constant 0 : index
    %c0_2 = arith.constant 0 : index
    %1 = vector.load %arg1[%c0_1, %c0_2] : memref<32x128xf32, #tpu.memory_space<vmem>>, vector<32x128xf32>
    %cst = arith.constant dense<0.000000e+00> : vector<8x128xf32>
    %2 = tpu.matmul %0, %1, %cst {dimension_numbers = #tpu.dot_dimension_numbers<[1], [0], [0], [1], [0, 0, 1, 1], [], []>} : vector<8x32xf32>, vector<32x128xf32>, vector<8x128xf32> -> vector<8x128xf32>
    %c0_3 = arith.constant 0 : index
    %c0_4 = arith.constant 0 : index
    %3 = vector.load %arg2[%c0_3, %c0_4] : memref<1x128xf32, #tpu.memory_space<vmem>>, vector<1x128xf32>
    %4 = vector.broadcast %3 : vector<1x128xf32> to vector<8x128xf32>
    %5 = arith.addf %2, %4 : vector<8x128xf32>
    %c0_5 = arith.constant 0 : index
    %c0_6 = arith.constant 0 : index
    %6 = vector.load %arg15[%c0_5, %c0_6] : memref<8x128xf32, #tpu.memory_space<vmem>>, vector<8x128xf32>
    tpu.vector_store %arg15[%c0_5, %c0_6], %5 {strides = array<i32>} : memref<8x128xf32, #tpu.memory_space<vmem>>, vector<8x128xf32>,
    %c0_7 = arith.constant 0 : index
    %c0_8 = arith.constant 0 : index
    %7 = vector.load %arg3[%c0_7, %c0_8] : memref<16x64xf32, #tpu.memory_space<vmem>>, vector<16x64xf32>
    %c0_9 = arith.constant 0 : index
    %c0_10 = arith.constant 0 : index
    %8 = vector.load %arg4[%c0_9, %c0_10] : memref<16x64xf32, #tpu.memory_space<vmem>>, vector<16x64xf32>
    %c0_11 = arith.constant 0 : index
    %c0_12 = arith.constant 0 : index
    %9 = vector.load %arg5[%c0_11, %c0_12] : memref<2x16xf32, #tpu.memory_space<vmem>>, vector<1x16xf32>
    %c0_13 = arith.constant 0 : index
    %c0_14 = arith.constant 0 : index
    %10 = vector.load %arg6[%c0_13, %c0_14] : memref<2x16xf32, #tpu.memory_space<vmem>>, vector<1x16xf32>
    %c1 = arith.constant 1 : index
    %c0_15 = arith.constant 0 : index
    %11 = vector.load %arg5[%c1, %c0_15] : memref<2x16xf32, #tpu.memory_space<vmem>>, vector<1x16xf32>
    %c1_16 = arith.constant 1 : index
    %c0_17 = arith.constant 0 : index
    %12 = vector.load %arg6[%c1_16, %c0_17] : memref<2x16xf32, #tpu.memory_space<vmem>>, vector<1x16xf32>
    %c0_i32 = arith.constant 0 : i32
    %c7_i32 = arith.constant 7 : i32
    %13 = arith.subi %c7_i32, %c0_i32 : i32
    %14 = arith.index_cast %c0_i32 : i32 to index
    %c0_18 = arith.constant 0 : index
    %15 = vector.load %arg15[%14, %c0_18] : memref<8x128xf32, #tpu.memory_space<vmem>>, vector<1x128xf32>
    %16 = arith.index_cast %13 : i32 to index
    %c0_19 = arith.constant 0 : index
    %17 = vector.load %arg15[%16, %c0_19] : memref<8x128xf32, #tpu.memory_space<vmem>>, vector<1x128xf32>
    %18 = vector.extract_strided_slice %15 {offsets = [0, 0], sizes = [1, 64], strides = [1, 1]} : vector<1x128xf32> to vector<1x64xf32>
    %cst_20 = arith.constant dense<0.000000e+00> : vector<1x64xf32>
    %19 = tpu.matmul %9, %7, %cst_20 {dimension_numbers = #tpu.dot_dimension_numbers<[1], [0], [0], [1], [0, 0, 1, 1], [], []>} : vector<1x16xf32>, vector<16x64xf32>, vector<1x64xf32> -> vector<1x64xf32>
    %20 = arith.addf %18, %19 : vector<1x64xf32>
    %21 = vector.extract_strided_slice %17 {offsets = [0, 64], sizes = [1, 64], strides = [1, 1]} : vector<1x128xf32> to vector<1x64xf32>
    %cst_21 = arith.constant dense<0.000000e+00> : vector<1x64xf32>
    %22 = tpu.matmul %11, %8, %cst_21 {dimension_numbers = #tpu.dot_dimension_numbers<[1], [0], [0], [1], [0, 0, 1, 1], [], []>} : vector<1x16xf32>, vector<16x64xf32>, vector<1x64xf32> -> vector<1x64xf32>
    %23 = arith.addf %21, %22 : vector<1x64xf32>
    %24 = arith.negf %20 : vector<1x64xf32>
    %25 = math.exp %24 : vector<1x64xf32>
    %cst_22 = arith.constant 1.000000e+00 : f32
    %26 = vector.broadcast %cst_22 : f32 to vector<1x64xf32>
    %27 = arith.addf %26, %25 : vector<1x64xf32>
    %28 = arith.divf %26, %27 : vector<1x64xf32>
    %29 = math.tanh %20 : vector<1x64xf32>
    %30 = vector.extract_strided_slice %28 {offsets = [0, 0], sizes = [1, 16], strides = [1, 1]} : vector<1x64xf32> to vector<1x16xf32>
    %31 = vector.extract_strided_slice %28 {offsets = [0, 16], sizes = [1, 16], strides = [1, 1]} : vector<1x64xf32> to vector<1x16xf32>
    %32 = vector.extract_strided_slice %28 {offsets = [0, 32], sizes = [1, 16], strides = [1, 1]} : vector<1x64xf32> to vector<1x16xf32>
    %33 = vector.extract_strided_slice %29 {offsets = [0, 48], sizes = [1, 16], strides = [1, 1]} : vector<1x64xf32> to vector<1x16xf32>
    %34 = arith.mulf %31, %10 : vector<1x16xf32>
    %35 = arith.mulf %30, %33 : vector<1x16xf32>
    %36 = arith.addf %34, %35 : vector<1x16xf32>
    %37 = math.tanh %36 : vector<1x16xf32>
    %38 = arith.mulf %32, %37 : vector<1x16xf32>
    %39 = arith.negf %23 : vector<1x64xf32>
    %40 = math.exp %39 : vector<1x64xf32>
    %cst_23 = arith.constant 1.000000e+00 : f32
    %41 = vector.broadcast %cst_23 : f32 to vector<1x64xf32>
    %42 = arith.addf %41, %40 : vector<1x64xf32>
    %43 = arith.divf %41, %42 : vector<1x64xf32>
    %44 = math.tanh %23 : vector<1x64xf32>
    %45 = vector.extract_strided_slice %43 {offsets = [0, 0], sizes = [1, 16], strides = [1, 1]} : vector<1x64xf32> to vector<1x16xf32>
    %46 = vector.extract_strided_slice %43 {offsets = [0, 16], sizes = [1, 16], strides = [1, 1]} : vector<1x64xf32> to vector<1x16xf32>
    %47 = vector.extract_strided_slice %43 {offsets = [0, 32], sizes = [1, 16], strides = [1, 1]} : vector<1x64xf32> to vector<1x16xf32>
    %48 = vector.extract_strided_slice %44 {offsets = [0, 48], sizes = [1, 16], strides = [1, 1]} : vector<1x64xf32> to vector<1x16xf32>
    %49 = arith.mulf %46, %12 : vector<1x16xf32>
    %50 = arith.mulf %45, %48 : vector<1x16xf32>
    %51 = arith.addf %49, %50 : vector<1x16xf32>
    %52 = math.tanh %51 : vector<1x16xf32>
    %53 = arith.mulf %47, %52 : vector<1x16xf32>
    %54 = arith.index_cast %c0_i32 : i32 to index
    %c0_24 = arith.constant 0 : index
    %55 = vector.load %arg16[%54, %c0_24] : memref<8x16xf32, #tpu.memory_space<vmem>>, vector<1x16xf32>
    tpu.vector_store %arg16[%54, %c0_24], %38 {strides = array<i32>} : memref<8x16xf32, #tpu.memory_space<vmem>>, vector<1x16xf32>,
    %56 = arith.index_cast %13 : i32 to index
    %c0_25 = arith.constant 0 : index
    %57 = vector.load %arg17[%56, %c0_25] : memref<8x16xf32, #tpu.memory_space<vmem>>, vector<1x16xf32>
    tpu.vector_store %arg17[%56, %c0_25], %53 {strides = array<i32>} : memref<8x16xf32, #tpu.memory_space<vmem>>, vector<1x16xf32>,
    %c1_i32 = arith.constant 1 : i32
    %c7_i32_26 = arith.constant 7 : i32
    %58 = arith.subi %c7_i32_26, %c1_i32 : i32
    %59 = arith.index_cast %c1_i32 : i32 to index
    %c0_27 = arith.constant 0 : index
    %60 = vector.load %arg15[%59, %c0_27] : memref<8x128xf32, #tpu.memory_space<vmem>>, vector<1x128xf32>
    %61 = arith.index_cast %58 : i32 to index
    %c0_28 = arith.constant 0 : index
    %62 = vector.load %arg15[%61, %c0_28] : memref<8x128xf32, #tpu.memory_space<vmem>>, vector<1x128xf32>
    %63 = vector.extract_strided_slice %60 {offsets = [0, 0], sizes = [1, 64], strides = [1, 1]} : vector<1x128xf32> to vector<1x64xf32>
    %cst_29 = arith.constant dense<0.000000e+00> : vector<1x64xf32>
    %64 = tpu.matmul %38, %7, %cst_29 {dimension_numbers = #tpu.dot_dimension_numbers<[1], [0], [0], [1], [0, 0, 1, 1], [], []>} : vector<1x16xf32>, vector<16x64xf32>, vector<1x64xf32> -> vector<1x64xf32>
    %65 = arith.addf %63, %64 : vector<1x64xf32>
    %66 = vector.extract_strided_slice %62 {offsets = [0, 64], sizes = [1, 64], strides = [1, 1]} : vector<1x128xf32> to vector<1x64xf32>
    %cst_30 = arith.constant dense<0.000000e+00> : vector<1x64xf32>
    %67 = tpu.matmul %53, %8, %cst_30 {dimension_numbers = #tpu.dot_dimension_numbers<[1], [0], [0], [1], [0, 0, 1, 1], [], []>} : vector<1x16xf32>, vector<16x64xf32>, vector<1x64xf32> -> vector<1x64xf32>
    %68 = arith.addf %66, %67 : vector<1x64xf32>
    %69 = arith.negf %65 : vector<1x64xf32>
    %70 = math.exp %69 : vector<1x64xf32>
    %cst_31 = arith.constant 1.000000e+00 : f32
    %71 = vector.broadcast %cst_31 : f32 to vector<1x64xf32>
    %72 = arith.addf %71, %70 : vector<1x64xf32>
    %73 = arith.divf %71, %72 : vector<1x64xf32>
    %74 = math.tanh %65 : vector<1x64xf32>
    %75 = vector.extract_strided_slice %73 {offsets = [0, 0], sizes = [1, 16], strides = [1, 1]} : vector<1x64xf32> to vector<1x16xf32>
    %76 = vector.extract_strided_slice %73 {offsets = [0, 16], sizes = [1, 16], strides = [1, 1]} : vector<1x64xf32> to vector<1x16xf32>
    %77 = vector.extract_strided_slice %73 {offsets = [0, 32], sizes = [1, 16], strides = [1, 1]} : vector<1x64xf32> to vector<1x16xf32>
    %78 = vector.extract_strided_slice %74 {offsets = [0, 48], sizes = [1, 16], strides = [1, 1]} : vector<1x64xf32> to vector<1x16xf32>
    %79 = arith.mulf %76, %36 : vector<1x16xf32>
    %80 = arith.mulf %75, %78 : vector<1x16xf32>
    %81 = arith.addf %79, %80 : vector<1x16xf32>
    %82 = math.tanh %81 : vector<1x16xf32>
    %83 = arith.mulf %77, %82 : vector<1x16xf32>
    %84 = arith.negf %68 : vector<1x64xf32>
    %85 = math.exp %84 : vector<1x64xf32>
    %cst_32 = arith.constant 1.000000e+00 : f32
    %86 = vector.broadcast %cst_32 : f32 to vector<1x64xf32>
    %87 = arith.addf %86, %85 : vector<1x64xf32>
    %88 = arith.divf %86, %87 : vector<1x64xf32>
    %89 = math.tanh %68 : vector<1x64xf32>
    %90 = vector.extract_strided_slice %88 {offsets = [0, 0], sizes = [1, 16], strides = [1, 1]} : vector<1x64xf32> to vector<1x16xf32>
    %91 = vector.extract_strided_slice %88 {offsets = [0, 16], sizes = [1, 16], strides = [1, 1]} : vector<1x64xf32> to vector<1x16xf32>
    %92 = vector.extract_strided_slice %88 {offsets = [0, 32], sizes = [1, 16], strides = [1, 1]} : vector<1x64xf32> to vector<1x16xf32>
    %93 = vector.extract_strided_slice %89 {offsets = [0, 48], sizes = [1, 16], strides = [1, 1]} : vector<1x64xf32> to vector<1x16xf32>
    %94 = arith.mulf %91, %51 : vector<1x16xf32>
    %95 = arith.mulf %90, %93 : vector<1x16xf32>
    %96 = arith.addf %94, %95 : vector<1x16xf32>
    %97 = math.tanh %96 : vector<1x16xf32>
    %98 = arith.mulf %92, %97 : vector<1x16xf32>
    %99 = arith.index_cast %c1_i32 : i32 to index
    %c0_33 = arith.constant 0 : index
    %100 = vector.load %arg16[%99, %c0_33] : memref<8x16xf32, #tpu.memory_space<vmem>>, vector<1x16xf32>
    tpu.vector_store %arg16[%99, %c0_33], %83 {strides = array<i32>} : memref<8x16xf32, #tpu.memory_space<vmem>>, vector<1x16xf32>,
    %101 = arith.index_cast %58 : i32 to index
    %c0_34 = arith.constant 0 : index
    %102 = vector.load %arg17[%101, %c0_34] : memref<8x16xf32, #tpu.memory_space<vmem>>, vector<1x16xf32>
    tpu.vector_store %arg17[%101, %c0_34], %98 {strides = array<i32>} : memref<8x16xf32, #tpu.memory_space<vmem>>, vector<1x16xf32>,
    %c2_i32 = arith.constant 2 : i32
    %c7_i32_35 = arith.constant 7 : i32
    %103 = arith.subi %c7_i32_35, %c2_i32 : i32
    %104 = arith.index_cast %c2_i32 : i32 to index
    %c0_36 = arith.constant 0 : index
    %105 = vector.load %arg15[%104, %c0_36] : memref<8x128xf32, #tpu.memory_space<vmem>>, vector<1x128xf32>
    %106 = arith.index_cast %103 : i32 to index
    %c0_37 = arith.constant 0 : index
    %107 = vector.load %arg15[%106, %c0_37] : memref<8x128xf32, #tpu.memory_space<vmem>>, vector<1x128xf32>
    %108 = vector.extract_strided_slice %105 {offsets = [0, 0], sizes = [1, 64], strides = [1, 1]} : vector<1x128xf32> to vector<1x64xf32>
    %cst_38 = arith.constant dense<0.000000e+00> : vector<1x64xf32>
    %109 = tpu.matmul %83, %7, %cst_38 {dimension_numbers = #tpu.dot_dimension_numbers<[1], [0], [0], [1], [0, 0, 1, 1], [], []>} : vector<1x16xf32>, vector<16x64xf32>, vector<1x64xf32> -> vector<1x64xf32>
    %110 = arith.addf %108, %109 : vector<1x64xf32>
    %111 = vector.extract_strided_slice %107 {offsets = [0, 64], sizes = [1, 64], strides = [1, 1]} : vector<1x128xf32> to vector<1x64xf32>
    %cst_39 = arith.constant dense<0.000000e+00> : vector<1x64xf32>
    %112 = tpu.matmul %98, %8, %cst_39 {dimension_numbers = #tpu.dot_dimension_numbers<[1], [0], [0], [1], [0, 0, 1, 1], [], []>} : vector<1x16xf32>, vector<16x64xf32>, vector<1x64xf32> -> vector<1x64xf32>
    %113 = arith.addf %111, %112 : vector<1x64xf32>
    %114 = arith.negf %110 : vector<1x64xf32>
    %115 = math.exp %114 : vector<1x64xf32>
    %cst_40 = arith.constant 1.000000e+00 : f32
    %116 = vector.broadcast %cst_40 : f32 to vector<1x64xf32>
    %117 = arith.addf %116, %115 : vector<1x64xf32>
    %118 = arith.divf %116, %117 : vector<1x64xf32>
    %119 = math.tanh %110 : vector<1x64xf32>
    %120 = vector.extract_strided_slice %118 {offsets = [0, 0], sizes = [1, 16], strides = [1, 1]} : vector<1x64xf32> to vector<1x16xf32>
    %121 = vector.extract_strided_slice %118 {offsets = [0, 16], sizes = [1, 16], strides = [1, 1]} : vector<1x64xf32> to vector<1x16xf32>
    %122 = vector.extract_strided_slice %118 {offsets = [0, 32], sizes = [1, 16], strides = [1, 1]} : vector<1x64xf32> to vector<1x16xf32>
    %123 = vector.extract_strided_slice %119 {offsets = [0, 48], sizes = [1, 16], strides = [1, 1]} : vector<1x64xf32> to vector<1x16xf32>
    %124 = arith.mulf %121, %81 : vector<1x16xf32>
    %125 = arith.mulf %120, %123 : vector<1x16xf32>
    %126 = arith.addf %124, %125 : vector<1x16xf32>
    %127 = math.tanh %126 : vector<1x16xf32>
    %128 = arith.mulf %122, %127 : vector<1x16xf32>
    %129 = arith.negf %113 : vector<1x64xf32>
    %130 = math.exp %129 : vector<1x64xf32>
    %cst_41 = arith.constant 1.000000e+00 : f32
    %131 = vector.broadcast %cst_41 : f32 to vector<1x64xf32>
    %132 = arith.addf %131, %130 : vector<1x64xf32>
    %133 = arith.divf %131, %132 : vector<1x64xf32>
    %134 = math.tanh %113 : vector<1x64xf32>
    %135 = vector.extract_strided_slice %133 {offsets = [0, 0], sizes = [1, 16], strides = [1, 1]} : vector<1x64xf32> to vector<1x16xf32>
    %136 = vector.extract_strided_slice %133 {offsets = [0, 16], sizes = [1, 16], strides = [1, 1]} : vector<1x64xf32> to vector<1x16xf32>
    %137 = vector.extract_strided_slice %133 {offsets = [0, 32], sizes = [1, 16], strides = [1, 1]} : vector<1x64xf32> to vector<1x16xf32>
    %138 = vector.extract_strided_slice %134 {offsets = [0, 48], sizes = [1, 16], strides = [1, 1]} : vector<1x64xf32> to vector<1x16xf32>
    %139 = arith.mulf %136, %96 : vector<1x16xf32>
    %140 = arith.mulf %135, %138 : vector<1x16xf32>
    %141 = arith.addf %139, %140 : vector<1x16xf32>
    %142 = math.tanh %141 : vector<1x16xf32>
    %143 = arith.mulf %137, %142 : vector<1x16xf32>
    %144 = arith.index_cast %c2_i32 : i32 to index
    %c0_42 = arith.constant 0 : index
    %145 = vector.load %arg16[%144, %c0_42] : memref<8x16xf32, #tpu.memory_space<vmem>>, vector<1x16xf32>
    tpu.vector_store %arg16[%144, %c0_42], %128 {strides = array<i32>} : memref<8x16xf32, #tpu.memory_space<vmem>>, vector<1x16xf32>,
    %146 = arith.index_cast %103 : i32 to index
    %c0_43 = arith.constant 0 : index
    %147 = vector.load %arg17[%146, %c0_43] : memref<8x16xf32, #tpu.memory_space<vmem>>, vector<1x16xf32>
    tpu.vector_store %arg17[%146, %c0_43], %143 {strides = array<i32>} : memref<8x16xf32, #tpu.memory_space<vmem>>, vector<1x16xf32>,
    %c3_i32 = arith.constant 3 : i32
    %c7_i32_44 = arith.constant 7 : i32
    %148 = arith.subi %c7_i32_44, %c3_i32 : i32
    %149 = arith.index_cast %c3_i32 : i32 to index
    %c0_45 = arith.constant 0 : index
    %150 = vector.load %arg15[%149, %c0_45] : memref<8x128xf32, #tpu.memory_space<vmem>>, vector<1x128xf32>
    %151 = arith.index_cast %148 : i32 to index
    %c0_46 = arith.constant 0 : index
    %152 = vector.load %arg15[%151, %c0_46] : memref<8x128xf32, #tpu.memory_space<vmem>>, vector<1x128xf32>
    %153 = vector.extract_strided_slice %150 {offsets = [0, 0], sizes = [1, 64], strides = [1, 1]} : vector<1x128xf32> to vector<1x64xf32>
    %cst_47 = arith.constant dense<0.000000e+00> : vector<1x64xf32>
    %154 = tpu.matmul %128, %7, %cst_47 {dimension_numbers = #tpu.dot_dimension_numbers<[1], [0], [0], [1], [0, 0, 1, 1], [], []>} : vector<1x16xf32>, vector<16x64xf32>, vector<1x64xf32> -> vector<1x64xf32>
    %155 = arith.addf %153, %154 : vector<1x64xf32>
    %156 = vector.extract_strided_slice %152 {offsets = [0, 64], sizes = [1, 64], strides = [1, 1]} : vector<1x128xf32> to vector<1x64xf32>
    %cst_48 = arith.constant dense<0.000000e+00> : vector<1x64xf32>
    %157 = tpu.matmul %143, %8, %cst_48 {dimension_numbers = #tpu.dot_dimension_numbers<[1], [0], [0], [1], [0, 0, 1, 1], [], []>} : vector<1x16xf32>, vector<16x64xf32>, vector<1x64xf32> -> vector<1x64xf32>
    %158 = arith.addf %156, %157 : vector<1x64xf32>
    %159 = arith.negf %155 : vector<1x64xf32>
    %160 = math.exp %159 : vector<1x64xf32>
    %cst_49 = arith.constant 1.000000e+00 : f32
    %161 = vector.broadcast %cst_49 : f32 to vector<1x64xf32>
    %162 = arith.addf %161, %160 : vector<1x64xf32>
    %163 = arith.divf %161, %162 : vector<1x64xf32>
    %164 = math.tanh %155 : vector<1x64xf32>
    %165 = vector.extract_strided_slice %163 {offsets = [0, 0], sizes = [1, 16], strides = [1, 1]} : vector<1x64xf32> to vector<1x16xf32>
    %166 = vector.extract_strided_slice %163 {offsets = [0, 16], sizes = [1, 16], strides = [1, 1]} : vector<1x64xf32> to vector<1x16xf32>
    %167 = vector.extract_strided_slice %163 {offsets = [0, 32], sizes = [1, 16], strides = [1, 1]} : vector<1x64xf32> to vector<1x16xf32>
    %168 = vector.extract_strided_slice %164 {offsets = [0, 48], sizes = [1, 16], strides = [1, 1]} : vector<1x64xf32> to vector<1x16xf32>
    %169 = arith.mulf %166, %126 : vector<1x16xf32>
    %170 = arith.mulf %165, %168 : vector<1x16xf32>
    %171 = arith.addf %169, %170 : vector<1x16xf32>
    %172 = math.tanh %171 : vector<1x16xf32>
    %173 = arith.mulf %167, %172 : vector<1x16xf32>
    %174 = arith.negf %158 : vector<1x64xf32>
    %175 = math.exp %174 : vector<1x64xf32>
    %cst_50 = arith.constant 1.000000e+00 : f32
    %176 = vector.broadcast %cst_50 : f32 to vector<1x64xf32>
    %177 = arith.addf %176, %175 : vector<1x64xf32>
    %178 = arith.divf %176, %177 : vector<1x64xf32>
    %179 = math.tanh %158 : vector<1x64xf32>
    %180 = vector.extract_strided_slice %178 {offsets = [0, 0], sizes = [1, 16], strides = [1, 1]} : vector<1x64xf32> to vector<1x16xf32>
    %181 = vector.extract_strided_slice %178 {offsets = [0, 16], sizes = [1, 16], strides = [1, 1]} : vector<1x64xf32> to vector<1x16xf32>
    %182 = vector.extract_strided_slice %178 {offsets = [0, 32], sizes = [1, 16], strides = [1, 1]} : vector<1x64xf32> to vector<1x16xf32>
    %183 = vector.extract_strided_slice %179 {offsets = [0, 48], sizes = [1, 16], strides = [1, 1]} : vector<1x64xf32> to vector<1x16xf32>
    %184 = arith.mulf %181, %141 : vector<1x16xf32>
    %185 = arith.mulf %180, %183 : vector<1x16xf32>
    %186 = arith.addf %184, %185 : vector<1x16xf32>
    %187 = math.tanh %186 : vector<1x16xf32>
    %188 = arith.mulf %182, %187 : vector<1x16xf32>
    %189 = arith.index_cast %c3_i32 : i32 to index
    %c0_51 = arith.constant 0 : index
    %190 = vector.load %arg16[%189, %c0_51] : memref<8x16xf32, #tpu.memory_space<vmem>>, vector<1x16xf32>
    tpu.vector_store %arg16[%189, %c0_51], %173 {strides = array<i32>} : memref<8x16xf32, #tpu.memory_space<vmem>>, vector<1x16xf32>,
    %191 = arith.index_cast %148 : i32 to index
    %c0_52 = arith.constant 0 : index
    %192 = vector.load %arg17[%191, %c0_52] : memref<8x16xf32, #tpu.memory_space<vmem>>, vector<1x16xf32>
    tpu.vector_store %arg17[%191, %c0_52], %188 {strides = array<i32>} : memref<8x16xf32, #tpu.memory_space<vmem>>, vector<1x16xf32>,
    %c4_i32 = arith.constant 4 : i32
    %c7_i32_53 = arith.constant 7 : i32
    %193 = arith.subi %c7_i32_53, %c4_i32 : i32
    %194 = arith.index_cast %c4_i32 : i32 to index
    %c0_54 = arith.constant 0 : index
    %195 = vector.load %arg15[%194, %c0_54] : memref<8x128xf32, #tpu.memory_space<vmem>>, vector<1x128xf32>
    %196 = arith.index_cast %193 : i32 to index
    %c0_55 = arith.constant 0 : index
    %197 = vector.load %arg15[%196, %c0_55] : memref<8x128xf32, #tpu.memory_space<vmem>>, vector<1x128xf32>
    %198 = vector.extract_strided_slice %195 {offsets = [0, 0], sizes = [1, 64], strides = [1, 1]} : vector<1x128xf32> to vector<1x64xf32>
    %cst_56 = arith.constant dense<0.000000e+00> : vector<1x64xf32>
    %199 = tpu.matmul %173, %7, %cst_56 {dimension_numbers = #tpu.dot_dimension_numbers<[1], [0], [0], [1], [0, 0, 1, 1], [], []>} : vector<1x16xf32>, vector<16x64xf32>, vector<1x64xf32> -> vector<1x64xf32>
    %200 = arith.addf %198, %199 : vector<1x64xf32>
    %201 = vector.extract_strided_slice %197 {offsets = [0, 64], sizes = [1, 64], strides = [1, 1]} : vector<1x128xf32> to vector<1x64xf32>
    %cst_57 = arith.constant dense<0.000000e+00> : vector<1x64xf32>
    %202 = tpu.matmul %188, %8, %cst_57 {dimension_numbers = #tpu.dot_dimension_numbers<[1], [0], [0], [1], [0, 0, 1, 1], [], []>} : vector<1x16xf32>, vector<16x64xf32>, vector<1x64xf32> -> vector<1x64xf32>
    %203 = arith.addf %201, %202 : vector<1x64xf32>
    %204 = arith.negf %200 : vector<1x64xf32>
    %205 = math.exp %204 : vector<1x64xf32>
    %cst_58 = arith.constant 1.000000e+00 : f32
    %206 = vector.broadcast %cst_58 : f32 to vector<1x64xf32>
    %207 = arith.addf %206, %205 : vector<1x64xf32>
    %208 = arith.divf %206, %207 : vector<1x64xf32>
    %209 = math.tanh %200 : vector<1x64xf32>
    %210 = vector.extract_strided_slice %208 {offsets = [0, 0], sizes = [1, 16], strides = [1, 1]} : vector<1x64xf32> to vector<1x16xf32>
    %211 = vector.extract_strided_slice %208 {offsets = [0, 16], sizes = [1, 16], strides = [1, 1]} : vector<1x64xf32> to vector<1x16xf32>
    %212 = vector.extract_strided_slice %208 {offsets = [0, 32], sizes = [1, 16], strides = [1, 1]} : vector<1x64xf32> to vector<1x16xf32>
    %213 = vector.extract_strided_slice %209 {offsets = [0, 48], sizes = [1, 16], strides = [1, 1]} : vector<1x64xf32> to vector<1x16xf32>
    %214 = arith.mulf %211, %171 : vector<1x16xf32>
    %215 = arith.mulf %210, %213 : vector<1x16xf32>
    %216 = arith.addf %214, %215 : vector<1x16xf32>
    %217 = math.tanh %216 : vector<1x16xf32>
    %218 = arith.mulf %212, %217 : vector<1x16xf32>
    %219 = arith.negf %203 : vector<1x64xf32>
    %220 = math.exp %219 : vector<1x64xf32>
    %cst_59 = arith.constant 1.000000e+00 : f32
    %221 = vector.broadcast %cst_59 : f32 to vector<1x64xf32>
    %222 = arith.addf %221, %220 : vector<1x64xf32>
    %223 = arith.divf %221, %222 : vector<1x64xf32>
    %224 = math.tanh %203 : vector<1x64xf32>
    %225 = vector.extract_strided_slice %223 {offsets = [0, 0], sizes = [1, 16], strides = [1, 1]} : vector<1x64xf32> to vector<1x16xf32>
    %226 = vector.extract_strided_slice %223 {offsets = [0, 16], sizes = [1, 16], strides = [1, 1]} : vector<1x64xf32> to vector<1x16xf32>
    %227 = vector.extract_strided_slice %223 {offsets = [0, 32], sizes = [1, 16], strides = [1, 1]} : vector<1x64xf32> to vector<1x16xf32>
    %228 = vector.extract_strided_slice %224 {offsets = [0, 48], sizes = [1, 16], strides = [1, 1]} : vector<1x64xf32> to vector<1x16xf32>
    %229 = arith.mulf %226, %186 : vector<1x16xf32>
    %230 = arith.mulf %225, %228 : vector<1x16xf32>
    %231 = arith.addf %229, %230 : vector<1x16xf32>
    %232 = math.tanh %231 : vector<1x16xf32>
    %233 = arith.mulf %227, %232 : vector<1x16xf32>
    %234 = arith.index_cast %c4_i32 : i32 to index
    %c0_60 = arith.constant 0 : index
    %235 = vector.load %arg16[%234, %c0_60] : memref<8x16xf32, #tpu.memory_space<vmem>>, vector<1x16xf32>
    tpu.vector_store %arg16[%234, %c0_60], %218 {strides = array<i32>} : memref<8x16xf32, #tpu.memory_space<vmem>>, vector<1x16xf32>,
    %236 = arith.index_cast %193 : i32 to index
    %c0_61 = arith.constant 0 : index
    %237 = vector.load %arg17[%236, %c0_61] : memref<8x16xf32, #tpu.memory_space<vmem>>, vector<1x16xf32>
    tpu.vector_store %arg17[%236, %c0_61], %233 {strides = array<i32>} : memref<8x16xf32, #tpu.memory_space<vmem>>, vector<1x16xf32>,
    %c5_i32 = arith.constant 5 : i32
    %c7_i32_62 = arith.constant 7 : i32
    %238 = arith.subi %c7_i32_62, %c5_i32 : i32
    %239 = arith.index_cast %c5_i32 : i32 to index
    %c0_63 = arith.constant 0 : index
    %240 = vector.load %arg15[%239, %c0_63] : memref<8x128xf32, #tpu.memory_space<vmem>>, vector<1x128xf32>
    %241 = arith.index_cast %238 : i32 to index
    %c0_64 = arith.constant 0 : index
    %242 = vector.load %arg15[%241, %c0_64] : memref<8x128xf32, #tpu.memory_space<vmem>>, vector<1x128xf32>
    %243 = vector.extract_strided_slice %240 {offsets = [0, 0], sizes = [1, 64], strides = [1, 1]} : vector<1x128xf32> to vector<1x64xf32>
    %cst_65 = arith.constant dense<0.000000e+00> : vector<1x64xf32>
    %244 = tpu.matmul %218, %7, %cst_65 {dimension_numbers = #tpu.dot_dimension_numbers<[1], [0], [0], [1], [0, 0, 1, 1], [], []>} : vector<1x16xf32>, vector<16x64xf32>, vector<1x64xf32> -> vector<1x64xf32>
    %245 = arith.addf %243, %244 : vector<1x64xf32>
    %246 = vector.extract_strided_slice %242 {offsets = [0, 64], sizes = [1, 64], strides = [1, 1]} : vector<1x128xf32> to vector<1x64xf32>
    %cst_66 = arith.constant dense<0.000000e+00> : vector<1x64xf32>
    %247 = tpu.matmul %233, %8, %cst_66 {dimension_numbers = #tpu.dot_dimension_numbers<[1], [0], [0], [1], [0, 0, 1, 1], [], []>} : vector<1x16xf32>, vector<16x64xf32>, vector<1x64xf32> -> vector<1x64xf32>
    %248 = arith.addf %246, %247 : vector<1x64xf32>
    %249 = arith.negf %245 : vector<1x64xf32>
    %250 = math.exp %249 : vector<1x64xf32>
    %cst_67 = arith.constant 1.000000e+00 : f32
    %251 = vector.broadcast %cst_67 : f32 to vector<1x64xf32>
    %252 = arith.addf %251, %250 : vector<1x64xf32>
    %253 = arith.divf %251, %252 : vector<1x64xf32>
    %254 = math.tanh %245 : vector<1x64xf32>
    %255 = vector.extract_strided_slice %253 {offsets = [0, 0], sizes = [1, 16], strides = [1, 1]} : vector<1x64xf32> to vector<1x16xf32>
    %256 = vector.extract_strided_slice %253 {offsets = [0, 16], sizes = [1, 16], strides = [1, 1]} : vector<1x64xf32> to vector<1x16xf32>
    %257 = vector.extract_strided_slice %253 {offsets = [0, 32], sizes = [1, 16], strides = [1, 1]} : vector<1x64xf32> to vector<1x16xf32>
    %258 = vector.extract_strided_slice %254 {offsets = [0, 48], sizes = [1, 16], strides = [1, 1]} : vector<1x64xf32> to vector<1x16xf32>
    %259 = arith.mulf %256, %216 : vector<1x16xf32>
    %260 = arith.mulf %255, %258 : vector<1x16xf32>
    %261 = arith.addf %259, %260 : vector<1x16xf32>
    %262 = math.tanh %261 : vector<1x16xf32>
    %263 = arith.mulf %257, %262 : vector<1x16xf32>
    %264 = arith.negf %248 : vector<1x64xf32>
    %265 = math.exp %264 : vector<1x64xf32>
    %cst_68 = arith.constant 1.000000e+00 : f32
    %266 = vector.broadcast %cst_68 : f32 to vector<1x64xf32>
    %267 = arith.addf %266, %265 : vector<1x64xf32>
    %268 = arith.divf %266, %267 : vector<1x64xf32>
    %269 = math.tanh %248 : vector<1x64xf32>
    %270 = vector.extract_strided_slice %268 {offsets = [0, 0], sizes = [1, 16], strides = [1, 1]} : vector<1x64xf32> to vector<1x16xf32>
    %271 = vector.extract_strided_slice %268 {offsets = [0, 16], sizes = [1, 16], strides = [1, 1]} : vector<1x64xf32> to vector<1x16xf32>
    %272 = vector.extract_strided_slice %268 {offsets = [0, 32], sizes = [1, 16], strides = [1, 1]} : vector<1x64xf32> to vector<1x16xf32>
    %273 = vector.extract_strided_slice %269 {offsets = [0, 48], sizes = [1, 16], strides = [1, 1]} : vector<1x64xf32> to vector<1x16xf32>
    %274 = arith.mulf %271, %231 : vector<1x16xf32>
    %275 = arith.mulf %270, %273 : vector<1x16xf32>
    %276 = arith.addf %274, %275 : vector<1x16xf32>
    %277 = math.tanh %276 : vector<1x16xf32>
    %278 = arith.mulf %272, %277 : vector<1x16xf32>
    %279 = arith.index_cast %c5_i32 : i32 to index
    %c0_69 = arith.constant 0 : index
    %280 = vector.load %arg16[%279, %c0_69] : memref<8x16xf32, #tpu.memory_space<vmem>>, vector<1x16xf32>
    tpu.vector_store %arg16[%279, %c0_69], %263 {strides = array<i32>} : memref<8x16xf32, #tpu.memory_space<vmem>>, vector<1x16xf32>,
    %281 = arith.index_cast %238 : i32 to index
    %c0_70 = arith.constant 0 : index
    %282 = vector.load %arg17[%281, %c0_70] : memref<8x16xf32, #tpu.memory_space<vmem>>, vector<1x16xf32>
    tpu.vector_store %arg17[%281, %c0_70], %278 {strides = array<i32>} : memref<8x16xf32, #tpu.memory_space<vmem>>, vector<1x16xf32>,
    %c6_i32 = arith.constant 6 : i32
    %c7_i32_71 = arith.constant 7 : i32
    %283 = arith.subi %c7_i32_71, %c6_i32 : i32
    %284 = arith.index_cast %c6_i32 : i32 to index
    %c0_72 = arith.constant 0 : index
    %285 = vector.load %arg15[%284, %c0_72] : memref<8x128xf32, #tpu.memory_space<vmem>>, vector<1x128xf32>
    %286 = arith.index_cast %283 : i32 to index
    %c0_73 = arith.constant 0 : index
    %287 = vector.load %arg15[%286, %c0_73] : memref<8x128xf32, #tpu.memory_space<vmem>>, vector<1x128xf32>
    %288 = vector.extract_strided_slice %285 {offsets = [0, 0], sizes = [1, 64], strides = [1, 1]} : vector<1x128xf32> to vector<1x64xf32>
    %cst_74 = arith.constant dense<0.000000e+00> : vector<1x64xf32>
    %289 = tpu.matmul %263, %7, %cst_74 {dimension_numbers = #tpu.dot_dimension_numbers<[1], [0], [0], [1], [0, 0, 1, 1], [], []>} : vector<1x16xf32>, vector<16x64xf32>, vector<1x64xf32> -> vector<1x64xf32>
    %290 = arith.addf %288, %289 : vector<1x64xf32>
    %291 = vector.extract_strided_slice %287 {offsets = [0, 64], sizes = [1, 64], strides = [1, 1]} : vector<1x128xf32> to vector<1x64xf32>
    %cst_75 = arith.constant dense<0.000000e+00> : vector<1x64xf32>
    %292 = tpu.matmul %278, %8, %cst_75 {dimension_numbers = #tpu.dot_dimension_numbers<[1], [0], [0], [1], [0, 0, 1, 1], [], []>} : vector<1x16xf32>, vector<16x64xf32>, vector<1x64xf32> -> vector<1x64xf32>
    %293 = arith.addf %291, %292 : vector<1x64xf32>
    %294 = arith.negf %290 : vector<1x64xf32>
    %295 = math.exp %294 : vector<1x64xf32>
    %cst_76 = arith.constant 1.000000e+00 : f32
    %296 = vector.broadcast %cst_76 : f32 to vector<1x64xf32>
    %297 = arith.addf %296, %295 : vector<1x64xf32>
    %298 = arith.divf %296, %297 : vector<1x64xf32>
    %299 = math.tanh %290 : vector<1x64xf32>
    %300 = vector.extract_strided_slice %298 {offsets = [0, 0], sizes = [1, 16], strides = [1, 1]} : vector<1x64xf32> to vector<1x16xf32>
    %301 = vector.extract_strided_slice %298 {offsets = [0, 16], sizes = [1, 16], strides = [1, 1]} : vector<1x64xf32> to vector<1x16xf32>
    %302 = vector.extract_strided_slice %298 {offsets = [0, 32], sizes = [1, 16], strides = [1, 1]} : vector<1x64xf32> to vector<1x16xf32>
    %303 = vector.extract_strided_slice %299 {offsets = [0, 48], sizes = [1, 16], strides = [1, 1]} : vector<1x64xf32> to vector<1x16xf32>
    %304 = arith.mulf %301, %261 : vector<1x16xf32>
    %305 = arith.mulf %300, %303 : vector<1x16xf32>
    %306 = arith.addf %304, %305 : vector<1x16xf32>
    %307 = math.tanh %306 : vector<1x16xf32>
    %308 = arith.mulf %302, %307 : vector<1x16xf32>
    %309 = arith.negf %293 : vector<1x64xf32>
    %310 = math.exp %309 : vector<1x64xf32>
    %cst_77 = arith.constant 1.000000e+00 : f32
    %311 = vector.broadcast %cst_77 : f32 to vector<1x64xf32>
    %312 = arith.addf %311, %310 : vector<1x64xf32>
    %313 = arith.divf %311, %312 : vector<1x64xf32>
    %314 = math.tanh %293 : vector<1x64xf32>
    %315 = vector.extract_strided_slice %313 {offsets = [0, 0], sizes = [1, 16], strides = [1, 1]} : vector<1x64xf32> to vector<1x16xf32>
    %316 = vector.extract_strided_slice %313 {offsets = [0, 16], sizes = [1, 16], strides = [1, 1]} : vector<1x64xf32> to vector<1x16xf32>
    %317 = vector.extract_strided_slice %313 {offsets = [0, 32], sizes = [1, 16], strides = [1, 1]} : vector<1x64xf32> to vector<1x16xf32>
    %318 = vector.extract_strided_slice %314 {offsets = [0, 48], sizes = [1, 16], strides = [1, 1]} : vector<1x64xf32> to vector<1x16xf32>
    %319 = arith.mulf %316, %276 : vector<1x16xf32>
    %320 = arith.mulf %315, %318 : vector<1x16xf32>
    %321 = arith.addf %319, %320 : vector<1x16xf32>
    %322 = math.tanh %321 : vector<1x16xf32>
    %323 = arith.mulf %317, %322 : vector<1x16xf32>
    %324 = arith.index_cast %c6_i32 : i32 to index
    %c0_78 = arith.constant 0 : index
    %325 = vector.load %arg16[%324, %c0_78] : memref<8x16xf32, #tpu.memory_space<vmem>>, vector<1x16xf32>
    tpu.vector_store %arg16[%324, %c0_78], %308 {strides = array<i32>} : memref<8x16xf32, #tpu.memory_space<vmem>>, vector<1x16xf32>,
    %326 = arith.index_cast %283 : i32 to index
    %c0_79 = arith.constant 0 : index
    %327 = vector.load %arg17[%326, %c0_79] : memref<8x16xf32, #tpu.memory_space<vmem>>, vector<1x16xf32>
    tpu.vector_store %arg17[%326, %c0_79], %323 {strides = array<i32>} : memref<8x16xf32, #tpu.memory_space<vmem>>, vector<1x16xf32>,
    %c7_i32_80 = arith.constant 7 : i32
    %c7_i32_81 = arith.constant 7 : i32
    %328 = arith.subi %c7_i32_81, %c7_i32_80 : i32
    %329 = arith.index_cast %c7_i32_80 : i32 to index
    %c0_82 = arith.constant 0 : index
    %330 = vector.load %arg15[%329, %c0_82] : memref<8x128xf32, #tpu.memory_space<vmem>>, vector<1x128xf32>
    %331 = arith.index_cast %328 : i32 to index
    %c0_83 = arith.constant 0 : index
    %332 = vector.load %arg15[%331, %c0_83] : memref<8x128xf32, #tpu.memory_space<vmem>>, vector<1x128xf32>
    %333 = vector.extract_strided_slice %330 {offsets = [0, 0], sizes = [1, 64], strides = [1, 1]} : vector<1x128xf32> to vector<1x64xf32>
    %cst_84 = arith.constant dense<0.000000e+00> : vector<1x64xf32>
    %334 = tpu.matmul %308, %7, %cst_84 {dimension_numbers = #tpu.dot_dimension_numbers<[1], [0], [0], [1], [0, 0, 1, 1], [], []>} : vector<1x16xf32>, vector<16x64xf32>, vector<1x64xf32> -> vector<1x64xf32>
    %335 = arith.addf %333, %334 : vector<1x64xf32>
    %336 = vector.extract_strided_slice %332 {offsets = [0, 64], sizes = [1, 64], strides = [1, 1]} : vector<1x128xf32> to vector<1x64xf32>
    %cst_85 = arith.constant dense<0.000000e+00> : vector<1x64xf32>
    %337 = tpu.matmul %323, %8, %cst_85 {dimension_numbers = #tpu.dot_dimension_numbers<[1], [0], [0], [1], [0, 0, 1, 1], [], []>} : vector<1x16xf32>, vector<16x64xf32>, vector<1x64xf32> -> vector<1x64xf32>
    %338 = arith.addf %336, %337 : vector<1x64xf32>
    %339 = arith.negf %335 : vector<1x64xf32>
    %340 = math.exp %339 : vector<1x64xf32>
    %cst_86 = arith.constant 1.000000e+00 : f32
    %341 = vector.broadcast %cst_86 : f32 to vector<1x64xf32>
    %342 = arith.addf %341, %340 : vector<1x64xf32>
    %343 = arith.divf %341, %342 : vector<1x64xf32>
    %344 = math.tanh %335 : vector<1x64xf32>
    %345 = vector.extract_strided_slice %343 {offsets = [0, 0], sizes = [1, 16], strides = [1, 1]} : vector<1x64xf32> to vector<1x16xf32>
    %346 = vector.extract_strided_slice %343 {offsets = [0, 16], sizes = [1, 16], strides = [1, 1]} : vector<1x64xf32> to vector<1x16xf32>
    %347 = vector.extract_strided_slice %343 {offsets = [0, 32], sizes = [1, 16], strides = [1, 1]} : vector<1x64xf32> to vector<1x16xf32>
    %348 = vector.extract_strided_slice %344 {offsets = [0, 48], sizes = [1, 16], strides = [1, 1]} : vector<1x64xf32> to vector<1x16xf32>
    %349 = arith.mulf %346, %306 : vector<1x16xf32>
    %350 = arith.mulf %345, %348 : vector<1x16xf32>
    %351 = arith.addf %349, %350 : vector<1x16xf32>
    %352 = math.tanh %351 : vector<1x16xf32>
    %353 = arith.mulf %347, %352 : vector<1x16xf32>
    %354 = arith.negf %338 : vector<1x64xf32>
    %355 = math.exp %354 : vector<1x64xf32>
    %cst_87 = arith.constant 1.000000e+00 : f32
    %356 = vector.broadcast %cst_87 : f32 to vector<1x64xf32>
    %357 = arith.addf %356, %355 : vector<1x64xf32>
    %358 = arith.divf %356, %357 : vector<1x64xf32>
    %359 = math.tanh %338 : vector<1x64xf32>
    %360 = vector.extract_strided_slice %358 {offsets = [0, 0], sizes = [1, 16], strides = [1, 1]} : vector<1x64xf32> to vector<1x16xf32>
    %361 = vector.extract_strided_slice %358 {offsets = [0, 16], sizes = [1, 16], strides = [1, 1]} : vector<1x64xf32> to vector<1x16xf32>
    %362 = vector.extract_strided_slice %358 {offsets = [0, 32], sizes = [1, 16], strides = [1, 1]} : vector<1x64xf32> to vector<1x16xf32>
    %363 = vector.extract_strided_slice %359 {offsets = [0, 48], sizes = [1, 16], strides = [1, 1]} : vector<1x64xf32> to vector<1x16xf32>
    %364 = arith.mulf %361, %321 : vector<1x16xf32>
    %365 = arith.mulf %360, %363 : vector<1x16xf32>
    %366 = arith.addf %364, %365 : vector<1x16xf32>
    %367 = math.tanh %366 : vector<1x16xf32>
    %368 = arith.mulf %362, %367 : vector<1x16xf32>
    %369 = arith.index_cast %c7_i32_80 : i32 to index
    %c0_88 = arith.constant 0 : index
    %370 = vector.load %arg16[%369, %c0_88] : memref<8x16xf32, #tpu.memory_space<vmem>>, vector<1x16xf32>
    tpu.vector_store %arg16[%369, %c0_88], %353 {strides = array<i32>} : memref<8x16xf32, #tpu.memory_space<vmem>>, vector<1x16xf32>,
    %371 = arith.index_cast %328 : i32 to index
    %c0_89 = arith.constant 0 : index
    %372 = vector.load %arg17[%371, %c0_89] : memref<8x16xf32, #tpu.memory_space<vmem>>, vector<1x16xf32>
    tpu.vector_store %arg17[%371, %c0_89], %368 {strides = array<i32>} : memref<8x16xf32, #tpu.memory_space<vmem>>, vector<1x16xf32>,
    %c8_i32 = arith.constant 8 : i32
    %c0_90 = arith.constant 0 : index
    %c0_91 = arith.constant 0 : index
    %373 = vector.load %arg16[%c0_90, %c0_91] : memref<8x16xf32, #tpu.memory_space<vmem>>, vector<8x16xf32>
    %c0_92 = arith.constant 0 : index
    %c0_93 = arith.constant 0 : index
    %374 = vector.load %arg7[%c0_92, %c0_93] : memref<16x128xf32, #tpu.memory_space<vmem>>, vector<16x128xf32>
    %cst_94 = arith.constant dense<0.000000e+00> : vector<8x128xf32>
    %375 = tpu.matmul %373, %374, %cst_94 {dimension_numbers = #tpu.dot_dimension_numbers<[1], [0], [0], [1], [0, 0, 1, 1], [], []>} : vector<8x16xf32>, vector<16x128xf32>, vector<8x128xf32> -> vector<8x128xf32>
    %c0_95 = arith.constant 0 : index
    %c0_96 = arith.constant 0 : index
    %376 = vector.load %arg17[%c0_95, %c0_96] : memref<8x16xf32, #tpu.memory_space<vmem>>, vector<8x16xf32>
    %c0_97 = arith.constant 0 : index
    %c0_98 = arith.constant 0 : index
    %377 = vector.load %arg8[%c0_97, %c0_98] : memref<16x128xf32, #tpu.memory_space<vmem>>, vector<16x128xf32>
    %cst_99 = arith.constant dense<0.000000e+00> : vector<8x128xf32>
    %378 = tpu.matmul %376, %377, %cst_99 {dimension_numbers = #tpu.dot_dimension_numbers<[1], [0], [0], [1], [0, 0, 1, 1], [], []>} : vector<8x16xf32>, vector<16x128xf32>, vector<8x128xf32> -> vector<8x128xf32>
    %379 = arith.addf %375, %378 : vector<8x128xf32>
    %c0_100 = arith.constant 0 : index
    %c0_101 = arith.constant 0 : index
    %380 = vector.load %arg9[%c0_100, %c0_101] : memref<1x128xf32, #tpu.memory_space<vmem>>, vector<1x128xf32>
    %381 = vector.broadcast %380 : vector<1x128xf32> to vector<8x128xf32>
    %382 = arith.addf %379, %381 : vector<8x128xf32>
    %c0_102 = arith.constant 0 : index
    %c0_103 = arith.constant 0 : index
    %383 = vector.load %arg12[%c0_102, %c0_103] : memref<8x128xf32, #tpu.memory_space<vmem>>, vector<8x128xf32>
    tpu.vector_store %arg12[%c0_102, %c0_103], %382 {strides = array<i32>} : memref<8x128xf32, #tpu.memory_space<vmem>>, vector<8x128xf32>,
    %c0_104 = arith.constant 0 : index
    %c0_105 = arith.constant 0 : index
    %384 = vector.load %arg10[%c0_104, %c0_105] : memref<8x128xf32, #tpu.memory_space<vmem>>, vector<8x128xf32>
    %385 = tpu.iota {dimensions = array<i32: 0>} : vector<8x128xi32>
    %386 = tpu.iota {dimensions = array<i32: 1>} : vector<8x128xi32>
    %387 = arith.cmpi eq, %385, %386 : vector<8x128xi32>
    %388 = arith.extui %387 : vector<8x128xi1> to vector<8x128xi32>
    %389 = arith.sitofp %388 : vector<8x128xi32> to vector<8x128xf32>
    %390 = tpu.iota {dimensions = array<i32: 0>} : vector<8x1xi32>
    %c5_i32_106 = arith.constant 5 : i32
    %391 = vector.broadcast %c5_i32_106 : i32 to vector<8x1xi32>
    %392 = arith.cmpi eq, %390, %391 : vector<8x1xi32>
    %cst_107 = arith.constant 0.000000e+00 : f32
    %cst_108 = arith.constant -1.000000e+04 : f32
    %393 = vector.broadcast %cst_107 : f32 to vector<8x1xf32>
    %394 = vector.broadcast %cst_108 : f32 to vector<8x1xf32>
    %395 = arith.select %392, %393, %394 : vector<8x1xi1>, vector<8x1xf32>
    %cst_109 = arith.constant -1.000000e+04 : f32
    %396 = vector.broadcast %cst_109 : f32 to vector<1x128xf32>
    %c0_i32_110 = arith.constant 0 : i32
    %397 = vector.broadcast %395 : vector<8x1xf32> to vector<8x128xf32>
    %398 = arith.addf %397, %384 : vector<8x128xf32>
    %cst_111 = arith.constant dense<0xFF800000> : vector<128xf32>
    %399 = vector.multi_reduction <maximumf>, %398, %cst_111 [0] : vector<8x128xf32> to vector<128xf32>
    %400 = vector.shape_cast %399 : vector<128xf32> to vector<1x128xf32>
    %401 = vector.broadcast %400 : vector<1x128xf32> to vector<8x128xf32>
    %402 = arith.cmpf oge, %398, %401 : vector<8x128xf32>
    %c8_i32_112 = arith.constant 8 : i32
    %403 = vector.broadcast %c8_i32_112 : i32 to vector<8x128xi32>
    %404 = arith.select %402, %385, %403 : vector<8x128xi1>, vector<8x128xi32>
    %cst_113 = arith.constant dense<2147483647> : vector<128xi32>
    %405 = vector.multi_reduction <minsi>, %404, %cst_113 [0] : vector<8x128xi32> to vector<128xi32>
    %406 = vector.shape_cast %405 : vector<128xi32> to vector<1x128xi32>
    %407 = arith.index_cast %c0_i32_110 : i32 to index
    %c0_114 = arith.constant 0 : index
    %408 = vector.load %arg13[%407, %c0_114] : memref<8x128xi32, #tpu.memory_space<vmem>>, vector<1x128xi32>
    tpu.vector_store %arg13[%407, %c0_114], %406 {strides = array<i32>} : memref<8x128xi32, #tpu.memory_space<vmem>>, vector<1x128xi32>,
    %409 = arith.index_cast %c0_i32_110 : i32 to index
    %c0_115 = arith.constant 0 : index
    %410 = vector.load %arg12[%409, %c0_115] : memref<8x128xf32, #tpu.memory_space<vmem>>, vector<1x128xf32>
    %411 = arith.addf %400, %410 : vector<1x128xf32>
    %412 = vector.broadcast %411 : vector<1x128xf32> to vector<8x128xf32>
    %413 = arith.mulf %412, %389 : vector<8x128xf32>
    %cst_116 = arith.constant dense<0.000000e+00> : vector<8xf32>
    %414 = vector.multi_reduction <add>, %413, %cst_116 [1] : vector<8x128xf32> to vector<8xf32>
    %415 = vector.shape_cast %414 : vector<8xf32> to vector<8x1xf32>
    %c1_i32_117 = arith.constant 1 : i32
    %416 = vector.broadcast %415 : vector<8x1xf32> to vector<8x128xf32>
    %417 = arith.addf %416, %384 : vector<8x128xf32>
    %cst_118 = arith.constant dense<0xFF800000> : vector<128xf32>
    %418 = vector.multi_reduction <maximumf>, %417, %cst_118 [0] : vector<8x128xf32> to vector<128xf32>
    %419 = vector.shape_cast %418 : vector<128xf32> to vector<1x128xf32>
    %420 = vector.broadcast %419 : vector<1x128xf32> to vector<8x128xf32>
    %421 = arith.cmpf oge, %417, %420 : vector<8x128xf32>
    %c8_i32_119 = arith.constant 8 : i32
    %422 = vector.broadcast %c8_i32_119 : i32 to vector<8x128xi32>
    %423 = arith.select %421, %385, %422 : vector<8x128xi1>, vector<8x128xi32>
    %cst_120 = arith.constant dense<2147483647> : vector<128xi32>
    %424 = vector.multi_reduction <minsi>, %423, %cst_120 [0] : vector<8x128xi32> to vector<128xi32>
    %425 = vector.shape_cast %424 : vector<128xi32> to vector<1x128xi32>
    %426 = arith.index_cast %c1_i32_117 : i32 to index
    %c0_121 = arith.constant 0 : index
    %427 = vector.load %arg13[%426, %c0_121] : memref<8x128xi32, #tpu.memory_space<vmem>>, vector<1x128xi32>
    tpu.vector_store %arg13[%426, %c0_121], %425 {strides = array<i32>} : memref<8x128xi32, #tpu.memory_space<vmem>>, vector<1x128xi32>,
    %428 = arith.index_cast %c1_i32_117 : i32 to index
    %c0_122 = arith.constant 0 : index
    %429 = vector.load %arg12[%428, %c0_122] : memref<8x128xf32, #tpu.memory_space<vmem>>, vector<1x128xf32>
    %430 = arith.addf %419, %429 : vector<1x128xf32>
    %431 = vector.broadcast %430 : vector<1x128xf32> to vector<8x128xf32>
    %432 = arith.mulf %431, %389 : vector<8x128xf32>
    %cst_123 = arith.constant dense<0.000000e+00> : vector<8xf32>
    %433 = vector.multi_reduction <add>, %432, %cst_123 [1] : vector<8x128xf32> to vector<8xf32>
    %434 = vector.shape_cast %433 : vector<8xf32> to vector<8x1xf32>
    %c2_i32_124 = arith.constant 2 : i32
    %435 = vector.broadcast %434 : vector<8x1xf32> to vector<8x128xf32>
    %436 = arith.addf %435, %384 : vector<8x128xf32>
    %cst_125 = arith.constant dense<0xFF800000> : vector<128xf32>
    %437 = vector.multi_reduction <maximumf>, %436, %cst_125 [0] : vector<8x128xf32> to vector<128xf32>
    %438 = vector.shape_cast %437 : vector<128xf32> to vector<1x128xf32>
    %439 = vector.broadcast %438 : vector<1x128xf32> to vector<8x128xf32>
    %440 = arith.cmpf oge, %436, %439 : vector<8x128xf32>
    %c8_i32_126 = arith.constant 8 : i32
    %441 = vector.broadcast %c8_i32_126 : i32 to vector<8x128xi32>
    %442 = arith.select %440, %385, %441 : vector<8x128xi1>, vector<8x128xi32>
    %cst_127 = arith.constant dense<2147483647> : vector<128xi32>
    %443 = vector.multi_reduction <minsi>, %442, %cst_127 [0] : vector<8x128xi32> to vector<128xi32>
    %444 = vector.shape_cast %443 : vector<128xi32> to vector<1x128xi32>
    %445 = arith.index_cast %c2_i32_124 : i32 to index
    %c0_128 = arith.constant 0 : index
    %446 = vector.load %arg13[%445, %c0_128] : memref<8x128xi32, #tpu.memory_space<vmem>>, vector<1x128xi32>
    tpu.vector_store %arg13[%445, %c0_128], %444 {strides = array<i32>} : memref<8x128xi32, #tpu.memory_space<vmem>>, vector<1x128xi32>,
    %447 = arith.index_cast %c2_i32_124 : i32 to index
    %c0_129 = arith.constant 0 : index
    %448 = vector.load %arg12[%447, %c0_129] : memref<8x128xf32, #tpu.memory_space<vmem>>, vector<1x128xf32>
    %449 = arith.addf %438, %448 : vector<1x128xf32>
    %450 = vector.broadcast %449 : vector<1x128xf32> to vector<8x128xf32>
    %451 = arith.mulf %450, %389 : vector<8x128xf32>
    %cst_130 = arith.constant dense<0.000000e+00> : vector<8xf32>
    %452 = vector.multi_reduction <add>, %451, %cst_130 [1] : vector<8x128xf32> to vector<8xf32>
    %453 = vector.shape_cast %452 : vector<8xf32> to vector<8x1xf32>
    %c3_i32_131 = arith.constant 3 : i32
    %454 = vector.broadcast %453 : vector<8x1xf32> to vector<8x128xf32>
    %455 = arith.addf %454, %384 : vector<8x128xf32>
    %cst_132 = arith.constant dense<0xFF800000> : vector<128xf32>
    %456 = vector.multi_reduction <maximumf>, %455, %cst_132 [0] : vector<8x128xf32> to vector<128xf32>
    %457 = vector.shape_cast %456 : vector<128xf32> to vector<1x128xf32>
    %458 = vector.broadcast %457 : vector<1x128xf32> to vector<8x128xf32>
    %459 = arith.cmpf oge, %455, %458 : vector<8x128xf32>
    %c8_i32_133 = arith.constant 8 : i32
    %460 = vector.broadcast %c8_i32_133 : i32 to vector<8x128xi32>
    %461 = arith.select %459, %385, %460 : vector<8x128xi1>, vector<8x128xi32>
    %cst_134 = arith.constant dense<2147483647> : vector<128xi32>
    %462 = vector.multi_reduction <minsi>, %461, %cst_134 [0] : vector<8x128xi32> to vector<128xi32>
    %463 = vector.shape_cast %462 : vector<128xi32> to vector<1x128xi32>
    %464 = arith.index_cast %c3_i32_131 : i32 to index
    %c0_135 = arith.constant 0 : index
    %465 = vector.load %arg13[%464, %c0_135] : memref<8x128xi32, #tpu.memory_space<vmem>>, vector<1x128xi32>
    tpu.vector_store %arg13[%464, %c0_135], %463 {strides = array<i32>} : memref<8x128xi32, #tpu.memory_space<vmem>>, vector<1x128xi32>,
    %466 = arith.index_cast %c3_i32_131 : i32 to index
    %c0_136 = arith.constant 0 : index
    %467 = vector.load %arg12[%466, %c0_136] : memref<8x128xf32, #tpu.memory_space<vmem>>, vector<1x128xf32>
    %468 = arith.addf %457, %467 : vector<1x128xf32>
    %469 = vector.broadcast %468 : vector<1x128xf32> to vector<8x128xf32>
    %470 = arith.mulf %469, %389 : vector<8x128xf32>
    %cst_137 = arith.constant dense<0.000000e+00> : vector<8xf32>
    %471 = vector.multi_reduction <add>, %470, %cst_137 [1] : vector<8x128xf32> to vector<8xf32>
    %472 = vector.shape_cast %471 : vector<8xf32> to vector<8x1xf32>
    %c4_i32_138 = arith.constant 4 : i32
    %473 = vector.broadcast %472 : vector<8x1xf32> to vector<8x128xf32>
    %474 = arith.addf %473, %384 : vector<8x128xf32>
    %cst_139 = arith.constant dense<0xFF800000> : vector<128xf32>
    %475 = vector.multi_reduction <maximumf>, %474, %cst_139 [0] : vector<8x128xf32> to vector<128xf32>
    %476 = vector.shape_cast %475 : vector<128xf32> to vector<1x128xf32>
    %477 = vector.broadcast %476 : vector<1x128xf32> to vector<8x128xf32>
    %478 = arith.cmpf oge, %474, %477 : vector<8x128xf32>
    %c8_i32_140 = arith.constant 8 : i32
    %479 = vector.broadcast %c8_i32_140 : i32 to vector<8x128xi32>
    %480 = arith.select %478, %385, %479 : vector<8x128xi1>, vector<8x128xi32>
    %cst_141 = arith.constant dense<2147483647> : vector<128xi32>
    %481 = vector.multi_reduction <minsi>, %480, %cst_141 [0] : vector<8x128xi32> to vector<128xi32>
    %482 = vector.shape_cast %481 : vector<128xi32> to vector<1x128xi32>
    %483 = arith.index_cast %c4_i32_138 : i32 to index
    %c0_142 = arith.constant 0 : index
    %484 = vector.load %arg13[%483, %c0_142] : memref<8x128xi32, #tpu.memory_space<vmem>>, vector<1x128xi32>
    tpu.vector_store %arg13[%483, %c0_142], %482 {strides = array<i32>} : memref<8x128xi32, #tpu.memory_space<vmem>>, vector<1x128xi32>,
    %485 = arith.index_cast %c4_i32_138 : i32 to index
    %c0_143 = arith.constant 0 : index
    %486 = vector.load %arg12[%485, %c0_143] : memref<8x128xf32, #tpu.memory_space<vmem>>, vector<1x128xf32>
    %487 = arith.addf %476, %486 : vector<1x128xf32>
    %488 = vector.broadcast %487 : vector<1x128xf32> to vector<8x128xf32>
    %489 = arith.mulf %488, %389 : vector<8x128xf32>
    %cst_144 = arith.constant dense<0.000000e+00> : vector<8xf32>
    %490 = vector.multi_reduction <add>, %489, %cst_144 [1] : vector<8x128xf32> to vector<8xf32>
    %491 = vector.shape_cast %490 : vector<8xf32> to vector<8x1xf32>
    %c5_i32_145 = arith.constant 5 : i32
    %492 = vector.broadcast %491 : vector<8x1xf32> to vector<8x128xf32>
    %493 = arith.addf %492, %384 : vector<8x128xf32>
    %cst_146 = arith.constant dense<0xFF800000> : vector<128xf32>
    %494 = vector.multi_reduction <maximumf>, %493, %cst_146 [0] : vector<8x128xf32> to vector<128xf32>
    %495 = vector.shape_cast %494 : vector<128xf32> to vector<1x128xf32>
    %496 = vector.broadcast %495 : vector<1x128xf32> to vector<8x128xf32>
    %497 = arith.cmpf oge, %493, %496 : vector<8x128xf32>
    %c8_i32_147 = arith.constant 8 : i32
    %498 = vector.broadcast %c8_i32_147 : i32 to vector<8x128xi32>
    %499 = arith.select %497, %385, %498 : vector<8x128xi1>, vector<8x128xi32>
    %cst_148 = arith.constant dense<2147483647> : vector<128xi32>
    %500 = vector.multi_reduction <minsi>, %499, %cst_148 [0] : vector<8x128xi32> to vector<128xi32>
    %501 = vector.shape_cast %500 : vector<128xi32> to vector<1x128xi32>
    %502 = arith.index_cast %c5_i32_145 : i32 to index
    %c0_149 = arith.constant 0 : index
    %503 = vector.load %arg13[%502, %c0_149] : memref<8x128xi32, #tpu.memory_space<vmem>>, vector<1x128xi32>
    tpu.vector_store %arg13[%502, %c0_149], %501 {strides = array<i32>} : memref<8x128xi32, #tpu.memory_space<vmem>>, vector<1x128xi32>,
    %504 = arith.index_cast %c5_i32_145 : i32 to index
    %c0_150 = arith.constant 0 : index
    %505 = vector.load %arg12[%504, %c0_150] : memref<8x128xf32, #tpu.memory_space<vmem>>, vector<1x128xf32>
    %506 = arith.addf %495, %505 : vector<1x128xf32>
    %507 = vector.broadcast %506 : vector<1x128xf32> to vector<8x128xf32>
    %508 = arith.mulf %507, %389 : vector<8x128xf32>
    %cst_151 = arith.constant dense<0.000000e+00> : vector<8xf32>
    %509 = vector.multi_reduction <add>, %508, %cst_151 [1] : vector<8x128xf32> to vector<8xf32>
    %510 = vector.shape_cast %509 : vector<8xf32> to vector<8x1xf32>
    %c6_i32_152 = arith.constant 6 : i32
    %511 = vector.broadcast %510 : vector<8x1xf32> to vector<8x128xf32>
    %512 = arith.addf %511, %384 : vector<8x128xf32>
    %cst_153 = arith.constant dense<0xFF800000> : vector<128xf32>
    %513 = vector.multi_reduction <maximumf>, %512, %cst_153 [0] : vector<8x128xf32> to vector<128xf32>
    %514 = vector.shape_cast %513 : vector<128xf32> to vector<1x128xf32>
    %515 = vector.broadcast %514 : vector<1x128xf32> to vector<8x128xf32>
    %516 = arith.cmpf oge, %512, %515 : vector<8x128xf32>
    %c8_i32_154 = arith.constant 8 : i32
    %517 = vector.broadcast %c8_i32_154 : i32 to vector<8x128xi32>
    %518 = arith.select %516, %385, %517 : vector<8x128xi1>, vector<8x128xi32>
    %cst_155 = arith.constant dense<2147483647> : vector<128xi32>
    %519 = vector.multi_reduction <minsi>, %518, %cst_155 [0] : vector<8x128xi32> to vector<128xi32>
    %520 = vector.shape_cast %519 : vector<128xi32> to vector<1x128xi32>
    %521 = arith.index_cast %c6_i32_152 : i32 to index
    %c0_156 = arith.constant 0 : index
    %522 = vector.load %arg13[%521, %c0_156] : memref<8x128xi32, #tpu.memory_space<vmem>>, vector<1x128xi32>
    tpu.vector_store %arg13[%521, %c0_156], %520 {strides = array<i32>} : memref<8x128xi32, #tpu.memory_space<vmem>>, vector<1x128xi32>,
    %523 = arith.index_cast %c6_i32_152 : i32 to index
    %c0_157 = arith.constant 0 : index
    %524 = vector.load %arg12[%523, %c0_157] : memref<8x128xf32, #tpu.memory_space<vmem>>, vector<1x128xf32>
    %525 = arith.addf %514, %524 : vector<1x128xf32>
    %526 = vector.broadcast %525 : vector<1x128xf32> to vector<8x128xf32>
    %527 = arith.mulf %526, %389 : vector<8x128xf32>
    %cst_158 = arith.constant dense<0.000000e+00> : vector<8xf32>
    %528 = vector.multi_reduction <add>, %527, %cst_158 [1] : vector<8x128xf32> to vector<8xf32>
    %529 = vector.shape_cast %528 : vector<8xf32> to vector<8x1xf32>
    %c7_i32_159 = arith.constant 7 : i32
    %530 = vector.broadcast %529 : vector<8x1xf32> to vector<8x128xf32>
    %531 = arith.addf %530, %384 : vector<8x128xf32>
    %cst_160 = arith.constant dense<0xFF800000> : vector<128xf32>
    %532 = vector.multi_reduction <maximumf>, %531, %cst_160 [0] : vector<8x128xf32> to vector<128xf32>
    %533 = vector.shape_cast %532 : vector<128xf32> to vector<1x128xf32>
    %534 = vector.broadcast %533 : vector<1x128xf32> to vector<8x128xf32>
    %535 = arith.cmpf oge, %531, %534 : vector<8x128xf32>
    %c8_i32_161 = arith.constant 8 : i32
    %536 = vector.broadcast %c8_i32_161 : i32 to vector<8x128xi32>
    %537 = arith.select %535, %385, %536 : vector<8x128xi1>, vector<8x128xi32>
    %cst_162 = arith.constant dense<2147483647> : vector<128xi32>
    %538 = vector.multi_reduction <minsi>, %537, %cst_162 [0] : vector<8x128xi32> to vector<128xi32>
    %539 = vector.shape_cast %538 : vector<128xi32> to vector<1x128xi32>
    %540 = arith.index_cast %c7_i32_159 : i32 to index
    %c0_163 = arith.constant 0 : index
    %541 = vector.load %arg13[%540, %c0_163] : memref<8x128xi32, #tpu.memory_space<vmem>>, vector<1x128xi32>
    tpu.vector_store %arg13[%540, %c0_163], %539 {strides = array<i32>} : memref<8x128xi32, #tpu.memory_space<vmem>>, vector<1x128xi32>,
    %542 = arith.index_cast %c7_i32_159 : i32 to index
    %c0_164 = arith.constant 0 : index
    %543 = vector.load %arg12[%542, %c0_164] : memref<8x128xf32, #tpu.memory_space<vmem>>, vector<1x128xf32>
    %544 = arith.addf %533, %543 : vector<1x128xf32>
    %545 = vector.broadcast %544 : vector<1x128xf32> to vector<8x128xf32>
    %546 = arith.mulf %545, %389 : vector<8x128xf32>
    %cst_165 = arith.constant dense<0.000000e+00> : vector<8xf32>
    %547 = vector.multi_reduction <add>, %546, %cst_165 [1] : vector<8x128xf32> to vector<8xf32>
    %548 = vector.shape_cast %547 : vector<8xf32> to vector<8x1xf32>
    %c8_i32_166 = arith.constant 8 : i32
    %c0_167 = arith.constant 0 : index
    %c0_168 = arith.constant 0 : index
    %549 = vector.load %arg11[%c0_167, %c0_168] : memref<1x128xf32, #tpu.memory_space<vmem>>, vector<1x128xf32>
    %550 = arith.addf %544, %549 : vector<1x128xf32>
    %c0_169 = arith.constant 0 : index
    %c0_170 = arith.constant 0 : index
    %551 = vector.load %arg14[%c0_169, %c0_170] : memref<1x128xf32, #tpu.memory_space<vmem>>, vector<1x128xf32>
    tpu.vector_store %arg14[%c0_169, %c0_170], %550 {strides = array<i32>} : memref<1x128xf32, #tpu.memory_space<vmem>>, vector<1x128xf32>,
    return
  }
}

</mosaic_0001>

<llo_original>
// kernel: tpu_custom_call.1
$region0: #{tpu_custom_call.1}
  #allocation0 [shape = 'u32[]', space=smem, size = 0x4, offset = 0x4, fixed_abs, tag = 'smem constant byte address 0x4 - core index']
  #allocation1 [shape = 'u32[144,128]{1,0:T(1,128)}', space=vmem, size = 0x12000, scoped, tag = 'internal scratch']
  #allocation2 [shape = 'f32[8,128]{1,0:T(8,128)}', space=vmem, size = 0x1000, scoped, tag = 'scratch operand']
  #allocation3 [shape = 'f32[8,16]{1,0:T(8,128)}', space=vmem, size = 0x1000, scoped, tag = 'scratch operand']
  #allocation4 [shape = 'f32[8,16]{1,0:T(8,128)}', space=vmem, size = 0x1000, scoped, tag = 'scratch operand']
  %s0 = inlined_call_operand.hbm [shape: f32[8,32], index: 0, kind: input, shape index: {}]
  %s1 = inlined_call_operand.hbm [shape: f32[32,128], index: 1, kind: input, shape index: {}]
  %s2 = inlined_call_operand.hbm [shape: f32[1,128], index: 2, kind: input, shape index: {}]
  %s3 = inlined_call_operand.hbm [shape: f32[16,64], index: 3, kind: input, shape index: {}]
  %s4 = inlined_call_operand.hbm [shape: f32[16,64], index: 4, kind: input, shape index: {}]
  %s5 = inlined_call_operand.vmem [shape: f32[2,16], index: 5, kind: input, shape index: {}]
  %s6 = inlined_call_operand.hbm [shape: f32[2,16], index: 6, kind: input, shape index: {}]
  %s7 = inlined_call_operand.vmem [shape: f32[16,128], index: 7, kind: input, shape index: {}]
  %s8 = inlined_call_operand.hbm [shape: f32[16,128], index: 8, kind: input, shape index: {}]
  %s9 = inlined_call_operand.vmem [shape: f32[1,128], index: 9, kind: input, shape index: {}]
  %s10 = inlined_call_operand.vmem [shape: f32[8,128], index: 10, kind: input, shape index: {}]
  %s11 = inlined_call_operand.vmem [shape: f32[1,128], index: 11, kind: input, shape index: {}]
  %s12 = inlined_call_operand.hbm [shape: f32[8,128], index: 12, kind: output, shape index: {0}]
  %s13 = inlined_call_operand.hbm [shape: s32[8,128], index: 13, kind: output, shape index: {1}]
  %s14 = inlined_call_operand.hbm [shape: f32[1,128], index: 14, kind: output, shape index: {2}]
  %15 = xla_tuple %s12, %s13, %s14
  %s16 = sld [smem:[#allocation0]]
  $region102: #{tpu_custom_call.1} parent=0
    _
  %s18 = ssub.s32 1, %s16
  %s19 = scalar_select 0, %s18, %s16
  $region1: #{tpu_custom_call.1} parent=0
    #allocation5 [shape = 'u8[4096]{0}', space=vmem, size = 0x1000, scoped, tag = 'input window, operand 0, single buffered']
    #allocation6 [shape = 's32[1]{0}', space=sflag, size = 0x4, scoped, tag = 'scoped memory for tpu_custom_call.1']
    #allocation7 [shape = 's32[1]{0}', space=sflag, size = 0x4, scoped, tag = 'scoped memory for tpu_custom_call.1']
    #allocation8 [shape = 'u8[16384]{0}', space=vmem, size = 0x4000, scoped, tag = 'input window, operand 1, single buffered']
    #allocation9 [shape = 's32[1]{0}', space=sflag, size = 0x4, scoped, tag = 'scoped memory for tpu_custom_call.1']
    #allocation10 [shape = 'u8[512]{0}', space=vmem, size = 0x400, scoped, tag = 'input window, operand 2, single buffered']
    #allocation11 [shape = 'u8[8192]{0}', space=vmem, size = 0x2000, scoped, tag = 'input window, operand 3, single buffered']
    #allocation12 [shape = 's32[1]{0}', space=sflag, size = 0x4, scoped, tag = 'scoped memory for tpu_custom_call.1']
    #allocation13 [shape = 'u8[8192]{0}', space=vmem, size = 0x2000, scoped, tag = 'input window, operand 4, single buffered']
    #allocation14 [shape = 'u8[1024]{0}', space=vmem, size = 0x400, scoped, tag = 'input window, operand 6, single buffered']
    #allocation15 [shape = 's32[1]{0}', space=sflag, size = 0x4, scoped, tag = 'scoped memory for tpu_custom_call.1']
    #allocation16 [shape = 'u8[8192]{0}', space=vmem, size = 0x2000, scoped, tag = 'input window, operand 8, single buffered']
    #allocation17 [shape = 'u8[4096]{0}', space=vmem, size = 0x1000, scoped, tag = 'output window, operand 0, single buffered']
    #allocation18 [shape = 'u8[4096]{0}', space=vmem, size = 0x1000, scoped, tag = 'output window, operand 1, single buffered']
    #allocation19 [shape = 's32[1]{0}', space=sflag, size = 0x4, scoped, tag = 'scoped memory for tpu_custom_call.1']
    #allocation20 [shape = 'u8[512]{0}', space=vmem, size = 0x400, scoped, tag = 'output window, operand 2, single buffered']
    %20 = vsyncpa [#allocation6], 0
    %21 = vsyncpa [#allocation9], 0
    %22 = vsyncpa [#allocation12], 0
    %23 = vsyncpa [#allocation15], 0
    %24 = vsyncpa [#allocation7], 0
    %25 = vsyncpa [#allocation19], 0
    // Predicated region
    $region2: #{tpu_custom_call.1} parent=1 // pred_check
      _
    $region3: #{tpu_custom_call.1} parent=1 // pred_check_branch
      %27 = sbr.rel (0) target = $region5
    $region4: #{tpu_custom_call.1} parent=1 // pred_region
      %s29 = ssub.s32 128, 128
      %30 = vsyncadd [#allocation6], %s29
      %s32 = sshll.u32 [#allocation5], 4
      %s33 = int_to_ptr.vmem [resolvable:$true] %s32
      %35 = dma.hbm_to_vmem [thread:$0]  %s0, 128, %s33, [#allocation6]
    $region5: #{tpu_custom_call.1} parent=1 // pred_fallthru
      _
    // Predicated region
    $region6: #{tpu_custom_call.1} parent=1 // pred_check
      _
    $region7: #{tpu_custom_call.1} parent=1 // pred_check_branch
      %37 = sbr.rel (0) target = $region9
    $region8: #{tpu_custom_call.1} parent=1 // pred_region
      %s39 = ssub.s32 512, 512
      %40 = vsyncadd [#allocation9], %s39
      %s41 = sshll.u32 [#allocation8], 4
      %s42 = int_to_ptr.vmem [resolvable:$true] %s41
      %47 = dma.hbm_to_vmem [thread:$0]  %s1, 512, %s42, [#allocation9], 128, 128, 8
    $region9: #{tpu_custom_call.1} parent=1 // pred_fallthru
      _
    // Predicated region
    $region10: #{tpu_custom_call.1} parent=1 // pred_check
      _
    $region11: #{tpu_custom_call.1} parent=1 // pred_check_branch
      %49 = sbr.rel (0) target = $region13
    $region12: #{tpu_custom_call.1} parent=1 // pred_region
      %s51 = ssub.s32 16, 16
      %52 = vsyncadd [#allocation9], %s51
      %s54 = sshll.u32 [#allocation10], 4
      %s55 = int_to_ptr.vmem [resolvable:$true] %s54
      %57 = dma.hbm_to_vmem [thread:$0]  %s2, 16, %s55, [#allocation9]
    $region13: #{tpu_custom_call.1} parent=1 // pred_fallthru
      _
    // Predicated region
    $region14: #{tpu_custom_call.1} parent=1 // pred_check
      _
    $region15: #{tpu_custom_call.1} parent=1 // pred_check_branch
      %59 = sbr.rel (0) target = $region17
    $region16: #{tpu_custom_call.1} parent=1 // pred_region
      %s61 = ssub.s32 256, 256
      %62 = vsyncadd [#allocation12], %s61
      %s63 = sshll.u32 [#allocation11], 4
      %s64 = int_to_ptr.vmem [resolvable:$true] %s63
      %69 = dma.hbm_to_vmem [thread:$0]  %s3, 256, %s64, [#allocation12], 128, 128, 8
    $region17: #{tpu_custom_call.1} parent=1 // pred_fallthru
      _
    // Predicated region
    $region18: #{tpu_custom_call.1} parent=1 // pred_check
      _
    $region19: #{tpu_custom_call.1} parent=1 // pred_check_branch
      %71 = sbr.rel (0) target = $region21
    $region20: #{tpu_custom_call.1} parent=1 // pred_region
      %s73 = ssub.s32 256, 256
      %74 = vsyncadd [#allocation12], %s73
      %s75 = sshll.u32 [#allocation13], 4
      %s76 = int_to_ptr.vmem [resolvable:$true] %s75
      %81 = dma.hbm_to_vmem [thread:$0]  %s4, 256, %s76, [#allocation12], 128, 128, 8
    $region21: #{tpu_custom_call.1} parent=1 // pred_fallthru
      _
    // Predicated region
    $region22: #{tpu_custom_call.1} parent=1 // pred_check
      _
    $region23: #{tpu_custom_call.1} parent=1 // pred_check_branch
      %83 = sbr.rel (0) target = $region25
    $region24: #{tpu_custom_call.1} parent=1 // pred_region
      _
    $region25: #{tpu_custom_call.1} parent=1 // pred_fallthru
      _
    // Predicated region
    $region26: #{tpu_custom_call.1} parent=1 // pred_check
      _
    $region27: #{tpu_custom_call.1} parent=1 // pred_check_branch
      %85 = sbr.rel (0) target = $region29
    $region28: #{tpu_custom_call.1} parent=1 // pred_region
      %s87 = ssub.s32 32, 32
      %88 = vsyncadd [#allocation15], %s87
      %s90 = sshll.u32 [#allocation14], 4
      %s91 = int_to_ptr.vmem [resolvable:$true] %s90
      %93 = dma.hbm_to_vmem [thread:$0]  %s6, 32, %s91, [#allocation15]
    $region29: #{tpu_custom_call.1} parent=1 // pred_fallthru
      _
    // Predicated region
    $region30: #{tpu_custom_call.1} parent=1 // pred_check
      _
    $region31: #{tpu_custom_call.1} parent=1 // pred_check_branch
      %95 = sbr.rel (0) target = $region33
    $region32: #{tpu_custom_call.1} parent=1 // pred_region
      _
    $region33: #{tpu_custom_call.1} parent=1 // pred_fallthru
      _
    // Predicated region
    $region34: #{tpu_custom_call.1} parent=1 // pred_check
      _
    $region35: #{tpu_custom_call.1} parent=1 // pred_check_branch
      %97 = sbr.rel (0) target = $region37
    $region36: #{tpu_custom_call.1} parent=1 // pred_region
      %s99 = ssub.s32 256, 256
      %100 = vsyncadd [#allocation15], %s99
      %s101 = sshll.u32 [#allocation16], 4
      %s102 = int_to_ptr.vmem [resolvable:$true] %s101
      %107 = dma.hbm_to_vmem [thread:$0]  %s8, 256, %s102, [#allocation15], 128, 128, 8
    $region37: #{tpu_custom_call.1} parent=1 // pred_fallthru
      _
    // Predicated region
    $region38: #{tpu_custom_call.1} parent=1 // pred_check
      _
    $region39: #{tpu_custom_call.1} parent=1 // pred_check_branch
      %109 = sbr.rel (0) target = $region41
    $region40: #{tpu_custom_call.1} parent=1 // pred_region
      _
    $region41: #{tpu_custom_call.1} parent=1 // pred_fallthru
      _
    // Predicated region
    $region42: #{tpu_custom_call.1} parent=1 // pred_check
      _
    $region43: #{tpu_custom_call.1} parent=1 // pred_check_branch
      %111 = sbr.rel (0) target = $region45
    $region44: #{tpu_custom_call.1} parent=1 // pred_region
      _
    $region45: #{tpu_custom_call.1} parent=1 // pred_fallthru
      _
    // Predicated region
    $region46: #{tpu_custom_call.1} parent=1 // pred_check
      _
    $region47: #{tpu_custom_call.1} parent=1 // pred_check_branch
      %113 = sbr.rel (0) target = $region49
    $region48: #{tpu_custom_call.1} parent=1 // pred_region
      _
    $region49: #{tpu_custom_call.1} parent=1 // pred_fallthru
      _
    // Predicated region
    $region50: #{tpu_custom_call.1} parent=1 // pred_check
      _
    $region51: #{tpu_custom_call.1} parent=1 // pred_check_branch
      %115 = sbr.rel (0) target = $region53
    $region52: #{tpu_custom_call.1} parent=1 // pred_region
      %116 = dma.done [#allocation6], 128
    $region53: #{tpu_custom_call.1} parent=1 // pred_fallthru
      _
    // Predicated region
    $region54: #{tpu_custom_call.1} parent=1 // pred_check
      _
    $region55: #{tpu_custom_call.1} parent=1 // pred_check_branch
      %118 = sbr.rel (0) target = $region57
    $region56: #{tpu_custom_call.1} parent=1 // pred_region
      %119 = dma.done [#allocation9], 512
    $region57: #{tpu_custom_call.1} parent=1 // pred_fallthru
      _
    // Predicated region
    $region58: #{tpu_custom_call.1} parent=1 // pred_check
      _
    $region59: #{tpu_custom_call.1} parent=1 // pred_check_branch
      %121 = sbr.rel (0) target = $region61
    $region60: #{tpu_custom_call.1} parent=1 // pred_region
      %122 = dma.done [#allocation9], 16
    $region61: #{tpu_custom_call.1} parent=1 // pred_fallthru
      _
    // Predicated region
    $region62: #{tpu_custom_call.1} parent=1 // pred_check
      _
    $region63: #{tpu_custom_call.1} parent=1 // pred_check_branch
      %124 = sbr.rel (0) target = $region65
    $region64: #{tpu_custom_call.1} parent=1 // pred_region
      %125 = dma.done [#allocation12], 256
    $region65: #{tpu_custom_call.1} parent=1 // pred_fallthru
      _
    // Predicated region
    $region66: #{tpu_custom_call.1} parent=1 // pred_check
      _
    $region67: #{tpu_custom_call.1} parent=1 // pred_check_branch
      %127 = sbr.rel (0) target = $region69
    $region68: #{tpu_custom_call.1} parent=1 // pred_region
      %128 = dma.done [#allocation12], 256
    $region69: #{tpu_custom_call.1} parent=1 // pred_fallthru
      _
    // Predicated region
    $region70: #{tpu_custom_call.1} parent=1 // pred_check
      _
    $region71: #{tpu_custom_call.1} parent=1 // pred_check_branch
      %130 = sbr.rel (0) target = $region73
    $region72: #{tpu_custom_call.1} parent=1 // pred_region
      %131 = dma.done [#allocation15], 32
    $region73: #{tpu_custom_call.1} parent=1 // pred_fallthru
      _
    // Predicated region
    $region74: #{tpu_custom_call.1} parent=1 // pred_check
      _
    $region75: #{tpu_custom_call.1} parent=1 // pred_check_branch
      %133 = sbr.rel (0) target = $region77
    $region76: #{tpu_custom_call.1} parent=1 // pred_region
      %134 = dma.done [#allocation15], 256
    $region77: #{tpu_custom_call.1} parent=1 // pred_fallthru
      _
    %v135 = vld [vmem:[#allocation5] sm:$0xff]
    %v136 = vld [vmem:[#allocation8] sm:$0xff]
    %v137 = vld [vmem:[#allocation8 + $0x8] sm:$0xff]
    %v138 = vld [vmem:[#allocation8 + $0x10] sm:$0xff]
    %v139 = vld [vmem:[#allocation8 + $0x18] sm:$0xff]
    %v140 = vld [vmem:[#allocation10] sm:$0x1]
    %v142 = vlaneseq
    %v143 = vshrl.u32 %v142, 7
    %v144 = vsub.s32 0, %v143
    %v145 = vrot.slane %v140, %v144
    %vm147 = vcmask 261120
    %v149 = vsel %vm147, %v135, 0
    %151 = vmatprep.subr.mxu0 0.0
    %152 = vmatpush1.msra.mxu0 %v136
    %153 = vmatprep.subr.mxu0 0.0
    %154 = vmatpush1.msra.mxu0 %v137
    %155 = vmatprep.subr.mxu0 0.0
    %156 = vmatpush1.msra.mxu0 %v138
    %157 = vmatprep.subr.mxu0 0.0
    %158 = vmatpush1.msra.mxu0 %v139
    %159 = vmatprep.subr.mxu0 0.0
    %160 = vmatpush1.msra.mxu0 0.0
    %161 = vmatprep.subr.mxu0 0.0
    %162 = vmatpush1.msra.mxu0 0.0
    %163 = vmatprep.subr.mxu0 0.0
    %164 = vmatpush1.msra.mxu0 0.0
    %165 = vmatprep.subr.mxu0 0.0
    %166 = vmatpush1.msra.mxu0 0.0
    %167 = vmatprep.subr.mxu0 0.0
    %168 = vmatpush1.msra.mxu0 0.0
    %169 = vmatprep.subr.mxu0 0.0
    %170 = vmatpush1.msra.mxu0 0.0
    %171 = vmatprep.subr.mxu0 0.0
    %172 = vmatpush1.msra.mxu0 0.0
    %173 = vmatprep.subr.mxu0 0.0
    %174 = vmatpush1.msra.mxu0 0.0
    %175 = vmatprep.subr.mxu0 0.0
    %176 = vmatpush1.msra.mxu0 0.0
    %177 = vmatprep.subr.mxu0 0.0
    %178 = vmatpush1.msra.mxu0 0.0
    %179 = vmatprep.subr.mxu0 0.0
    %180 = vmatpush1.msra.mxu0 0.0
    %181 = vmatprep.subr.mxu0 0.0
    %182 = vmatpush1.msra.mxu0 0.0
    %183 = vmatprep.subr.mxu0 0.0
    %184 = vmatpush1.msra.mxu0 0.0
    %185 = vmatprep.subr.mxu0 0.0
    %186 = vmatpush1.msra.mxu0 0.0
    %187 = vmatprep.subr.mxu0 0.0
    %188 = vmatpush1.msra.mxu0 0.0
    %189 = vmatprep.subr.mxu0 0.0
    %190 = vmatpush1.msra.mxu0 0.0
    %191 = vmatprep.subr.mxu0 0.0
    %192 = vmatpush1.msra.mxu0 0.0
    %193 = vmatprep.subr.mxu0 0.0
    %194 = vmatpush1.msra.mxu0 0.0
    %195 = vmatprep.subr.mxu0 0.0
    %196 = vmatpush1.msra.mxu0 0.0
    %197 = vmatprep.subr.mxu0 0.0
    %198 = vmatpush1.msra.mxu0 0.0
    %199 = vmatprep.subr.mxu0 0.0
    %200 = vmatpush1.msra.mxu0 0.0
    %201 = vmatprep.subr.mxu0 0.0
    %202 = vmatpush1.msra.mxu0 0.0
    %203 = vmatprep.subr.mxu0 0.0
    %204 = vmatpush1.msra.mxu0 0.0
    %205 = vmatprep.subr.mxu0 0.0
    %206 = vmatpush1.msra.mxu0 0.0
    %207 = vmatprep.subr.mxu0 0.0
    %208 = vmatpush1.msra.mxu0 0.0
    %209 = vmatprep.subr.mxu0 0.0
    %210 = vmatpush1.msra.mxu0 0.0
    %211 = vmatprep.subr.mxu0 0.0
    %212 = vmatpush1.msra.mxu0 0.0
    %213 = vmatprep.subr.mxu0 0.0
    %214 = vmatpush1.msra.mxu0 0.0
    %215 = vmatprep.mubr.f32.mxu0 0.0
    %216 = vmatmul.mubr.f32.gmra.mrb[0].mxu0 %v149
    %v217 = vpop.f32.mrb[0].mxu0
    %v218 = vadd.f32 %v145, %v217
    %v219 = vpop.f32.mrb[0].mxu0
    %220 = vdwg.mxu0
    %221 = vst [vmem:[#allocation2] sm:$0xff] %v218
    %v222 = vld [vmem:[#allocation11] sm:$0xff]
    %v223 = vld [vmem:[#allocation11 + $0x8] sm:$0xff]
    %v224 = vld [vmem:[#allocation13] sm:$0xff]
    %v225 = vld [vmem:[#allocation13 + $0x8] sm:$0xff]
    %v226 = vld [vmem:[%s5] sm:$0x1]
    %v227 = vld [vmem:[#allocation14] sm:$0x1]
    %v228 = vld [vmem:[%s5 + $0x1] sm:$0x1]
    %v229 = vld [vmem:[#allocation14 + $0x1] sm:$0x1]
    %v230 = vld [vmem:[#allocation2] sm:$0x1]
    %v231 = vld [vmem:[#allocation2 + $0x7] sm:$0x1]
    %vm232 = vcmask 130048
    %v234 = vsel %vm232, %v226, 0
    %236 = vmatprep.subr.mxu0 0.0
    %237 = vmatpush1.msra.mxu0 %v222
    %238 = vmatprep.subr.mxu0 0.0
    %239 = vmatpush1.msra.mxu0 %v223
    %240 = vmatprep.subr.mxu0 0.0
    %241 = vmatpush1.msra.mxu0 0.0
    %242 = vmatprep.subr.mxu0 0.0
    %243 = vmatpush1.msra.mxu0 0.0
    %244 = vmatprep.subr.mxu0 0.0
    %245 = vmatpush1.msra.mxu0 0.0
    %246 = vmatprep.subr.mxu0 0.0
    %247 = vmatpush1.msra.mxu0 0.0
    %248 = vmatprep.subr.mxu0 0.0
    %249 = vmatpush1.msra.mxu0 0.0
    %250 = vmatprep.subr.mxu0 0.0
    %251 = vmatpush1.msra.mxu0 0.0
    %252 = vmatprep.subr.mxu0 0.0
    %253 = vmatpush1.msra.mxu0 0.0
    %254 = vmatprep.subr.mxu0 0.0
    %255 = vmatpush1.msra.mxu0 0.0
    %256 = vmatprep.subr.mxu0 0.0
    %257 = vmatpush1.msra.mxu0 0.0
    %258 = vmatprep.subr.mxu0 0.0
    %259 = vmatpush1.msra.mxu0 0.0
    %260 = vmatprep.subr.mxu0 0.0
    %261 = vmatpush1.msra.mxu0 0.0
    %262 = vmatprep.subr.mxu0 0.0
    %263 = vmatpush1.msra.mxu0 0.0
    %264 = vmatprep.subr.mxu0 0.0
    %265 = vmatpush1.msra.mxu0 0.0
    %266 = vmatprep.subr.mxu0 0.0
    %267 = vmatpush1.msra.mxu0 0.0
    %268 = vmatprep.subr.mxu0 0.0
    %269 = vmatpush1.msra.mxu0 0.0
    %270 = vmatprep.subr.mxu0 0.0
    %271 = vmatpush1.msra.mxu0 0.0
    %272 = vmatprep.subr.mxu0 0.0
    %273 = vmatpush1.msra.mxu0 0.0
    %274 = vmatprep.subr.mxu0 0.0
    %275 = vmatpush1.msra.mxu0 0.0
    %276 = vmatprep.subr.mxu0 0.0
    %277 = vmatpush1.msra.mxu0 0.0
    %278 = vmatprep.subr.mxu0 0.0
    %279 = vmatpush1.msra.mxu0 0.0
    %280 = vmatprep.subr.mxu0 0.0
    %281 = vmatpush1.msra.mxu0 0.0
    %282 = vmatprep.subr.mxu0 0.0
    %283 = vmatpush1.msra.mxu0 0.0
    %284 = vmatprep.subr.mxu0 0.0
    %285 = vmatpush1.msra.mxu0 0.0
    %286 = vmatprep.subr.mxu0 0.0
    %287 = vmatpush1.msra.mxu0 0.0
    %288 = vmatprep.subr.mxu0 0.0
    %289 = vmatpush1.msra.mxu0 0.0
    %290 = vmatprep.subr.mxu0 0.0
    %291 = vmatpush1.msra.mxu0 0.0
    %292 = vmatprep.subr.mxu0 0.0
    %293 = vmatpush1.msra.mxu0 0.0
    %294 = vmatprep.subr.mxu0 0.0
    %295 = vmatpush1.msra.mxu0 0.0
    %296 = vmatprep.subr.mxu0 0.0
    %297 = vmatpush1.msra.mxu0 0.0
    %298 = vmatprep.subr.mxu0 0.0
    %299 = vmatpush1.msra.mxu0 0.0
    %300 = vmatprep.mubr.f32.mxu0 0.0
    %301 = vmatmul.mubr.f32.gmra.mrb[0].mxu0 %v234
    %v302 = vpop.f32.mrb[0].mxu0
    %v303 = vadd.f32 0.0, %v302
    %v304 = vpop.f32.mrb[0].mxu0
    %305 = vdwg.mxu0
    %v306 = vadd.f32 %v230, %v303
    %v308 = vsel %vm232, %v228, 0
    %310 = vmatprep.subr.mxu0 0.0
    %311 = vmatpush1.msra.mxu0 %v224
    %312 = vmatprep.subr.mxu0 0.0
    %313 = vmatpush1.msra.mxu0 %v225
    %314 = vmatprep.subr.mxu0 0.0
    %315 = vmatpush1.msra.mxu0 0.0
    %316 = vmatprep.subr.mxu0 0.0
    %317 = vmatpush1.msra.mxu0 0.0
    %318 = vmatprep.subr.mxu0 0.0
    %319 = vmatpush1.msra.mxu0 0.0
    %320 = vmatprep.subr.mxu0 0.0
    %321 = vmatpush1.msra.mxu0 0.0
    %322 = vmatprep.subr.mxu0 0.0
    %323 = vmatpush1.msra.mxu0 0.0
    %324 = vmatprep.subr.mxu0 0.0
    %325 = vmatpush1.msra.mxu0 0.0
    %326 = vmatprep.subr.mxu0 0.0
    %327 = vmatpush1.msra.mxu0 0.0
    %328 = vmatprep.subr.mxu0 0.0
    %329 = vmatpush1.msra.mxu0 0.0
    %330 = vmatprep.subr.mxu0 0.0
    %331 = vmatpush1.msra.mxu0 0.0
    %332 = vmatprep.subr.mxu0 0.0
    %333 = vmatpush1.msra.mxu0 0.0
    %334 = vmatprep.subr.mxu0 0.0
    %335 = vmatpush1.msra.mxu0 0.0
    %336 = vmatprep.subr.mxu0 0.0
    %337 = vmatpush1.msra.mxu0 0.0
    %338 = vmatprep.subr.mxu0 0.0
    %339 = vmatpush1.msra.mxu0 0.0
    %340 = vmatprep.subr.mxu0 0.0
    %341 = vmatpush1.msra.mxu0 0.0
    %342 = vmatprep.subr.mxu0 0.0
    %343 = vmatpush1.msra.mxu0 0.0
    %344 = vmatprep.subr.mxu0 0.0
    %345 = vmatpush1.msra.mxu0 0.0
    %346 = vmatprep.subr.mxu0 0.0
    %347 = vmatpush1.msra.mxu0 0.0
    %348 = vmatprep.subr.mxu0 0.0
    %349 = vmatpush1.msra.mxu0 0.0
    %350 = vmatprep.subr.mxu0 0.0
    %351 = vmatpush1.msra.mxu0 0.0
    %352 = vmatprep.subr.mxu0 0.0
    %353 = vmatpush1.msra.mxu0 0.0
    %354 = vmatprep.subr.mxu0 0.0
    %355 = vmatpush1.msra.mxu0 0.0
    %356 = vmatprep.subr.mxu0 0.0
    %357 = vmatpush1.msra.mxu0 0.0
    %358 = vmatprep.subr.mxu0 0.0
    %359 = vmatpush1.msra.mxu0 0.0
    %360 = vmatprep.subr.mxu0 0.0
    %361 = vmatpush1.msra.mxu0 0.0
    %362 = vmatprep.subr.mxu0 0.0
    %363 = vmatpush1.msra.mxu0 0.0
    %364 = vmatprep.subr.mxu0 0.0
    %365 = vmatpush1.msra.mxu0 0.0
    %366 = vmatprep.subr.mxu0 0.0
    %367 = vmatpush1.msra.mxu0 0.0
    %368 = vmatprep.subr.mxu0 0.0
    %369 = vmatpush1.msra.mxu0 0.0
    %370 = vmatprep.subr.mxu0 0.0
    %371 = vmatpush1.msra.mxu0 0.0
    %372 = vmatprep.subr.mxu0 0.0
    %373 = vmatpush1.msra.mxu0 0.0
    %374 = vmatprep.mubr.f32.mxu0 0.0
    %375 = vmatmul.mubr.f32.gmra.mrb[0].mxu0 %v308
    %v376 = vpop.f32.mrb[0].mxu0
    %v377 = vadd.f32 0.0, %v376
    %v378 = vpop.f32.mrb[0].mxu0
    %379 = vdwg.mxu0
    %381 = vrot.lane.b32.xlu0 %v377, 64
    %v382 = vpop.permute.xlu0 %381
    %v384 = vadd.f32 %v231, %v382
    %v385 = vxor.u32 %v306, 2147483648
    %v386 = vmul.f32 %v385, 1.442695
    %v387 = vpow.pop %v386
    %v388 = vadd.f32 %v387, 1.0
    %v389 = vrcp.pop %v388
    %v390 = vmul.f32 1.0, %v389
    %v391 = vtanh.pop %v306
    %393 = vrot.lane.b32.xlu0 %v227, 16
    %v394 = vpop.permute.xlu0 %393
    %v396 = vmul.f32 %v390, %v394
    %398 = vrot.lane.b32.xlu0 %v391, 80
    %v399 = vpop.permute.xlu0 %398
    %v401 = vmul.f32 %v390, %v399
    %403 = vrot.lane.b32.xlu0 %v401, 16
    %v404 = vpop.permute.xlu0 %403
    %v406 = vadd.f32 %v396, %v404
    %v407 = vtanh.pop %v406
    %409 = vrot.lane.b32.xlu0 %v407, 16
    %v410 = vpop.permute.xlu0 %409
    %v412 = vmul.f32 %v390, %v410
    %v413 = vxor.u32 %v384, 2147483648
    %v414 = vmul.f32 %v413, 1.442695
    %v415 = vpow.pop %v414
    %v416 = vadd.f32 %v415, 1.0
    %v417 = vrcp.pop %v416
    %v418 = vmul.f32 1.0, %v417
    %v419 = vtanh.pop %v384
    %421 = vrot.lane.b32.xlu0 %v229, 80
    %v422 = vpop.permute.xlu0 %421
    %v424 = vmul.f32 %v418, %v422
    %426 = vrot.lane.b32.xlu0 %v419, 80
    %v427 = vpop.permute.xlu0 %426
    %v429 = vmul.f32 %v418, %v427
    %431 = vrot.lane.b32.xlu0 %v429, 16
    %v432 = vpop.permute.xlu0 %431
    %v434 = vadd.f32 %v424, %v432
    %v435 = vtanh.pop %v434
    %437 = vrot.lane.b32.xlu0 %v435, 16
    %v438 = vpop.permute.xlu0 %437
    %v440 = vmul.f32 %v418, %v438
    %442 = vrot.lane.b32.xlu0 %v412, 96
    %v443 = vpop.permute.xlu0 %442
    %vm445 = vcmask 122880
    %446 = vst.msk [vmem:[#allocation3] sm:$0x1] %vm445, %v443
    %448 = vrot.lane.b32.xlu0 %v440, 32
    %v449 = vpop.permute.xlu0 %448
    %451 = vst.msk [vmem:[#allocation4 + $0x7] sm:$0x1] %vm445, %v449
    %v452 = vld [vmem:[#allocation2 + $0x1] sm:$0x1]
    %v453 = vld [vmem:[#allocation2 + $0x6] sm:$0x1]
    %v454 = vsel %vm232, %v443, 0
    %456 = vmatprep.subr.mxu0 0.0
    %457 = vmatpush1.msra.mxu0 %v222
    %458 = vmatprep.subr.mxu0 0.0
    %459 = vmatpush1.msra.mxu0 %v223
    %460 = vmatprep.subr.mxu0 0.0
    %461 = vmatpush1.msra.mxu0 0.0
    %462 = vmatprep.subr.mxu0 0.0
    %463 = vmatpush1.msra.mxu0 0.0
    %464 = vmatprep.subr.mxu0 0.0
    %465 = vmatpush1.msra.mxu0 0.0
    %466 = vmatprep.subr.mxu0 0.0
    %467 = vmatpush1.msra.mxu0 0.0
    %468 = vmatprep.subr.mxu0 0.0
    %469 = vmatpush1.msra.mxu0 0.0
    %470 = vmatprep.subr.mxu0 0.0
    %471 = vmatpush1.msra.mxu0 0.0
    %472 = vmatprep.subr.mxu0 0.0
    %473 = vmatpush1.msra.mxu0 0.0
    %474 = vmatprep.subr.mxu0 0.0
    %475 = vmatpush1.msra.mxu0 0.0
    %476 = vmatprep.subr.mxu0 0.0
    %477 = vmatpush1.msra.mxu0 0.0
    %478 = vmatprep.subr.mxu0 0.0
    %479 = vmatpush1.msra.mxu0 0.0
    %480 = vmatprep.subr.mxu0 0.0
    %481 = vmatpush1.msra.mxu0 0.0
    %482 = vmatprep.subr.mxu0 0.0
    %483 = vmatpush1.msra.mxu0 0.0
    %484 = vmatprep.subr.mxu0 0.0
    %485 = vmatpush1.msra.mxu0 0.0
    %486 = vmatprep.subr.mxu0 0.0
    %487 = vmatpush1.msra.mxu0 0.0
    %488 = vmatprep.subr.mxu0 0.0
    %489 = vmatpush1.msra.mxu0 0.0
    %490 = vmatprep.subr.mxu0 0.0
    %491 = vmatpush1.msra.mxu0 0.0
    %492 = vmatprep.subr.mxu0 0.0
    %493 = vmatpush1.msra.mxu0 0.0
    %494 = vmatprep.subr.mxu0 0.0
    %495 = vmatpush1.msra.mxu0 0.0
    %496 = vmatprep.subr.mxu0 0.0
    %497 = vmatpush1.msra.mxu0 0.0
    %498 = vmatprep.subr.mxu0 0.0
    %499 = vmatpush1.msra.mxu0 0.0
    %500 = vmatprep.subr.mxu0 0.0
    %501 = vmatpush1.msra.mxu0 0.0
    %502 = vmatprep.subr.mxu0 0.0
    %503 = vmatpush1.msra.mxu0 0.0
    %504 = vmatprep.subr.mxu0 0.0
    %505 = vmatpush1.msra.mxu0 0.0
    %506 = vmatprep.subr.mxu0 0.0
    %507 = vmatpush1.msra.mxu0 0.0
    %508 = vmatprep.subr.mxu0 0.0
    %509 = vmatpush1.msra.mxu0 0.0
    %510 = vmatprep.subr.mxu0 0.0
    %511 = vmatpush1.msra.mxu0 0.0
    %512 = vmatprep.subr.mxu0 0.0
    %513 = vmatpush1.msra.mxu0 0.0
    %514 = vmatprep.subr.mxu0 0.0
    %515 = vmatpush1.msra.mxu0 0.0
    %516 = vmatprep.subr.mxu0 0.0
    %517 = vmatpush1.msra.mxu0 0.0
    %518 = vmatprep.subr.mxu0 0.0
    %519 = vmatpush1.msra.mxu0 0.0
    %520 = vmatprep.mubr.f32.mxu0 0.0
    %521 = vmatmul.mubr.f32.gmra.mrb[0].mxu0 %v454
    %v522 = vpop.f32.mrb[0].mxu0
    %v523 = vadd.f32 0.0, %v522
    %v524 = vpop.f32.mrb[0].mxu0
    %525 = vdwg.mxu0
    %v526 = vadd.f32 %v452, %v523
    %v527 = vsel %vm232, %v449, 0
    %529 = vmatprep.subr.mxu0 0.0
    %530 = vmatpush1.msra.mxu0 %v224
    %531 = vmatprep.subr.mxu0 0.0
    %532 = vmatpush1.msra.mxu0 %v225
    %533 = vmatprep.subr.mxu0 0.0
    %534 = vmatpush1.msra.mxu0 0.0
    %535 = vmatprep.subr.mxu0 0.0
    %536 = vmatpush1.msra.mxu0 0.0
    %537 = vmatprep.subr.mxu0 0.0
    %538 = vmatpush1.msra.mxu0 0.0
    %539 = vmatprep.subr.mxu0 0.0
    %540 = vmatpush1.msra.mxu0 0.0
    %541 = vmatprep.subr.mxu0 0.0
    %542 = vmatpush1.msra.mxu0 0.0
    %543 = vmatprep.subr.mxu0 0.0
    %544 = vmatpush1.msra.mxu0 0.0
    %545 = vmatprep.subr.mxu0 0.0
    %546 = vmatpush1.msra.mxu0 0.0
    %547 = vmatprep.subr.mxu0 0.0
    %548 = vmatpush1.msra.mxu0 0.0
    %549 = vmatprep.subr.mxu0 0.0
    %550 = vmatpush1.msra.mxu0 0.0
    %551 = vmatprep.subr.mxu0 0.0
    %552 = vmatpush1.msra.mxu0 0.0
    %553 = vmatprep.subr.mxu0 0.0
    %554 = vmatpush1.msra.mxu0 0.0
    %555 = vmatprep.subr.mxu0 0.0
    %556 = vmatpush1.msra.mxu0 0.0
    %557 = vmatprep.subr.mxu0 0.0
    %558 = vmatpush1.msra.mxu0 0.0
    %559 = vmatprep.subr.mxu0 0.0
    %560 = vmatpush1.msra.mxu0 0.0
    %561 = vmatprep.subr.mxu0 0.0
    %562 = vmatpush1.msra.mxu0 0.0
    %563 = vmatprep.subr.mxu0 0.0
    %564 = vmatpush1.msra.mxu0 0.0
    %565 = vmatprep.subr.mxu0 0.0
    %566 = vmatpush1.msra.mxu0 0.0
    %567 = vmatprep.subr.mxu0 0.0
    %568 = vmatpush1.msra.mxu0 0.0
    %569 = vmatprep.subr.mxu0 0.0
    %570 = vmatpush1.msra.mxu0 0.0
    %571 = vmatprep.subr.mxu0 0.0
    %572 = vmatpush1.msra.mxu0 0.0
    %573 = vmatprep.subr.mxu0 0.0
    %574 = vmatpush1.msra.mxu0 0.0
    %575 = vmatprep.subr.mxu0 0.0
    %576 = vmatpush1.msra.mxu0 0.0
    %577 = vmatprep.subr.mxu0 0.0
    %578 = vmatpush1.msra.mxu0 0.0
    %579 = vmatprep.subr.mxu0 0.0
    %580 = vmatpush1.msra.mxu0 0.0
    %581 = vmatprep.subr.mxu0 0.0
    %582 = vmatpush1.msra.mxu0 0.0
    %583 = vmatprep.subr.mxu0 0.0
    %584 = vmatpush1.msra.mxu0 0.0
    %585 = vmatprep.subr.mxu0 0.0
    %586 = vmatpush1.msra.mxu0 0.0
    %587 = vmatprep.subr.mxu0 0.0
    %588 = vmatpush1.msra.mxu0 0.0
    %589 = vmatprep.subr.mxu0 0.0
    %590 = vmatpush1.msra.mxu0 0.0
    %591 = vmatprep.subr.mxu0 0.0
    %592 = vmatpush1.msra.mxu0 0.0
    %593 = vmatprep.mubr.f32.mxu0 0.0
    %594 = vmatmul.mubr.f32.gmra.mrb[0].mxu0 %v527
    %v595 = vpop.f32.mrb[0].mxu0
    %v596 = vadd.f32 0.0, %v595
    %v597 = vpop.f32.mrb[0].mxu0
    %598 = vdwg.mxu0
    %600 = vrot.lane.b32.xlu0 %v596, 64
    %v601 = vpop.permute.xlu0 %600
    %v603 = vadd.f32 %v453, %v601
    %v604 = vxor.u32 %v526, 2147483648
    %v605 = vmul.f32 %v604, 1.442695
    %v606 = vpow.pop %v605
    %v607 = vadd.f32 %v606, 1.0
    %v608 = vrcp.pop %v607
    %v609 = vmul.f32 1.0, %v608
    %v610 = vtanh.pop %v526
    %v611 = vmul.f32 %v609, %v406
    %613 = vrot.lane.b32.xlu0 %v610, 80
    %v614 = vpop.permute.xlu0 %613
    %v616 = vmul.f32 %v609, %v614
    %618 = vrot.lane.b32.xlu0 %v616, 16
    %v619 = vpop.permute.xlu0 %618
    %v621 = vadd.f32 %v611, %v619
    %v622 = vtanh.pop %v621
    %624 = vrot.lane.b32.xlu0 %v622, 16
    %v625 = vpop.permute.xlu0 %624
    %v627 = vmul.f32 %v609, %v625
    %v628 = vxor.u32 %v603, 2147483648
    %v629 = vmul.f32 %v628, 1.442695
    %v630 = vpow.pop %v629
    %v631 = vadd.f32 %v630, 1.0
    %v632 = vrcp.pop %v631
    %v633 = vmul.f32 1.0, %v632
    %v634 = vtanh.pop %v603
    %v635 = vmul.f32 %v633, %v434
    %637 = vrot.lane.b32.xlu0 %v634, 80
    %v638 = vpop.permute.xlu0 %637
    %v640 = vmul.f32 %v633, %v638
    %642 = vrot.lane.b32.xlu0 %v640, 16
    %v643 = vpop.permute.xlu0 %642
    %v645 = vadd.f32 %v635, %v643
    %v646 = vtanh.pop %v645
    %648 = vrot.lane.b32.xlu0 %v646, 16
    %v649 = vpop.permute.xlu0 %648
    %v651 = vmul.f32 %v633, %v649
    %653 = vrot.lane.b32.xlu0 %v627, 96
    %v654 = vpop.permute.xlu0 %653
    %656 = vst.msk [vmem:[#allocation3 + $0x1] sm:$0x1] %vm445, %v654
    %658 = vrot.lane.b32.xlu0 %v651, 32
    %v659 = vpop.permute.xlu0 %658
    %661 = vst.msk [vmem:[#allocation4 + $0x6] sm:$0x1] %vm445, %v659
    %v662 = vld [vmem:[#allocation2 + $0x2] sm:$0x1]
    %v663 = vld [vmem:[#allocation2 + $0x5] sm:$0x1]
    %v664 = vsel %vm232, %v654, 0
    %666 = vmatprep.subr.mxu0 0.0
    %667 = vmatpush1.msra.mxu0 %v222
    %668 = vmatprep.subr.mxu0 0.0
    %669 = vmatpush1.msra.mxu0 %v223
    %670 = vmatprep.subr.mxu0 0.0
    %671 = vmatpush1.msra.mxu0 0.0
    %672 = vmatprep.subr.mxu0 0.0
    %673 = vmatpush1.msra.mxu0 0.0
    %674 = vmatprep.subr.mxu0 0.0
    %675 = vmatpush1.msra.mxu0 0.0
    %676 = vmatprep.subr.mxu0 0.0
    %677 = vmatpush1.msra.mxu0 0.0
    %678 = vmatprep.subr.mxu0 0.0
    %679 = vmatpush1.msra.mxu0 0.0
    %680 = vmatprep.subr.mxu0 0.0
    %681 = vmatpush1.msra.mxu0 0.0
    %682 = vmatprep.subr.mxu0 0.0
    %683 = vmatpush1.msra.mxu0 0.0
    %684 = vmatprep.subr.mxu0 0.0
    %685 = vmatpush1.msra.mxu0 0.0
    %686 = vmatprep.subr.mxu0 0.0
    %687 = vmatpush1.msra.mxu0 0.0
    %688 = vmatprep.subr.mxu0 0.0
    %689 = vmatpush1.msra.mxu0 0.0
    %690 = vmatprep.subr.mxu0 0.0
    %691 = vmatpush1.msra.mxu0 0.0
    %692 = vmatprep.subr.mxu0 0.0
    %693 = vmatpush1.msra.mxu0 0.0
    %694 = vmatprep.subr.mxu0 0.0
    %695 = vmatpush1.msra.mxu0 0.0
    %696 = vmatprep.subr.mxu0 0.0
    %697 = vmatpush1.msra.mxu0 0.0
    %698 = vmatprep.subr.mxu0 0.0
    %699 = vmatpush1.msra.mxu0 0.0
    %700 = vmatprep.subr.mxu0 0.0
    %701 = vmatpush1.msra.mxu0 0.0
    %702 = vmatprep.subr.mxu0 0.0
    %703 = vmatpush1.msra.mxu0 0.0
    %704 = vmatprep.subr.mxu0 0.0
    %705 = vmatpush1.msra.mxu0 0.0
    %706 = vmatprep.subr.mxu0 0.0
    %707 = vmatpush1.msra.mxu0 0.0
    %708 = vmatprep.subr.mxu0 0.0
    %709 = vmatpush1.msra.mxu0 0.0
    %710 = vmatprep.subr.mxu0 0.0
    %711 = vmatpush1.msra.mxu0 0.0
    %712 = vmatprep.subr.mxu0 0.0
    %713 = vmatpush1.msra.mxu0 0.0
    %714 = vmatprep.subr.mxu0 0.0
    %715 = vmatpush1.msra.mxu0 0.0
    %716 = vmatprep.subr.mxu0 0.0
    %717 = vmatpush1.msra.mxu0 0.0
    %718 = vmatprep.subr.mxu0 0.0
    %719 = vmatpush1.msra.mxu0 0.0
    %720 = vmatprep.subr.mxu0 0.0
    %721 = vmatpush1.msra.mxu0 0.0
    %722 = vmatprep.subr.mxu0 0.0
    %723 = vmatpush1.msra.mxu0 0.0
    %724 = vmatprep.subr.mxu0 0.0
    %725 = vmatpush1.msra.mxu0 0.0
    %726 = vmatprep.subr.mxu0 0.0
    %727 = vmatpush1.msra.mxu0 0.0
    %728 = vmatprep.subr.mxu0 0.0
    %729 = vmatpush1.msra.mxu0 0.0
    %730 = vmatprep.mubr.f32.mxu0 0.0
    %731 = vmatmul.mubr.f32.gmra.mrb[0].mxu0 %v664
    %v732 = vpop.f32.mrb[0].mxu0
    %v733 = vadd.f32 0.0, %v732
    %v734 = vpop.f32.mrb[0].mxu0
    %735 = vdwg.mxu0
    %v736 = vadd.f32 %v662, %v733
    %v737 = vsel %vm232, %v659, 0
    %739 = vmatprep.subr.mxu0 0.0
    %740 = vmatpush1.msra.mxu0 %v224
    %741 = vmatprep.subr.mxu0 0.0
    %742 = vmatpush1.msra.mxu0 %v225
    %743 = vmatprep.subr.mxu0 0.0
    %744 = vmatpush1.msra.mxu0 0.0
    %745 = vmatprep.subr.mxu0 0.0
    %746 = vmatpush1.msra.mxu0 0.0
    %747 = vmatprep.subr.mxu0 0.0
    %748 = vmatpush1.msra.mxu0 0.0
    %749 = vmatprep.subr.mxu0 0.0
    %750 = vmatpush1.msra.mxu0 0.0
    %751 = vmatprep.subr.mxu0 0.0
    %752 = vmatpush1.msra.mxu0 0.0
    %753 = vmatprep.subr.mxu0 0.0
    %754 = vmatpush1.msra.mxu0 0.0
    %755 = vmatprep.subr.mxu0 0.0
    %756 = vmatpush1.msra.mxu0 0.0
    %757 = vmatprep.subr.mxu0 0.0
    %758 = vmatpush1.msra.mxu0 0.0
    %759 = vmatprep.subr.mxu0 0.0
    %760 = vmatpush1.msra.mxu0 0.0
    %761 = vmatprep.subr.mxu0 0.0
    %762 = vmatpush1.msra.mxu0 0.0
    %763 = vmatprep.subr.mxu0 0.0
    %764 = vmatpush1.msra.mxu0 0.0
    %765 = vmatprep.subr.mxu0 0.0
    %766 = vmatpush1.msra.mxu0 0.0
    %767 = vmatprep.subr.mxu0 0.0
    %768 = vmatpush1.msra.mxu0 0.0
    %769 = vmatprep.subr.mxu0 0.0
    %770 = vmatpush1.msra.mxu0 0.0
    %771 = vmatprep.subr.mxu0 0.0
    %772 = vmatpush1.msra.mxu0 0.0
    %773 = vmatprep.subr.mxu0 0.0
    %774 = vmatpush1.msra.mxu0 0.0
    %775 = vmatprep.subr.mxu0 0.0
    %776 = vmatpush1.msra.mxu0 0.0
    %777 = vmatprep.subr.mxu0 0.0
    %778 = vmatpush1.msra.mxu0 0.0
    %779 = vmatprep.subr.mxu0 0.0
    %780 = vmatpush1.msra.mxu0 0.0
    %781 = vmatprep.subr.mxu0 0.0
    %782 = vmatpush1.msra.mxu0 0.0
    %783 = vmatprep.subr.mxu0 0.0
    %784 = vmatpush1.msra.mxu0 0.0
    %785 = vmatprep.subr.mxu0 0.0
    %786 = vmatpush1.msra.mxu0 0.0
    %787 = vmatprep.subr.mxu0 0.0
    %788 = vmatpush1.msra.mxu0 0.0
    %789 = vmatprep.subr.mxu0 0.0
    %790 = vmatpush1.msra.mxu0 0.0
    %791 = vmatprep.subr.mxu0 0.0
    %792 = vmatpush1.msra.mxu0 0.0
    %793 = vmatprep.subr.mxu0 0.0
    %794 = vmatpush1.msra.mxu0 0.0
    %795 = vmatprep.subr.mxu0 0.0
    %796 = vmatpush1.msra.mxu0 0.0
    %797 = vmatprep.subr.mxu0 0.0
    %798 = vmatpush1.msra.mxu0 0.0
    %799 = vmatprep.subr.mxu0 0.0
    %800 = vmatpush1.msra.mxu0 0.0
    %801 = vmatprep.subr.mxu0 0.0
    %802 = vmatpush1.msra.mxu0 0.0
    %803 = vmatprep.mubr.f32.mxu0 0.0
    %804 = vmatmul.mubr.f32.gmra.mrb[0].mxu0 %v737
    %v805 = vpop.f32.mrb[0].mxu0
    %v806 = vadd.f32 0.0, %v805
    %v807 = vpop.f32.mrb[0].mxu0
    %808 = vdwg.mxu0
    %810 = vrot.lane.b32.xlu0 %v806, 64
    %v811 = vpop.permute.xlu0 %810
    %v813 = vadd.f32 %v663, %v811
    %v814 = vxor.u32 %v736, 2147483648
    %v815 = vmul.f32 %v814, 1.442695
    %v816 = vpow.pop %v815
    %v817 = vadd.f32 %v816, 1.0
    %v818 = vrcp.pop %v817
    %v819 = vmul.f32 1.0, %v818
    %v820 = vtanh.pop %v736
    %v821 = vmul.f32 %v819, %v621
    %823 = vrot.lane.b32.xlu0 %v820, 80
    %v824 = vpop.permute.xlu0 %823
    %v826 = vmul.f32 %v819, %v824
    %828 = vrot.lane.b32.xlu0 %v826, 16
    %v829 = vpop.permute.xlu0 %828
    %v831 = vadd.f32 %v821, %v829
    %v832 = vtanh.pop %v831
    %834 = vrot.lane.b32.xlu0 %v832, 16
    %v835 = vpop.permute.xlu0 %834
    %v837 = vmul.f32 %v819, %v835
    %v838 = vxor.u32 %v813, 2147483648
    %v839 = vmul.f32 %v838, 1.442695
    %v840 = vpow.pop %v839
    %v841 = vadd.f32 %v840, 1.0
    %v842 = vrcp.pop %v841
    %v843 = vmul.f32 1.0, %v842
    %v844 = vtanh.pop %v813
    %v845 = vmul.f32 %v843, %v645
    %847 = vrot.lane.b32.xlu0 %v844, 80
    %v848 = vpop.permute.xlu0 %847
    %v850 = vmul.f32 %v843, %v848
    %852 = vrot.lane.b32.xlu0 %v850, 16
    %v853 = vpop.permute.xlu0 %852
    %v855 = vadd.f32 %v845, %v853
    %v856 = vtanh.pop %v855
    %858 = vrot.lane.b32.xlu0 %v856, 16
    %v859 = vpop.permute.xlu0 %858
    %v861 = vmul.f32 %v843, %v859
    %863 = vrot.lane.b32.xlu0 %v837, 96
    %v864 = vpop.permute.xlu0 %863
    %866 = vst.msk [vmem:[#allocation3 + $0x2] sm:$0x1] %vm445, %v864
    %868 = vrot.lane.b32.xlu0 %v861, 32
    %v869 = vpop.permute.xlu0 %868
    %871 = vst.msk [vmem:[#allocation4 + $0x5] sm:$0x1] %vm445, %v869
    %v872 = vld [vmem:[#allocation2 + $0x3] sm:$0x1]
    %v873 = vld [vmem:[#allocation2 + $0x4] sm:$0x1]
    %v874 = vsel %vm232, %v864, 0
    %876 = vmatprep.subr.mxu0 0.0
    %877 = vmatpush1.msra.mxu0 %v222
    %878 = vmatprep.subr.mxu0 0.0
    %879 = vmatpush1.msra.mxu0 %v223
    %880 = vmatprep.subr.mxu0 0.0
    %881 = vmatpush1.msra.mxu0 0.0
    %882 = vmatprep.subr.mxu0 0.0
    %883 = vmatpush1.msra.mxu0 0.0
    %884 = vmatprep.subr.mxu0 0.0
    %885 = vmatpush1.msra.mxu0 0.0
    %886 = vmatprep.subr.mxu0 0.0
    %887 = vmatpush1.msra.mxu0 0.0
    %888 = vmatprep.subr.mxu0 0.0
    %889 = vmatpush1.msra.mxu0 0.0
    %890 = vmatprep.subr.mxu0 0.0
    %891 = vmatpush1.msra.mxu0 0.0
    %892 = vmatprep.subr.mxu0 0.0
    %893 = vmatpush1.msra.mxu0 0.0
    %894 = vmatprep.subr.mxu0 0.0
    %895 = vmatpush1.msra.mxu0 0.0
    %896 = vmatprep.subr.mxu0 0.0
    %897 = vmatpush1.msra.mxu0 0.0
    %898 = vmatprep.subr.mxu0 0.0
    %899 = vmatpush1.msra.mxu0 0.0
    %900 = vmatprep.subr.mxu0 0.0
    %901 = vmatpush1.msra.mxu0 0.0
    %902 = vmatprep.subr.mxu0 0.0
    %903 = vmatpush1.msra.mxu0 0.0
    %904 = vmatprep.subr.mxu0 0.0
    %905 = vmatpush1.msra.mxu0 0.0
    %906 = vmatprep.subr.mxu0 0.0
    %907 = vmatpush1.msra.mxu0 0.0
    %908 = vmatprep.subr.mxu0 0.0
    %909 = vmatpush1.msra.mxu0 0.0
    %910 = vmatprep.subr.mxu0 0.0
    %911 = vmatpush1.msra.mxu0 0.0
    %912 = vmatprep.subr.mxu0 0.0
    %913 = vmatpush1.msra.mxu0 0.0
    %914 = vmatprep.subr.mxu0 0.0
    %915 = vmatpush1.msra.mxu0 0.0
    %916 = vmatprep.subr.mxu0 0.0
    %917 = vmatpush1.msra.mxu0 0.0
    %918 = vmatprep.subr.mxu0 0.0
    %919 = vmatpush1.msra.mxu0 0.0
    %920 = vmatprep.subr.mxu0 0.0
    %921 = vmatpush1.msra.mxu0 0.0
    %922 = vmatprep.subr.mxu0 0.0
    %923 = vmatpush1.msra.mxu0 0.0
    %924 = vmatprep.subr.mxu0 0.0
    %925 = vmatpush1.msra.mxu0 0.0
    %926 = vmatprep.subr.mxu0 0.0
    %927 = vmatpush1.msra.mxu0 0.0
    %928 = vmatprep.subr.mxu0 0.0
    %929 = vmatpush1.msra.mxu0 0.0
    %930 = vmatprep.subr.mxu0 0.0
    %931 = vmatpush1.msra.mxu0 0.0
    %932 = vmatprep.subr.mxu0 0.0
    %933 = vmatpush1.msra.mxu0 0.0
    %934 = vmatprep.subr.mxu0 0.0
    %935 = vmatpush1.msra.mxu0 0.0
    %936 = vmatprep.subr.mxu0 0.0
    %937 = vmatpush1.msra.mxu0 0.0
    %938 = vmatprep.subr.mxu0 0.0
    %939 = vmatpush1.msra.mxu0 0.0
    %940 = vmatprep.mubr.f32.mxu0 0.0
    %941 = vmatmul.mubr.f32.gmra.mrb[0].mxu0 %v874
    %v942 = vpop.f32.mrb[0].mxu0
    %v943 = vadd.f32 0.0, %v942
    %v944 = vpop.f32.mrb[0].mxu0
    %945 = vdwg.mxu0
    %v946 = vadd.f32 %v872, %v943
    %v947 = vsel %vm232, %v869, 0
    %949 = vmatprep.subr.mxu0 0.0
    %950 = vmatpush1.msra.mxu0 %v224
    %951 = vmatprep.subr.mxu0 0.0
    %952 = vmatpush1.msra.mxu0 %v225
    %953 = vmatprep.subr.mxu0 0.0
    %954 = vmatpush1.msra.mxu0 0.0
    %955 = vmatprep.subr.mxu0 0.0
    %956 = vmatpush1.msra.mxu0 0.0
    %957 = vmatprep.subr.mxu0 0.0
    %958 = vmatpush1.msra.mxu0 0.0
    %959 = vmatprep.subr.mxu0 0.0
    %960 = vmatpush1.msra.mxu0 0.0
    %961 = vmatprep.subr.mxu0 0.0
    %962 = vmatpush1.msra.mxu0 0.0
    %963 = vmatprep.subr.mxu0 0.0
    %964 = vmatpush1.msra.mxu0 0.0
    %965 = vmatprep.subr.mxu0 0.0
    %966 = vmatpush1.msra.mxu0 0.0
    %967 = vmatprep.subr.mxu0 0.0
    %968 = vmatpush1.msra.mxu0 0.0
    %969 = vmatprep.subr.mxu0 0.0
    %970 = vmatpush1.msra.mxu0 0.0
    %971 = vmatprep.subr.mxu0 0.0
    %972 = vmatpush1.msra.mxu0 0.0
    %973 = vmatprep.subr.mxu0 0.0
    %974 = vmatpush1.msra.mxu0 0.0
    %975 = vmatprep.subr.mxu0 0.0
    %976 = vmatpush1.msra.mxu0 0.0
    %977 = vmatprep.subr.mxu0 0.0
    %978 = vmatpush1.msra.mxu0 0.0
    %979 = vmatprep.subr.mxu0 0.0
    %980 = vmatpush1.msra.mxu0 0.0
    %981 = vmatprep.subr.mxu0 0.0
    %982 = vmatpush1.msra.mxu0 0.0
    %983 = vmatprep.subr.mxu0 0.0
    %984 = vmatpush1.msra.mxu0 0.0
    %985 = vmatprep.subr.mxu0 0.0
    %986 = vmatpush1.msra.mxu0 0.0
    %987 = vmatprep.subr.mxu0 0.0
    %988 = vmatpush1.msra.mxu0 0.0
    %989 = vmatprep.subr.mxu0 0.0
    %990 = vmatpush1.msra.mxu0 0.0
    %991 = vmatprep.subr.mxu0 0.0
    %992 = vmatpush1.msra.mxu0 0.0
    %993 = vmatprep.subr.mxu0 0.0
    %994 = vmatpush1.msra.mxu0 0.0
    %995 = vmatprep.subr.mxu0 0.0
    %996 = vmatpush1.msra.mxu0 0.0
    %997 = vmatprep.subr.mxu0 0.0
    %998 = vmatpush1.msra.mxu0 0.0
    %999 = vmatprep.subr.mxu0 0.0
    %1000 = vmatpush1.msra.mxu0 0.0
    %1001 = vmatprep.subr.mxu0 0.0
    %1002 = vmatpush1.msra.mxu0 0.0
    %1003 = vmatprep.subr.mxu0 0.0
    %1004 = vmatpush1.msra.mxu0 0.0
    %1005 = vmatprep.subr.mxu0 0.0
    %1006 = vmatpush1.msra.mxu0 0.0
    %1007 = vmatprep.subr.mxu0 0.0
    %1008 = vmatpush1.msra.mxu0 0.0
    %1009 = vmatprep.subr.mxu0 0.0
    %1010 = vmatpush1.msra.mxu0 0.0
    %1011 = vmatprep.subr.mxu0 0.0
    %1012 = vmatpush1.msra.mxu0 0.0
    %1013 = vmatprep.mubr.f32.mxu0 0.0
    %1014 = vmatmul.mubr.f32.gmra.mrb[0].mxu0 %v947
    %v1015 = vpop.f32.mrb[0].mxu0
    %v1016 = vadd.f32 0.0, %v1015
    %v1017 = vpop.f32.mrb[0].mxu0
    %1018 = vdwg.mxu0
    %1020 = vrot.lane.b32.xlu0 %v1016, 64
    %v1021 = vpop.permute.xlu0 %1020
    %v1023 = vadd.f32 %v873, %v1021
    %v1024 = vxor.u32 %v946, 2147483648
    %v1025 = vmul.f32 %v1024, 1.442695
    %v1026 = vpow.pop %v1025
    %v1027 = vadd.f32 %v1026, 1.0
    %v1028 = vrcp.pop %v1027
    %v1029 = vmul.f32 1.0, %v1028
    %v1030 = vtanh.pop %v946
    %v1031 = vmul.f32 %v1029, %v831
    %1033 = vrot.lane.b32.xlu0 %v1030, 80
    %v1034 = vpop.permute.xlu0 %1033
    %v1036 = vmul.f32 %v1029, %v1034
    %1038 = vrot.lane.b32.xlu0 %v1036, 16
    %v1039 = vpop.permute.xlu0 %1038
    %v1041 = vadd.f32 %v1031, %v1039
    %v1042 = vtanh.pop %v1041
    %1044 = vrot.lane.b32.xlu0 %v1042, 16
    %v1045 = vpop.permute.xlu0 %1044
    %v1047 = vmul.f32 %v1029, %v1045
    %v1048 = vxor.u32 %v1023, 2147483648
    %v1049 = vmul.f32 %v1048, 1.442695
    %v1050 = vpow.pop %v1049
    %v1051 = vadd.f32 %v1050, 1.0
    %v1052 = vrcp.pop %v1051
    %v1053 = vmul.f32 1.0, %v1052
    %v1054 = vtanh.pop %v1023
    %v1055 = vmul.f32 %v1053, %v855
    %1057 = vrot.lane.b32.xlu0 %v1054, 80
    %v1058 = vpop.permute.xlu0 %1057
    %v1060 = vmul.f32 %v1053, %v1058
    %1062 = vrot.lane.b32.xlu0 %v1060, 16
    %v1063 = vpop.permute.xlu0 %1062
    %v1065 = vadd.f32 %v1055, %v1063
    %v1066 = vtanh.pop %v1065
    %1068 = vrot.lane.b32.xlu0 %v1066, 16
    %v1069 = vpop.permute.xlu0 %1068
    %v1071 = vmul.f32 %v1053, %v1069
    %1073 = vrot.lane.b32.xlu0 %v1047, 96
    %v1074 = vpop.permute.xlu0 %1073
    %1076 = vst.msk [vmem:[#allocation3 + $0x3] sm:$0x1] %vm445, %v1074
    %1078 = vrot.lane.b32.xlu0 %v1071, 32
    %v1079 = vpop.permute.xlu0 %1078
    %1081 = vst.msk [vmem:[#allocation4 + $0x4] sm:$0x1] %vm445, %v1079
    %v1082 = vld [vmem:[#allocation2 + $0x4] sm:$0x1]
    %v1083 = vld [vmem:[#allocation2 + $0x3] sm:$0x1]
    %v1084 = vsel %vm232, %v1074, 0
    %1086 = vmatprep.subr.mxu0 0.0
    %1087 = vmatpush1.msra.mxu0 %v222
    %1088 = vmatprep.subr.mxu0 0.0
    %1089 = vmatpush1.msra.mxu0 %v223
    %1090 = vmatprep.subr.mxu0 0.0
    %1091 = vmatpush1.msra.mxu0 0.0
    %1092 = vmatprep.subr.mxu0 0.0
    %1093 = vmatpush1.msra.mxu0 0.0
    %1094 = vmatprep.subr.mxu0 0.0
    %1095 = vmatpush1.msra.mxu0 0.0
    %1096 = vmatprep.subr.mxu0 0.0
    %1097 = vmatpush1.msra.mxu0 0.0
    %1098 = vmatprep.subr.mxu0 0.0
    %1099 = vmatpush1.msra.mxu0 0.0
    %1100 = vmatprep.subr.mxu0 0.0
    %1101 = vmatpush1.msra.mxu0 0.0
    %1102 = vmatprep.subr.mxu0 0.0
    %1103 = vmatpush1.msra.mxu0 0.0
    %1104 = vmatprep.subr.mxu0 0.0
    %1105 = vmatpush1.msra.mxu0 0.0
    %1106 = vmatprep.subr.mxu0 0.0
    %1107 = vmatpush1.msra.mxu0 0.0
    %1108 = vmatprep.subr.mxu0 0.0
    %1109 = vmatpush1.msra.mxu0 0.0
    %1110 = vmatprep.subr.mxu0 0.0
    %1111 = vmatpush1.msra.mxu0 0.0
    %1112 = vmatprep.subr.mxu0 0.0
    %1113 = vmatpush1.msra.mxu0 0.0
    %1114 = vmatprep.subr.mxu0 0.0
    %1115 = vmatpush1.msra.mxu0 0.0
    %1116 = vmatprep.subr.mxu0 0.0
    %1117 = vmatpush1.msra.mxu0 0.0
    %1118 = vmatprep.subr.mxu0 0.0
    %1119 = vmatpush1.msra.mxu0 0.0
    %1120 = vmatprep.subr.mxu0 0.0
    %1121 = vmatpush1.msra.mxu0 0.0
    %1122 = vmatprep.subr.mxu0 0.0
    %1123 = vmatpush1.msra.mxu0 0.0
    %1124 = vmatprep.subr.mxu0 0.0
    %1125 = vmatpush1.msra.mxu0 0.0
    %1126 = vmatprep.subr.mxu0 0.0
    %1127 = vmatpush1.msra.mxu0 0.0
    %1128 = vmatprep.subr.mxu0 0.0
    %1129 = vmatpush1.msra.mxu0 0.0
    %1130 = vmatprep.subr.mxu0 0.0
    %1131 = vmatpush1.msra.mxu0 0.0
    %1132 = vmatprep.subr.mxu0 0.0
    %1133 = vmatpush1.msra.mxu0 0.0
    %1134 = vmatprep.subr.mxu0 0.0
    %1135 = vmatpush1.msra.mxu0 0.0
    %1136 = vmatprep.subr.mxu0 0.0
    %1137 = vmatpush1.msra.mxu0 0.0
    %1138 = vmatprep.subr.mxu0 0.0
    %1139 = vmatpush1.msra.mxu0 0.0
    %1140 = vmatprep.subr.mxu0 0.0
    %1141 = vmatpush1.msra.mxu0 0.0
    %1142 = vmatprep.subr.mxu0 0.0
    %1143 = vmatpush1.msra.mxu0 0.0
    %1144 = vmatprep.subr.mxu0 0.0
    %1145 = vmatpush1.msra.mxu0 0.0
    %1146 = vmatprep.subr.mxu0 0.0
    %1147 = vmatpush1.msra.mxu0 0.0
    %1148 = vmatprep.subr.mxu0 0.0
    %1149 = vmatpush1.msra.mxu0 0.0
    %1150 = vmatprep.mubr.f32.mxu0 0.0
    %1151 = vmatmul.mubr.f32.gmra.mrb[0].mxu0 %v1084
    %v1152 = vpop.f32.mrb[0].mxu0
    %v1153 = vadd.f32 0.0, %v1152
    %v1154 = vpop.f32.mrb[0].mxu0
    %1155 = vdwg.mxu0
    %v1156 = vadd.f32 %v1082, %v1153
    %v1157 = vsel %vm232, %v1079, 0
    %1159 = vmatprep.subr.mxu0 0.0
    %1160 = vmatpush1.msra.mxu0 %v224
    %1161 = vmatprep.subr.mxu0 0.0
    %1162 = vmatpush1.msra.mxu0 %v225
    %1163 = vmatprep.subr.mxu0 0.0
    %1164 = vmatpush1.msra.mxu0 0.0
    %1165 = vmatprep.subr.mxu0 0.0
    %1166 = vmatpush1.msra.mxu0 0.0
    %1167 = vmatprep.subr.mxu0 0.0
    %1168 = vmatpush1.msra.mxu0 0.0
    %1169 = vmatprep.subr.mxu0 0.0
    %1170 = vmatpush1.msra.mxu0 0.0
    %1171 = vmatprep.subr.mxu0 0.0
    %1172 = vmatpush1.msra.mxu0 0.0
    %1173 = vmatprep.subr.mxu0 0.0
    %1174 = vmatpush1.msra.mxu0 0.0
    %1175 = vmatprep.subr.mxu0 0.0
    %1176 = vmatpush1.msra.mxu0 0.0
    %1177 = vmatprep.subr.mxu0 0.0
    %1178 = vmatpush1.msra.mxu0 0.0
    %1179 = vmatprep.subr.mxu0 0.0
    %1180 = vmatpush1.msra.mxu0 0.0
    %1181 = vmatprep.subr.mxu0 0.0
    %1182 = vmatpush1.msra.mxu0 0.0
    %1183 = vmatprep.subr.mxu0 0.0
    %1184 = vmatpush1.msra.mxu0 0.0
    %1185 = vmatprep.subr.mxu0 0.0
    %1186 = vmatpush1.msra.mxu0 0.0
    %1187 = vmatprep.subr.mxu0 0.0
    %1188 = vmatpush1.msra.mxu0 0.0
    %1189 = vmatprep.subr.mxu0 0.0
    %1190 = vmatpush1.msra.mxu0 0.0
    %1191 = vmatprep.subr.mxu0 0.0
    %1192 = vmatpush1.msra.mxu0 0.0
    %1193 = vmatprep.subr.mxu0 0.0
    %1194 = vmatpush1.msra.mxu0 0.0
    %1195 = vmatprep.subr.mxu0 0.0
    %1196 = vmatpush1.msra.mxu0 0.0
    %1197 = vmatprep.subr.mxu0 0.0
    %1198 = vmatpush1.msra.mxu0 0.0
    %1199 = vmatprep.subr.mxu0 0.0
    %1200 = vmatpush1.msra.mxu0 0.0
    %1201 = vmatprep.subr.mxu0 0.0
    %1202 = vmatpush1.msra.mxu0 0.0
    %1203 = vmatprep.subr.mxu0 0.0
    %1204 = vmatpush1.msra.mxu0 0.0
    %1205 = vmatprep.subr.mxu0 0.0
    %1206 = vmatpush1.msra.mxu0 0.0
    %1207 = vmatprep.subr.mxu0 0.0
    %1208 = vmatpush1.msra.mxu0 0.0
    %1209 = vmatprep.subr.mxu0 0.0
    %1210 = vmatpush1.msra.mxu0 0.0
    %1211 = vmatprep.subr.mxu0 0.0
    %1212 = vmatpush1.msra.mxu0 0.0
    %1213 = vmatprep.subr.mxu0 0.0
    %1214 = vmatpush1.msra.mxu0 0.0
    %1215 = vmatprep.subr.mxu0 0.0
    %1216 = vmatpush1.msra.mxu0 0.0
    %1217 = vmatprep.subr.mxu0 0.0
    %1218 = vmatpush1.msra.mxu0 0.0
    %1219 = vmatprep.subr.mxu0 0.0
    %1220 = vmatpush1.msra.mxu0 0.0
    %1221 = vmatprep.subr.mxu0 0.0
    %1222 = vmatpush1.msra.mxu0 0.0
    %1223 = vmatprep.mubr.f32.mxu0 0.0
    %1224 = vmatmul.mubr.f32.gmra.mrb[0].mxu0 %v1157
    %v1225 = vpop.f32.mrb[0].mxu0
    %v1226 = vadd.f32 0.0, %v1225
    %v1227 = vpop.f32.mrb[0].mxu0
    %1228 = vdwg.mxu0
    %1230 = vrot.lane.b32.xlu0 %v1226, 64
    %v1231 = vpop.permute.xlu0 %1230
    %v1233 = vadd.f32 %v1083, %v1231
    %v1234 = vxor.u32 %v1156, 2147483648
    %v1235 = vmul.f32 %v1234, 1.442695
    %v1236 = vpow.pop %v1235
    %v1237 = vadd.f32 %v1236, 1.0
    %v1238 = vrcp.pop %v1237
    %v1239 = vmul.f32 1.0, %v1238
    %v1240 = vtanh.pop %v1156
    %v1241 = vmul.f32 %v1239, %v1041
    %1243 = vrot.lane.b32.xlu0 %v1240, 80
    %v1244 = vpop.permute.xlu0 %1243
    %v1246 = vmul.f32 %v1239, %v1244
    %1248 = vrot.lane.b32.xlu0 %v1246, 16
    %v1249 = vpop.permute.xlu0 %1248
    %v1251 = vadd.f32 %v1241, %v1249
    %v1252 = vtanh.pop %v1251
    %1254 = vrot.lane.b32.xlu0 %v1252, 16
    %v1255 = vpop.permute.xlu0 %1254
    %v1257 = vmul.f32 %v1239, %v1255
    %v1258 = vxor.u32 %v1233, 2147483648
    %v1259 = vmul.f32 %v1258, 1.442695
    %v1260 = vpow.pop %v1259
    %v1261 = vadd.f32 %v1260, 1.0
    %v1262 = vrcp.pop %v1261
    %v1263 = vmul.f32 1.0, %v1262
    %v1264 = vtanh.pop %v1233
    %v1265 = vmul.f32 %v1263, %v1065
    %1267 = vrot.lane.b32.xlu0 %v1264, 80
    %v1268 = vpop.permute.xlu0 %1267
    %v1270 = vmul.f32 %v1263, %v1268
    %1272 = vrot.lane.b32.xlu0 %v1270, 16
    %v1273 = vpop.permute.xlu0 %1272
    %v1275 = vadd.f32 %v1265, %v1273
    %v1276 = vtanh.pop %v1275
    %1278 = vrot.lane.b32.xlu0 %v1276, 16
    %v1279 = vpop.permute.xlu0 %1278
    %v1281 = vmul.f32 %v1263, %v1279
    %1283 = vrot.lane.b32.xlu0 %v1257, 96
    %v1284 = vpop.permute.xlu0 %1283
    %1286 = vst.msk [vmem:[#allocation3 + $0x4] sm:$0x1] %vm445, %v1284
    %1288 = vrot.lane.b32.xlu0 %v1281, 32
    %v1289 = vpop.permute.xlu0 %1288
    %1291 = vst.msk [vmem:[#allocation4 + $0x3] sm:$0x1] %vm445, %v1289
    %v1292 = vld [vmem:[#allocation2 + $0x5] sm:$0x1]
    %v1293 = vld [vmem:[#allocation2 + $0x2] sm:$0x1]
    %v1294 = vsel %vm232, %v1284, 0
    %1296 = vmatprep.subr.mxu0 0.0
    %1297 = vmatpush1.msra.mxu0 %v222
    %1298 = vmatprep.subr.mxu0 0.0
    %1299 = vmatpush1.msra.mxu0 %v223
    %1300 = vmatprep.subr.mxu0 0.0
    %1301 = vmatpush1.msra.mxu0 0.0
    %1302 = vmatprep.subr.mxu0 0.0
    %1303 = vmatpush1.msra.mxu0 0.0
    %1304 = vmatprep.subr.mxu0 0.0
    %1305 = vmatpush1.msra.mxu0 0.0
    %1306 = vmatprep.subr.mxu0 0.0
    %1307 = vmatpush1.msra.mxu0 0.0
    %1308 = vmatprep.subr.mxu0 0.0
    %1309 = vmatpush1.msra.mxu0 0.0
    %1310 = vmatprep.subr.mxu0 0.0
    %1311 = vmatpush1.msra.mxu0 0.0
    %1312 = vmatprep.subr.mxu0 0.0
    %1313 = vmatpush1.msra.mxu0 0.0
    %1314 = vmatprep.subr.mxu0 0.0
    %1315 = vmatpush1.msra.mxu0 0.0
    %1316 = vmatprep.subr.mxu0 0.0
    %1317 = vmatpush1.msra.mxu0 0.0
    %1318 = vmatprep.subr.mxu0 0.0
    %1319 = vmatpush1.msra.mxu0 0.0
    %1320 = vmatprep.subr.mxu0 0.0
    %1321 = vmatpush1.msra.mxu0 0.0
    %1322 = vmatprep.subr.mxu0 0.0
    %1323 = vmatpush1.msra.mxu0 0.0
    %1324 = vmatprep.subr.mxu0 0.0
    %1325 = vmatpush1.msra.mxu0 0.0
    %1326 = vmatprep.subr.mxu0 0.0
    %1327 = vmatpush1.msra.mxu0 0.0
    %1328 = vmatprep.subr.mxu0 0.0
    %1329 = vmatpush1.msra.mxu0 0.0
    %1330 = vmatprep.subr.mxu0 0.0
    %1331 = vmatpush1.msra.mxu0 0.0
    %1332 = vmatprep.subr.mxu0 0.0
    %1333 = vmatpush1.msra.mxu0 0.0
    %1334 = vmatprep.subr.mxu0 0.0
    %1335 = vmatpush1.msra.mxu0 0.0
    %1336 = vmatprep.subr.mxu0 0.0
    %1337 = vmatpush1.msra.mxu0 0.0
    %1338 = vmatprep.subr.mxu0 0.0
    %1339 = vmatpush1.msra.mxu0 0.0
    %1340 = vmatprep.subr.mxu0 0.0
    %1341 = vmatpush1.msra.mxu0 0.0
    %1342 = vmatprep.subr.mxu0 0.0
    %1343 = vmatpush1.msra.mxu0 0.0
    %1344 = vmatprep.subr.mxu0 0.0
    %1345 = vmatpush1.msra.mxu0 0.0
    %1346 = vmatprep.subr.mxu0 0.0
    %1347 = vmatpush1.msra.mxu0 0.0
    %1348 = vmatprep.subr.mxu0 0.0
    %1349 = vmatpush1.msra.mxu0 0.0
    %1350 = vmatprep.subr.mxu0 0.0
    %1351 = vmatpush1.msra.mxu0 0.0
    %1352 = vmatprep.subr.mxu0 0.0
    %1353 = vmatpush1.msra.mxu0 0.0
    %1354 = vmatprep.subr.mxu0 0.0
    %1355 = vmatpush1.msra.mxu0 0.0
    %1356 = vmatprep.subr.mxu0 0.0
    %1357 = vmatpush1.msra.mxu0 0.0
    %1358 = vmatprep.subr.mxu0 0.0
    %1359 = vmatpush1.msra.mxu0 0.0
    %1360 = vmatprep.mubr.f32.mxu0 0.0
    %1361 = vmatmul.mubr.f32.gmra.mrb[0].mxu0 %v1294
    %v1362 = vpop.f32.mrb[0].mxu0
    %v1363 = vadd.f32 0.0, %v1362
    %v1364 = vpop.f32.mrb[0].mxu0
    %1365 = vdwg.mxu0
    %v1366 = vadd.f32 %v1292, %v1363
    %v1367 = vsel %vm232, %v1289, 0
    %1369 = vmatprep.subr.mxu0 0.0
    %1370 = vmatpush1.msra.mxu0 %v224
    %1371 = vmatprep.subr.mxu0 0.0
    %1372 = vmatpush1.msra.mxu0 %v225
    %1373 = vmatprep.subr.mxu0 0.0
    %1374 = vmatpush1.msra.mxu0 0.0
    %1375 = vmatprep.subr.mxu0 0.0
    %1376 = vmatpush1.msra.mxu0 0.0
    %1377 = vmatprep.subr.mxu0 0.0
    %1378 = vmatpush1.msra.mxu0 0.0
    %1379 = vmatprep.subr.mxu0 0.0
    %1380 = vmatpush1.msra.mxu0 0.0
    %1381 = vmatprep.subr.mxu0 0.0
    %1382 = vmatpush1.msra.mxu0 0.0
    %1383 = vmatprep.subr.mxu0 0.0
    %1384 = vmatpush1.msra.mxu0 0.0
    %1385 = vmatprep.subr.mxu0 0.0
    %1386 = vmatpush1.msra.mxu0 0.0
    %1387 = vmatprep.subr.mxu0 0.0
    %1388 = vmatpush1.msra.mxu0 0.0
    %1389 = vmatprep.subr.mxu0 0.0
    %1390 = vmatpush1.msra.mxu0 0.0
    %1391 = vmatprep.subr.mxu0 0.0
    %1392 = vmatpush1.msra.mxu0 0.0
    %1393 = vmatprep.subr.mxu0 0.0
    %1394 = vmatpush1.msra.mxu0 0.0
    %1395 = vmatprep.subr.mxu0 0.0
    %1396 = vmatpush1.msra.mxu0 0.0
    %1397 = vmatprep.subr.mxu0 0.0
    %1398 = vmatpush1.msra.mxu0 0.0
    %1399 = vmatprep.subr.mxu0 0.0
    %1400 = vmatpush1.msra.mxu0 0.0
    %1401 = vmatprep.subr.mxu0 0.0
    %1402 = vmatpush1.msra.mxu0 0.0
    %1403 = vmatprep.subr.mxu0 0.0
    %1404 = vmatpush1.msra.mxu0 0.0
    %1405 = vmatprep.subr.mxu0 0.0
    %1406 = vmatpush1.msra.mxu0 0.0
    %1407 = vmatprep.subr.mxu0 0.0
    %1408 = vmatpush1.msra.mxu0 0.0
    %1409 = vmatprep.subr.mxu0 0.0
    %1410 = vmatpush1.msra.mxu0 0.0
    %1411 = vmatprep.subr.mxu0 0.0
    %1412 = vmatpush1.msra.mxu0 0.0
    %1413 = vmatprep.subr.mxu0 0.0
    %1414 = vmatpush1.msra.mxu0 0.0
    %1415 = vmatprep.subr.mxu0 0.0
    %1416 = vmatpush1.msra.mxu0 0.0
    %1417 = vmatprep.subr.mxu0 0.0
    %1418 = vmatpush1.msra.mxu0 0.0
    %1419 = vmatprep.subr.mxu0 0.0
    %1420 = vmatpush1.msra.mxu0 0.0
    %1421 = vmatprep.subr.mxu0 0.0
    %1422 = vmatpush1.msra.mxu0 0.0
    %1423 = vmatprep.subr.mxu0 0.0
    %1424 = vmatpush1.msra.mxu0 0.0
    %1425 = vmatprep.subr.mxu0 0.0
    %1426 = vmatpush1.msra.mxu0 0.0
    %1427 = vmatprep.subr.mxu0 0.0
    %1428 = vmatpush1.msra.mxu0 0.0
    %1429 = vmatprep.subr.mxu0 0.0
    %1430 = vmatpush1.msra.mxu0 0.0
    %1431 = vmatprep.subr.mxu0 0.0
    %1432 = vmatpush1.msra.mxu0 0.0
    %1433 = vmatprep.mubr.f32.mxu0 0.0
    %1434 = vmatmul.mubr.f32.gmra.mrb[0].mxu0 %v1367
    %v1435 = vpop.f32.mrb[0].mxu0
    %v1436 = vadd.f32 0.0, %v1435
    %v1437 = vpop.f32.mrb[0].mxu0
    %1438 = vdwg.mxu0
    %1440 = vrot.lane.b32.xlu0 %v1436, 64
    %v1441 = vpop.permute.xlu0 %1440
    %v1443 = vadd.f32 %v1293, %v1441
    %v1444 = vxor.u32 %v1366, 2147483648
    %v1445 = vmul.f32 %v1444, 1.442695
    %v1446 = vpow.pop %v1445
    %v1447 = vadd.f32 %v1446, 1.0
    %v1448 = vrcp.pop %v1447
    %v1449 = vmul.f32 1.0, %v1448
    %v1450 = vtanh.pop %v1366
    %v1451 = vmul.f32 %v1449, %v1251
    %1453 = vrot.lane.b32.xlu0 %v1450, 80
    %v1454 = vpop.permute.xlu0 %1453
    %v1456 = vmul.f32 %v1449, %v1454
    %1458 = vrot.lane.b32.xlu0 %v1456, 16
    %v1459 = vpop.permute.xlu0 %1458
    %v1461 = vadd.f32 %v1451, %v1459
    %v1462 = vtanh.pop %v1461
    %1464 = vrot.lane.b32.xlu0 %v1462, 16
    %v1465 = vpop.permute.xlu0 %1464
    %v1467 = vmul.f32 %v1449, %v1465
    %v1468 = vxor.u32 %v1443, 2147483648
    %v1469 = vmul.f32 %v1468, 1.442695
    %v1470 = vpow.pop %v1469
    %v1471 = vadd.f32 %v1470, 1.0
    %v1472 = vrcp.pop %v1471
    %v1473 = vmul.f32 1.0, %v1472
    %v1474 = vtanh.pop %v1443
    %v1475 = vmul.f32 %v1473, %v1275
    %1477 = vrot.lane.b32.xlu0 %v1474, 80
    %v1478 = vpop.permute.xlu0 %1477
    %v1480 = vmul.f32 %v1473, %v1478
    %1482 = vrot.lane.b32.xlu0 %v1480, 16
    %v1483 = vpop.permute.xlu0 %1482
    %v1485 = vadd.f32 %v1475, %v1483
    %v1486 = vtanh.pop %v1485
    %1488 = vrot.lane.b32.xlu0 %v1486, 16
    %v1489 = vpop.permute.xlu0 %1488
    %v1491 = vmul.f32 %v1473, %v1489
    %1493 = vrot.lane.b32.xlu0 %v1467, 96
    %v1494 = vpop.permute.xlu0 %1493
    %1496 = vst.msk [vmem:[#allocation3 + $0x5] sm:$0x1] %vm445, %v1494
    %1498 = vrot.lane.b32.xlu0 %v1491, 32
    %v1499 = vpop.permute.xlu0 %1498
    %1501 = vst.msk [vmem:[#allocation4 + $0x2] sm:$0x1] %vm445, %v1499
    %v1502 = vld [vmem:[#allocation2 + $0x6] sm:$0x1]
    %v1503 = vld [vmem:[#allocation2 + $0x1] sm:$0x1]
    %v1504 = vsel %vm232, %v1494, 0
    %1506 = vmatprep.subr.mxu0 0.0
    %1507 = vmatpush1.msra.mxu0 %v222
    %1508 = vmatprep.subr.mxu0 0.0
    %1509 = vmatpush1.msra.mxu0 %v223
    %1510 = vmatprep.subr.mxu0 0.0
    %1511 = vmatpush1.msra.mxu0 0.0
    %1512 = vmatprep.subr.mxu0 0.0
    %1513 = vmatpush1.msra.mxu0 0.0
    %1514 = vmatprep.subr.mxu0 0.0
    %1515 = vmatpush1.msra.mxu0 0.0
    %1516 = vmatprep.subr.mxu0 0.0
    %1517 = vmatpush1.msra.mxu0 0.0
    %1518 = vmatprep.subr.mxu0 0.0
    %1519 = vmatpush1.msra.mxu0 0.0
    %1520 = vmatprep.subr.mxu0 0.0
    %1521 = vmatpush1.msra.mxu0 0.0
    %1522 = vmatprep.subr.mxu0 0.0
    %1523 = vmatpush1.msra.mxu0 0.0
    %1524 = vmatprep.subr.mxu0 0.0
    %1525 = vmatpush1.msra.mxu0 0.0
    %1526 = vmatprep.subr.mxu0 0.0
    %1527 = vmatpush1.msra.mxu0 0.0
    %1528 = vmatprep.subr.mxu0 0.0
    %1529 = vmatpush1.msra.mxu0 0.0
    %1530 = vmatprep.subr.mxu0 0.0
    %1531 = vmatpush1.msra.mxu0 0.0
    %1532 = vmatprep.subr.mxu0 0.0
    %1533 = vmatpush1.msra.mxu0 0.0
    %1534 = vmatprep.subr.mxu0 0.0
    %1535 = vmatpush1.msra.mxu0 0.0
    %1536 = vmatprep.subr.mxu0 0.0
    %1537 = vmatpush1.msra.mxu0 0.0
    %1538 = vmatprep.subr.mxu0 0.0
    %1539 = vmatpush1.msra.mxu0 0.0
    %1540 = vmatprep.subr.mxu0 0.0
    %1541 = vmatpush1.msra.mxu0 0.0
    %1542 = vmatprep.subr.mxu0 0.0
    %1543 = vmatpush1.msra.mxu0 0.0
    %1544 = vmatprep.subr.mxu0 0.0
    %1545 = vmatpush1.msra.mxu0 0.0
    %1546 = vmatprep.subr.mxu0 0.0
    %1547 = vmatpush1.msra.mxu0 0.0
    %1548 = vmatprep.subr.mxu0 0.0
    %1549 = vmatpush1.msra.mxu0 0.0
    %1550 = vmatprep.subr.mxu0 0.0
    %1551 = vmatpush1.msra.mxu0 0.0
    %1552 = vmatprep.subr.mxu0 0.0
    %1553 = vmatpush1.msra.mxu0 0.0
    %1554 = vmatprep.subr.mxu0 0.0
    %1555 = vmatpush1.msra.mxu0 0.0
    %1556 = vmatprep.subr.mxu0 0.0
    %1557 = vmatpush1.msra.mxu0 0.0
    %1558 = vmatprep.subr.mxu0 0.0
    %1559 = vmatpush1.msra.mxu0 0.0
    %1560 = vmatprep.subr.mxu0 0.0
    %1561 = vmatpush1.msra.mxu0 0.0
    %1562 = vmatprep.subr.mxu0 0.0
    %1563 = vmatpush1.msra.mxu0 0.0
    %1564 = vmatprep.subr.mxu0 0.0
    %1565 = vmatpush1.msra.mxu0 0.0
    %1566 = vmatprep.subr.mxu0 0.0
    %1567 = vmatpush1.msra.mxu0 0.0
    %1568 = vmatprep.subr.mxu0 0.0
    %1569 = vmatpush1.msra.mxu0 0.0
    %1570 = vmatprep.mubr.f32.mxu0 0.0
    %1571 = vmatmul.mubr.f32.gmra.mrb[0].mxu0 %v1504
    %v1572 = vpop.f32.mrb[0].mxu0
    %v1573 = vadd.f32 0.0, %v1572
    %v1574 = vpop.f32.mrb[0].mxu0
    %1575 = vdwg.mxu0
    %v1576 = vadd.f32 %v1502, %v1573
    %v1577 = vsel %vm232, %v1499, 0
    %1579 = vmatprep.subr.mxu0 0.0
    %1580 = vmatpush1.msra.mxu0 %v224
    %1581 = vmatprep.subr.mxu0 0.0
    %1582 = vmatpush1.msra.mxu0 %v225
    %1583 = vmatprep.subr.mxu0 0.0
    %1584 = vmatpush1.msra.mxu0 0.0
    %1585 = vmatprep.subr.mxu0 0.0
    %1586 = vmatpush1.msra.mxu0 0.0
    %1587 = vmatprep.subr.mxu0 0.0
    %1588 = vmatpush1.msra.mxu0 0.0
    %1589 = vmatprep.subr.mxu0 0.0
    %1590 = vmatpush1.msra.mxu0 0.0
    %1591 = vmatprep.subr.mxu0 0.0
    %1592 = vmatpush1.msra.mxu0 0.0
    %1593 = vmatprep.subr.mxu0 0.0
    %1594 = vmatpush1.msra.mxu0 0.0
    %1595 = vmatprep.subr.mxu0 0.0
    %1596 = vmatpush1.msra.mxu0 0.0
    %1597 = vmatprep.subr.mxu0 0.0
    %1598 = vmatpush1.msra.mxu0 0.0
    %1599 = vmatprep.subr.mxu0 0.0
    %1600 = vmatpush1.msra.mxu0 0.0
    %1601 = vmatprep.subr.mxu0 0.0
    %1602 = vmatpush1.msra.mxu0 0.0
    %1603 = vmatprep.subr.mxu0 0.0
    %1604 = vmatpush1.msra.mxu0 0.0
    %1605 = vmatprep.subr.mxu0 0.0
    %1606 = vmatpush1.msra.mxu0 0.0
    %1607 = vmatprep.subr.mxu0 0.0
    %1608 = vmatpush1.msra.mxu0 0.0
    %1609 = vmatprep.subr.mxu0 0.0
    %1610 = vmatpush1.msra.mxu0 0.0
    %1611 = vmatprep.subr.mxu0 0.0
    %1612 = vmatpush1.msra.mxu0 0.0
    %1613 = vmatprep.subr.mxu0 0.0
    %1614 = vmatpush1.msra.mxu0 0.0
    %1615 = vmatprep.subr.mxu0 0.0
    %1616 = vmatpush1.msra.mxu0 0.0
    %1617 = vmatprep.subr.mxu0 0.0
    %1618 = vmatpush1.msra.mxu0 0.0
    %1619 = vmatprep.subr.mxu0 0.0
    %1620 = vmatpush1.msra.mxu0 0.0
    %1621 = vmatprep.subr.mxu0 0.0
    %1622 = vmatpush1.msra.mxu0 0.0
    %1623 = vmatprep.subr.mxu0 0.0
    %1624 = vmatpush1.msra.mxu0 0.0
    %1625 = vmatprep.subr.mxu0 0.0
    %1626 = vmatpush1.msra.mxu0 0.0
    %1627 = vmatprep.subr.mxu0 0.0
    %1628 = vmatpush1.msra.mxu0 0.0
    %1629 = vmatprep.subr.mxu0 0.0
    %1630 = vmatpush1.msra.mxu0 0.0
    %1631 = vmatprep.subr.mxu0 0.0
    %1632 = vmatpush1.msra.mxu0 0.0
    %1633 = vmatprep.subr.mxu0 0.0
    %1634 = vmatpush1.msra.mxu0 0.0
    %1635 = vmatprep.subr.mxu0 0.0
    %1636 = vmatpush1.msra.mxu0 0.0
    %1637 = vmatprep.subr.mxu0 0.0
    %1638 = vmatpush1.msra.mxu0 0.0
    %1639 = vmatprep.subr.mxu0 0.0
    %1640 = vmatpush1.msra.mxu0 0.0
    %1641 = vmatprep.subr.mxu0 0.0
    %1642 = vmatpush1.msra.mxu0 0.0
    %1643 = vmatprep.mubr.f32.mxu0 0.0
    %1644 = vmatmul.mubr.f32.gmra.mrb[0].mxu0 %v1577
    %v1645 = vpop.f32.mrb[0].mxu0
    %v1646 = vadd.f32 0.0, %v1645
    %v1647 = vpop.f32.mrb[0].mxu0
    %1648 = vdwg.mxu0
    %1650 = vrot.lane.b32.xlu0 %v1646, 64
    %v1651 = vpop.permute.xlu0 %1650
    %v1653 = vadd.f32 %v1503, %v1651
    %v1654 = vxor.u32 %v1576, 2147483648
    %v1655 = vmul.f32 %v1654, 1.442695
    %v1656 = vpow.pop %v1655
    %v1657 = vadd.f32 %v1656, 1.0
    %v1658 = vrcp.pop %v1657
    %v1659 = vmul.f32 1.0, %v1658
    %v1660 = vtanh.pop %v1576
    %v1661 = vmul.f32 %v1659, %v1461
    %1663 = vrot.lane.b32.xlu0 %v1660, 80
    %v1664 = vpop.permute.xlu0 %1663
    %v1666 = vmul.f32 %v1659, %v1664
    %1668 = vrot.lane.b32.xlu0 %v1666, 16
    %v1669 = vpop.permute.xlu0 %1668
    %v1671 = vadd.f32 %v1661, %v1669
    %v1672 = vtanh.pop %v1671
    %1674 = vrot.lane.b32.xlu0 %v1672, 16
    %v1675 = vpop.permute.xlu0 %1674
    %v1677 = vmul.f32 %v1659, %v1675
    %v1678 = vxor.u32 %v1653, 2147483648
    %v1679 = vmul.f32 %v1678, 1.442695
    %v1680 = vpow.pop %v1679
    %v1681 = vadd.f32 %v1680, 1.0
    %v1682 = vrcp.pop %v1681
    %v1683 = vmul.f32 1.0, %v1682
    %v1684 = vtanh.pop %v1653
    %v1685 = vmul.f32 %v1683, %v1485
    %1687 = vrot.lane.b32.xlu0 %v1684, 80
    %v1688 = vpop.permute.xlu0 %1687
    %v1690 = vmul.f32 %v1683, %v1688
    %1692 = vrot.lane.b32.xlu0 %v1690, 16
    %v1693 = vpop.permute.xlu0 %1692
    %v1695 = vadd.f32 %v1685, %v1693
    %v1696 = vtanh.pop %v1695
    %1698 = vrot.lane.b32.xlu0 %v1696, 16
    %v1699 = vpop.permute.xlu0 %1698
    %v1701 = vmul.f32 %v1683, %v1699
    %1703 = vrot.lane.b32.xlu0 %v1677, 96
    %v1704 = vpop.permute.xlu0 %1703
    %1706 = vst.msk [vmem:[#allocation3 + $0x6] sm:$0x1] %vm445, %v1704
    %1708 = vrot.lane.b32.xlu0 %v1701, 32
    %v1709 = vpop.permute.xlu0 %1708
    %1711 = vst.msk [vmem:[#allocation4 + $0x1] sm:$0x1] %vm445, %v1709
    %v1712 = vld [vmem:[#allocation2 + $0x7] sm:$0x1]
    %v1713 = vld [vmem:[#allocation2] sm:$0x1]
    %v1714 = vsel %vm232, %v1704, 0
    %1716 = vmatprep.subr.mxu0 0.0
    %1717 = vmatpush1.msra.mxu0 %v222
    %1718 = vmatprep.subr.mxu0 0.0
    %1719 = vmatpush1.msra.mxu0 %v223
    %1720 = vmatprep.subr.mxu0 0.0
    %1721 = vmatpush1.msra.mxu0 0.0
    %1722 = vmatprep.subr.mxu0 0.0
    %1723 = vmatpush1.msra.mxu0 0.0
    %1724 = vmatprep.subr.mxu0 0.0
    %1725 = vmatpush1.msra.mxu0 0.0
    %1726 = vmatprep.subr.mxu0 0.0
    %1727 = vmatpush1.msra.mxu0 0.0
    %1728 = vmatprep.subr.mxu0 0.0
    %1729 = vmatpush1.msra.mxu0 0.0
    %1730 = vmatprep.subr.mxu0 0.0
    %1731 = vmatpush1.msra.mxu0 0.0
    %1732 = vmatprep.subr.mxu0 0.0
    %1733 = vmatpush1.msra.mxu0 0.0
    %1734 = vmatprep.subr.mxu0 0.0
    %1735 = vmatpush1.msra.mxu0 0.0
    %1736 = vmatprep.subr.mxu0 0.0
    %1737 = vmatpush1.msra.mxu0 0.0
    %1738 = vmatprep.subr.mxu0 0.0
    %1739 = vmatpush1.msra.mxu0 0.0
    %1740 = vmatprep.subr.mxu0 0.0
    %1741 = vmatpush1.msra.mxu0 0.0
    %1742 = vmatprep.subr.mxu0 0.0
    %1743 = vmatpush1.msra.mxu0 0.0
    %1744 = vmatprep.subr.mxu0 0.0
    %1745 = vmatpush1.msra.mxu0 0.0
    %1746 = vmatprep.subr.mxu0 0.0
    %1747 = vmatpush1.msra.mxu0 0.0
    %1748 = vmatprep.subr.mxu0 0.0
    %1749 = vmatpush1.msra.mxu0 0.0
    %1750 = vmatprep.subr.mxu0 0.0
    %1751 = vmatpush1.msra.mxu0 0.0
    %1752 = vmatprep.subr.mxu0 0.0
    %1753 = vmatpush1.msra.mxu0 0.0
    %1754 = vmatprep.subr.mxu0 0.0
    %1755 = vmatpush1.msra.mxu0 0.0
    %1756 = vmatprep.subr.mxu0 0.0
    %1757 = vmatpush1.msra.mxu0 0.0
    %1758 = vmatprep.subr.mxu0 0.0
    %1759 = vmatpush1.msra.mxu0 0.0
    %1760 = vmatprep.subr.mxu0 0.0
    %1761 = vmatpush1.msra.mxu0 0.0
    %1762 = vmatprep.subr.mxu0 0.0
    %1763 = vmatpush1.msra.mxu0 0.0
    %1764 = vmatprep.subr.mxu0 0.0
    %1765 = vmatpush1.msra.mxu0 0.0
    %1766 = vmatprep.subr.mxu0 0.0
    %1767 = vmatpush1.msra.mxu0 0.0
    %1768 = vmatprep.subr.mxu0 0.0
    %1769 = vmatpush1.msra.mxu0 0.0
    %1770 = vmatprep.subr.mxu0 0.0
    %1771 = vmatpush1.msra.mxu0 0.0
    %1772 = vmatprep.subr.mxu0 0.0
    %1773 = vmatpush1.msra.mxu0 0.0
    %1774 = vmatprep.subr.mxu0 0.0
    %1775 = vmatpush1.msra.mxu0 0.0
    %1776 = vmatprep.subr.mxu0 0.0
    %1777 = vmatpush1.msra.mxu0 0.0
    %1778 = vmatprep.subr.mxu0 0.0
    %1779 = vmatpush1.msra.mxu0 0.0
    %1780 = vmatprep.mubr.f32.mxu0 0.0
    %1781 = vmatmul.mubr.f32.gmra.mrb[0].mxu0 %v1714
    %v1782 = vpop.f32.mrb[0].mxu0
    %v1783 = vadd.f32 0.0, %v1782
    %v1784 = vpop.f32.mrb[0].mxu0
    %1785 = vdwg.mxu0
    %v1786 = vadd.f32 %v1712, %v1783
    %v1787 = vsel %vm232, %v1709, 0
    %1789 = vmatprep.subr.mxu0 0.0
    %1790 = vmatpush1.msra.mxu0 %v224
    %1791 = vmatprep.subr.mxu0 0.0
    %1792 = vmatpush1.msra.mxu0 %v225
    %1793 = vmatprep.subr.mxu0 0.0
    %1794 = vmatpush1.msra.mxu0 0.0
    %1795 = vmatprep.subr.mxu0 0.0
    %1796 = vmatpush1.msra.mxu0 0.0
    %1797 = vmatprep.subr.mxu0 0.0
    %1798 = vmatpush1.msra.mxu0 0.0
    %1799 = vmatprep.subr.mxu0 0.0
    %1800 = vmatpush1.msra.mxu0 0.0
    %1801 = vmatprep.subr.mxu0 0.0
    %1802 = vmatpush1.msra.mxu0 0.0
    %1803 = vmatprep.subr.mxu0 0.0
    %1804 = vmatpush1.msra.mxu0 0.0
    %1805 = vmatprep.subr.mxu0 0.0
    %1806 = vmatpush1.msra.mxu0 0.0
    %1807 = vmatprep.subr.mxu0 0.0
    %1808 = vmatpush1.msra.mxu0 0.0
    %1809 = vmatprep.subr.mxu0 0.0
    %1810 = vmatpush1.msra.mxu0 0.0
    %1811 = vmatprep.subr.mxu0 0.0
    %1812 = vmatpush1.msra.mxu0 0.0
    %1813 = vmatprep.subr.mxu0 0.0
    %1814 = vmatpush1.msra.mxu0 0.0
    %1815 = vmatprep.subr.mxu0 0.0
    %1816 = vmatpush1.msra.mxu0 0.0
    %1817 = vmatprep.subr.mxu0 0.0
    %1818 = vmatpush1.msra.mxu0 0.0
    %1819 = vmatprep.subr.mxu0 0.0
    %1820 = vmatpush1.msra.mxu0 0.0
    %1821 = vmatprep.subr.mxu0 0.0
    %1822 = vmatpush1.msra.mxu0 0.0
    %1823 = vmatprep.subr.mxu0 0.0
    %1824 = vmatpush1.msra.mxu0 0.0
    %1825 = vmatprep.subr.mxu0 0.0
    %1826 = vmatpush1.msra.mxu0 0.0
    %1827 = vmatprep.subr.mxu0 0.0
    %1828 = vmatpush1.msra.mxu0 0.0
    %1829 = vmatprep.subr.mxu0 0.0
    %1830 = vmatpush1.msra.mxu0 0.0
    %1831 = vmatprep.subr.mxu0 0.0
    %1832 = vmatpush1.msra.mxu0 0.0
    %1833 = vmatprep.subr.mxu0 0.0
    %1834 = vmatpush1.msra.mxu0 0.0
    %1835 = vmatprep.subr.mxu0 0.0
    %1836 = vmatpush1.msra.mxu0 0.0
    %1837 = vmatprep.subr.mxu0 0.0
    %1838 = vmatpush1.msra.mxu0 0.0
    %1839 = vmatprep.subr.mxu0 0.0
    %1840 = vmatpush1.msra.mxu0 0.0
    %1841 = vmatprep.subr.mxu0 0.0
    %1842 = vmatpush1.msra.mxu0 0.0
    %1843 = vmatprep.subr.mxu0 0.0
    %1844 = vmatpush1.msra.mxu0 0.0
    %1845 = vmatprep.subr.mxu0 0.0
    %1846 = vmatpush1.msra.mxu0 0.0
    %1847 = vmatprep.subr.mxu0 0.0
    %1848 = vmatpush1.msra.mxu0 0.0
    %1849 = vmatprep.subr.mxu0 0.0
    %1850 = vmatpush1.msra.mxu0 0.0
    %1851 = vmatprep.subr.mxu0 0.0
    %1852 = vmatpush1.msra.mxu0 0.0
    %1853 = vmatprep.mubr.f32.mxu0 0.0
    %1854 = vmatmul.mubr.f32.gmra.mrb[0].mxu0 %v1787
    %v1855 = vpop.f32.mrb[0].mxu0
    %v1856 = vadd.f32 0.0, %v1855
    %v1857 = vpop.f32.mrb[0].mxu0
    %1858 = vdwg.mxu0
    %1860 = vrot.lane.b32.xlu0 %v1856, 64
    %v1861 = vpop.permute.xlu0 %1860
    %v1863 = vadd.f32 %v1713, %v1861
    %v1864 = vxor.u32 %v1786, 2147483648
    %v1865 = vmul.f32 %v1864, 1.442695
    %v1866 = vpow.pop %v1865
    %v1867 = vadd.f32 %v1866, 1.0
    %v1868 = vrcp.pop %v1867
    %v1869 = vmul.f32 1.0, %v1868
    %v1870 = vtanh.pop %v1786
    %v1871 = vmul.f32 %v1869, %v1671
    %1873 = vrot.lane.b32.xlu0 %v1870, 80
    %v1874 = vpop.permute.xlu0 %1873
    %v1876 = vmul.f32 %v1869, %v1874
    %1878 = vrot.lane.b32.xlu0 %v1876, 16
    %v1879 = vpop.permute.xlu0 %1878
    %v1881 = vadd.f32 %v1871, %v1879
    %v1882 = vtanh.pop %v1881
    %1884 = vrot.lane.b32.xlu0 %v1882, 16
    %v1885 = vpop.permute.xlu0 %1884
    %v1887 = vmul.f32 %v1869, %v1885
    %v1888 = vxor.u32 %v1863, 2147483648
    %v1889 = vmul.f32 %v1888, 1.442695
    %v1890 = vpow.pop %v1889
    %v1891 = vadd.f32 %v1890, 1.0
    %v1892 = vrcp.pop %v1891
    %v1893 = vmul.f32 1.0, %v1892
    %v1894 = vtanh.pop %v1863
    %v1895 = vmul.f32 %v1893, %v1695
    %1897 = vrot.lane.b32.xlu0 %v1894, 80
    %v1898 = vpop.permute.xlu0 %1897
    %v1900 = vmul.f32 %v1893, %v1898
    %1902 = vrot.lane.b32.xlu0 %v1900, 16
    %v1903 = vpop.permute.xlu0 %1902
    %v1905 = vadd.f32 %v1895, %v1903
    %v1906 = vtanh.pop %v1905
    %1908 = vrot.lane.b32.xlu0 %v1906, 16
    %v1909 = vpop.permute.xlu0 %1908
    %v1911 = vmul.f32 %v1893, %v1909
    %1913 = vrot.lane.b32.xlu0 %v1887, 96
    %v1914 = vpop.permute.xlu0 %1913
    %1916 = vst.msk [vmem:[#allocation3 + $0x7] sm:$0x1] %vm445, %v1914
    %1918 = vrot.lane.b32.xlu0 %v1911, 32
    %v1919 = vpop.permute.xlu0 %1918
    %1921 = vst.msk [vmem:[#allocation4] sm:$0x1] %vm445, %v1919
    %v1922 = vld [vmem:[#allocation3] sm:$0xff]
    %v1923 = vld [vmem:[%s7] sm:$0xff]
    %v1924 = vld [vmem:[%s7 + $0x8] sm:$0xff]
    %v1925 = vld [vmem:[#allocation4] sm:$0xff]
    %v1926 = vld [vmem:[#allocation16] sm:$0xff]
    %v1927 = vld [vmem:[#allocation16 + $0x8] sm:$0xff]
    %v1929 = vsel %vm232, %v1925, 0
    %1931 = vmatprep.subr.mxu0 0.0
    %1932 = vmatpush1.msra.mxu0 %v1926
    %1933 = vmatprep.subr.mxu0 0.0
    %1934 = vmatpush1.msra.mxu0 %v1927
    %1935 = vmatprep.subr.mxu0 0.0
    %1936 = vmatpush1.msra.mxu0 0.0
    %1937 = vmatprep.subr.mxu0 0.0
    %1938 = vmatpush1.msra.mxu0 0.0
    %1939 = vmatprep.subr.mxu0 0.0
    %1940 = vmatpush1.msra.mxu0 0.0
    %1941 = vmatprep.subr.mxu0 0.0
    %1942 = vmatpush1.msra.mxu0 0.0
    %1943 = vmatprep.subr.mxu0 0.0
    %1944 = vmatpush1.msra.mxu0 0.0
    %1945 = vmatprep.subr.mxu0 0.0
    %1946 = vmatpush1.msra.mxu0 0.0
    %1947 = vmatprep.subr.mxu0 0.0
    %1948 = vmatpush1.msra.mxu0 0.0
    %1949 = vmatprep.subr.mxu0 0.0
    %1950 = vmatpush1.msra.mxu0 0.0
    %1951 = vmatprep.subr.mxu0 0.0
    %1952 = vmatpush1.msra.mxu0 0.0
    %1953 = vmatprep.subr.mxu0 0.0
    %1954 = vmatpush1.msra.mxu0 0.0
    %1955 = vmatprep.subr.mxu0 0.0
    %1956 = vmatpush1.msra.mxu0 0.0
    %1957 = vmatprep.subr.mxu0 0.0
    %1958 = vmatpush1.msra.mxu0 0.0
    %1959 = vmatprep.subr.mxu0 0.0
    %1960 = vmatpush1.msra.mxu0 0.0
    %1961 = vmatprep.subr.mxu0 0.0
    %1962 = vmatpush1.msra.mxu0 0.0
    %1963 = vmatprep.subr.mxu0 0.0
    %1964 = vmatpush1.msra.mxu0 0.0
    %1965 = vmatprep.subr.mxu0 0.0
    %1966 = vmatpush1.msra.mxu0 0.0
    %1967 = vmatprep.subr.mxu0 0.0
    %1968 = vmatpush1.msra.mxu0 0.0
    %1969 = vmatprep.subr.mxu0 0.0
    %1970 = vmatpush1.msra.mxu0 0.0
    %1971 = vmatprep.subr.mxu0 0.0
    %1972 = vmatpush1.msra.mxu0 0.0
    %1973 = vmatprep.subr.mxu0 0.0
    %1974 = vmatpush1.msra.mxu0 0.0
    %1975 = vmatprep.subr.mxu0 0.0
    %1976 = vmatpush1.msra.mxu0 0.0
    %1977 = vmatprep.subr.mxu0 0.0
    %1978 = vmatpush1.msra.mxu0 0.0
    %1979 = vmatprep.subr.mxu0 0.0
    %1980 = vmatpush1.msra.mxu0 0.0
    %1981 = vmatprep.subr.mxu0 0.0
    %1982 = vmatpush1.msra.mxu0 0.0
    %1983 = vmatprep.subr.mxu0 0.0
    %1984 = vmatpush1.msra.mxu0 0.0
    %1985 = vmatprep.subr.mxu0 0.0
    %1986 = vmatpush1.msra.mxu0 0.0
    %1987 = vmatprep.subr.mxu0 0.0
    %1988 = vmatpush1.msra.mxu0 0.0
    %1989 = vmatprep.subr.mxu0 0.0
    %1990 = vmatpush1.msra.mxu0 0.0
    %1991 = vmatprep.subr.mxu0 0.0
    %1992 = vmatpush1.msra.mxu0 0.0
    %1993 = vmatprep.subr.mxu0 0.0
    %1994 = vmatpush1.msra.mxu0 0.0
    %1995 = vmatprep.mubr.f32.mxu0 0.0
    %1996 = vmatmul.mubr.f32.gmra.mrb[0].mxu0 %v1929
    %v1997 = vpop.f32.mrb[0].mxu0
    %v1998 = vadd.f32 0.0, %v1997
    %v1999 = vpop.f32.mrb[0].mxu0
    %2000 = vdwg.mxu0
    %v2002 = vsel %vm232, %v1922, 0
    %2004 = vmatprep.subr.mxu0 0.0
    %2005 = vmatpush1.msra.mxu0 %v1923
    %2006 = vmatprep.subr.mxu0 0.0
    %2007 = vmatpush1.msra.mxu0 %v1924
    %2008 = vmatprep.subr.mxu0 0.0
    %2009 = vmatpush1.msra.mxu0 0.0
    %2010 = vmatprep.subr.mxu0 0.0
    %2011 = vmatpush1.msra.mxu0 0.0
    %2012 = vmatprep.subr.mxu0 0.0
    %2013 = vmatpush1.msra.mxu0 0.0
    %2014 = vmatprep.subr.mxu0 0.0
    %2015 = vmatpush1.msra.mxu0 0.0
    %2016 = vmatprep.subr.mxu0 0.0
    %2017 = vmatpush1.msra.mxu0 0.0
    %2018 = vmatprep.subr.mxu0 0.0
    %2019 = vmatpush1.msra.mxu0 0.0
    %2020 = vmatprep.subr.mxu0 0.0
    %2021 = vmatpush1.msra.mxu0 0.0
    %2022 = vmatprep.subr.mxu0 0.0
    %2023 = vmatpush1.msra.mxu0 0.0
    %2024 = vmatprep.subr.mxu0 0.0
    %2025 = vmatpush1.msra.mxu0 0.0
    %2026 = vmatprep.subr.mxu0 0.0
    %2027 = vmatpush1.msra.mxu0 0.0
    %2028 = vmatprep.subr.mxu0 0.0
    %2029 = vmatpush1.msra.mxu0 0.0
    %2030 = vmatprep.subr.mxu0 0.0
    %2031 = vmatpush1.msra.mxu0 0.0
    %2032 = vmatprep.subr.mxu0 0.0
    %2033 = vmatpush1.msra.mxu0 0.0
    %2034 = vmatprep.subr.mxu0 0.0
    %2035 = vmatpush1.msra.mxu0 0.0
    %2036 = vmatprep.subr.mxu0 0.0
    %2037 = vmatpush1.msra.mxu0 0.0
    %2038 = vmatprep.subr.mxu0 0.0
    %2039 = vmatpush1.msra.mxu0 0.0
    %2040 = vmatprep.subr.mxu0 0.0
    %2041 = vmatpush1.msra.mxu0 0.0
    %2042 = vmatprep.subr.mxu0 0.0
    %2043 = vmatpush1.msra.mxu0 0.0
    %2044 = vmatprep.subr.mxu0 0.0
    %2045 = vmatpush1.msra.mxu0 0.0
    %2046 = vmatprep.subr.mxu0 0.0
    %2047 = vmatpush1.msra.mxu0 0.0
    %2048 = vmatprep.subr.mxu0 0.0
    %2049 = vmatpush1.msra.mxu0 0.0
    %2050 = vmatprep.subr.mxu0 0.0
    %2051 = vmatpush1.msra.mxu0 0.0
    %2052 = vmatprep.subr.mxu0 0.0
    %2053 = vmatpush1.msra.mxu0 0.0
    %2054 = vmatprep.subr.mxu0 0.0
    %2055 = vmatpush1.msra.mxu0 0.0
    %2056 = vmatprep.subr.mxu0 0.0
    %2057 = vmatpush1.msra.mxu0 0.0
    %2058 = vmatprep.subr.mxu0 0.0
    %2059 = vmatpush1.msra.mxu0 0.0
    %2060 = vmatprep.subr.mxu0 0.0
    %2061 = vmatpush1.msra.mxu0 0.0
    %2062 = vmatprep.subr.mxu0 0.0
    %2063 = vmatpush1.msra.mxu0 0.0
    %2064 = vmatprep.subr.mxu0 0.0
    %2065 = vmatpush1.msra.mxu0 0.0
    %2066 = vmatprep.subr.mxu0 0.0
    %2067 = vmatpush1.msra.mxu0 0.0
    %2068 = vmatprep.mubr.f32.mxu0 0.0
    %2069 = vmatmul.mubr.f32.gmra.mrb[0].mxu0 %v2002
    %v2070 = vpop.f32.mrb[0].mxu0
    %v2071 = vadd.f32 %v1998, %v2070
    %v2072 = vpop.f32.mrb[0].mxu0
    %2073 = vdwg.mxu0
    %v2074 = vld [vmem:[%s9] sm:$0x1]
    %v2076 = vlaneseq
    %v2077 = vshrl.u32 %v2076, 7
    %v2078 = vsub.s32 0, %v2077
    %v2079 = vrot.slane %v2074, %v2078
    %v2081 = vadd.f32 %v2071, %v2079
    %2082 = vst [vmem:[#allocation17] sm:$0xff] %v2081
    %v2083 = vld [vmem:[%s10] sm:$0xff]
    %v2084 = vlaneseq
    %v2085 = vshrl.u32 %v2084, 7
    %v2086 = vlaneseq
    %v2087 = vand.u32 %v2086, 127
    %vm2088 = vcmp.eq.s32.totalorder %v2085, %v2087
    %v2089 = vsel %vm2088, 1, 0
    %v2090 = vcvt.s32.f32 %v2089
    %vm2091 = vcmp.eq.s32.totalorder %v2085, 5
    %v2092 = vsel %vm2091, 0.0, -10000.0
    %v2093 = vadd.f32 %v2092, %v2083
    %v2094 = vrot.slane %v2093, 4
    %v2095 = vmax.f32 %v2093, %v2094
    %v2096 = vrot.slane %v2095, 2
    %v2097 = vmax.f32 %v2095, %v2096
    %v2098 = vrot.slane %v2097, 1
    %v2099 = vmax.f32 %v2097, %v2098
    %vm2100 = vcmp.ge.f32.partialorder %v2093, %v2099
    %v2101 = vsel %vm2100, %v2085, 8
    %v2102 = vrot.slane %v2101, 4
    %vm2103 = vcmp.lt.s32.totalorder %v2101, %v2102
    %v2104 = vsel %vm2103, %v2101, %v2102
    %v2105 = vrot.slane %v2104, 2
    %vm2106 = vcmp.lt.s32.totalorder %v2104, %v2105
    %v2107 = vsel %vm2106, %v2104, %v2105
    %v2108 = vrot.slane %v2107, 1
    %vm2109 = vcmp.lt.s32.totalorder %v2107, %v2108
    %v2110 = vsel %vm2109, %v2107, %v2108
    %2111 = vst [vmem:[#allocation18] sm:$0x1] %v2110
    %v2112 = vld [vmem:[#allocation17] sm:$0x1]
    %v2113 = vadd.f32 %v2099, %v2112
    %v2114 = vlaneseq
    %v2115 = vshrl.u32 %v2114, 7
    %v2116 = vsub.s32 0, %v2115
    %v2117 = vrot.slane %v2113, %v2116
    %v2118 = vmul.f32 %v2117, %v2090
    %2119 = vadd.xlane.f32.xlu0 %v2118
    %v2120 = vpop.xlane.xlu0 %2119
    %v2121 = vadd.f32 %v2120, %v2083
    %v2122 = vrot.slane %v2121, 4
    %v2123 = vmax.f32 %v2121, %v2122
    %v2124 = vrot.slane %v2123, 2
    %v2125 = vmax.f32 %v2123, %v2124
    %v2126 = vrot.slane %v2125, 1
    %v2127 = vmax.f32 %v2125, %v2126
    %vm2128 = vcmp.ge.f32.partialorder %v2121, %v2127
    %v2129 = vsel %vm2128, %v2085, 8
    %v2130 = vrot.slane %v2129, 4
    %vm2131 = vcmp.lt.s32.totalorder %v2129, %v2130
    %v2132 = vsel %vm2131, %v2129, %v2130
    %v2133 = vrot.slane %v2132, 2
    %vm2134 = vcmp.lt.s32.totalorder %v2132, %v2133
    %v2135 = vsel %vm2134, %v2132, %v2133
    %v2136 = vrot.slane %v2135, 1
    %vm2137 = vcmp.lt.s32.totalorder %v2135, %v2136
    %v2138 = vsel %vm2137, %v2135, %v2136
    %2139 = vst [vmem:[#allocation18 + $0x1] sm:$0x1] %v2138
    %v2140 = vld [vmem:[#allocation17 + $0x1] sm:$0x1]
    %v2141 = vadd.f32 %v2127, %v2140
    %v2142 = vlaneseq
    %v2143 = vshrl.u32 %v2142, 7
    %v2144 = vsub.s32 0, %v2143
    %v2145 = vrot.slane %v2141, %v2144
    %v2146 = vmul.f32 %v2145, %v2090
    %2147 = vadd.xlane.f32.xlu0 %v2146
    %v2148 = vpop.xlane.xlu0 %2147
    %v2149 = vadd.f32 %v2148, %v2083
    %v2150 = vrot.slane %v2149, 4
    %v2151 = vmax.f32 %v2149, %v2150
    %v2152 = vrot.slane %v2151, 2
    %v2153 = vmax.f32 %v2151, %v2152
    %v2154 = vrot.slane %v2153, 1
    %v2155 = vmax.f32 %v2153, %v2154
    %vm2156 = vcmp.ge.f32.partialorder %v2149, %v2155
    %v2157 = vsel %vm2156, %v2085, 8
    %v2158 = vrot.slane %v2157, 4
    %vm2159 = vcmp.lt.s32.totalorder %v2157, %v2158
    %v2160 = vsel %vm2159, %v2157, %v2158
    %v2161 = vrot.slane %v2160, 2
    %vm2162 = vcmp.lt.s32.totalorder %v2160, %v2161
    %v2163 = vsel %vm2162, %v2160, %v2161
    %v2164 = vrot.slane %v2163, 1
    %vm2165 = vcmp.lt.s32.totalorder %v2163, %v2164
    %v2166 = vsel %vm2165, %v2163, %v2164
    %2167 = vst [vmem:[#allocation18 + $0x2] sm:$0x1] %v2166
    %v2168 = vld [vmem:[#allocation17 + $0x2] sm:$0x1]
    %v2169 = vadd.f32 %v2155, %v2168
    %v2170 = vlaneseq
    %v2171 = vshrl.u32 %v2170, 7
    %v2172 = vsub.s32 0, %v2171
    %v2173 = vrot.slane %v2169, %v2172
    %v2174 = vmul.f32 %v2173, %v2090
    %2175 = vadd.xlane.f32.xlu0 %v2174
    %v2176 = vpop.xlane.xlu0 %2175
    %v2177 = vadd.f32 %v2176, %v2083
    %v2178 = vrot.slane %v2177, 4
    %v2179 = vmax.f32 %v2177, %v2178
    %v2180 = vrot.slane %v2179, 2
    %v2181 = vmax.f32 %v2179, %v2180
    %v2182 = vrot.slane %v2181, 1
    %v2183 = vmax.f32 %v2181, %v2182
    %vm2184 = vcmp.ge.f32.partialorder %v2177, %v2183
    %v2185 = vsel %vm2184, %v2085, 8
    %v2186 = vrot.slane %v2185, 4
    %vm2187 = vcmp.lt.s32.totalorder %v2185, %v2186
    %v2188 = vsel %vm2187, %v2185, %v2186
    %v2189 = vrot.slane %v2188, 2
    %vm2190 = vcmp.lt.s32.totalorder %v2188, %v2189
    %v2191 = vsel %vm2190, %v2188, %v2189
    %v2192 = vrot.slane %v2191, 1
    %vm2193 = vcmp.lt.s32.totalorder %v2191, %v2192
    %v2194 = vsel %vm2193, %v2191, %v2192
    %2195 = vst [vmem:[#allocation18 + $0x3] sm:$0x1] %v2194
    %v2196 = vld [vmem:[#allocation17 + $0x3] sm:$0x1]
    %v2197 = vadd.f32 %v2183, %v2196
    %v2198 = vlaneseq
    %v2199 = vshrl.u32 %v2198, 7
    %v2200 = vsub.s32 0, %v2199
    %v2201 = vrot.slane %v2197, %v2200
    %v2202 = vmul.f32 %v2201, %v2090
    %2203 = vadd.xlane.f32.xlu0 %v2202
    %v2204 = vpop.xlane.xlu0 %2203
    %v2205 = vadd.f32 %v2204, %v2083
    %v2206 = vrot.slane %v2205, 4
    %v2207 = vmax.f32 %v2205, %v2206
    %v2208 = vrot.slane %v2207, 2
    %v2209 = vmax.f32 %v2207, %v2208
    %v2210 = vrot.slane %v2209, 1
    %v2211 = vmax.f32 %v2209, %v2210
    %vm2212 = vcmp.ge.f32.partialorder %v2205, %v2211
    %v2213 = vsel %vm2212, %v2085, 8
    %v2214 = vrot.slane %v2213, 4
    %vm2215 = vcmp.lt.s32.totalorder %v2213, %v2214
    %v2216 = vsel %vm2215, %v2213, %v2214
    %v2217 = vrot.slane %v2216, 2
    %vm2218 = vcmp.lt.s32.totalorder %v2216, %v2217
    %v2219 = vsel %vm2218, %v2216, %v2217
    %v2220 = vrot.slane %v2219, 1
    %vm2221 = vcmp.lt.s32.totalorder %v2219, %v2220
    %v2222 = vsel %vm2221, %v2219, %v2220
    %2223 = vst [vmem:[#allocation18 + $0x4] sm:$0x1] %v2222
    %v2224 = vld [vmem:[#allocation17 + $0x4] sm:$0x1]
    %v2225 = vadd.f32 %v2211, %v2224
    %v2226 = vlaneseq
    %v2227 = vshrl.u32 %v2226, 7
    %v2228 = vsub.s32 0, %v2227
    %v2229 = vrot.slane %v2225, %v2228
    %v2230 = vmul.f32 %v2229, %v2090
    %2231 = vadd.xlane.f32.xlu0 %v2230
    %v2232 = vpop.xlane.xlu0 %2231
    %v2233 = vadd.f32 %v2232, %v2083
    %v2234 = vrot.slane %v2233, 4
    %v2235 = vmax.f32 %v2233, %v2234
    %v2236 = vrot.slane %v2235, 2
    %v2237 = vmax.f32 %v2235, %v2236
    %v2238 = vrot.slane %v2237, 1
    %v2239 = vmax.f32 %v2237, %v2238
    %vm2240 = vcmp.ge.f32.partialorder %v2233, %v2239
    %v2241 = vsel %vm2240, %v2085, 8
    %v2242 = vrot.slane %v2241, 4
    %vm2243 = vcmp.lt.s32.totalorder %v2241, %v2242
    %v2244 = vsel %vm2243, %v2241, %v2242
    %v2245 = vrot.slane %v2244, 2
    %vm2246 = vcmp.lt.s32.totalorder %v2244, %v2245
    %v2247 = vsel %vm2246, %v2244, %v2245
    %v2248 = vrot.slane %v2247, 1
    %vm2249 = vcmp.lt.s32.totalorder %v2247, %v2248
    %v2250 = vsel %vm2249, %v2247, %v2248
    %2251 = vst [vmem:[#allocation18 + $0x5] sm:$0x1] %v2250
    %v2252 = vld [vmem:[#allocation17 + $0x5] sm:$0x1]
    %v2253 = vadd.f32 %v2239, %v2252
    %v2254 = vlaneseq
    %v2255 = vshrl.u32 %v2254, 7
    %v2256 = vsub.s32 0, %v2255
    %v2257 = vrot.slane %v2253, %v2256
    %v2258 = vmul.f32 %v2257, %v2090
    %2259 = vadd.xlane.f32.xlu0 %v2258
    %v2260 = vpop.xlane.xlu0 %2259
    %v2261 = vadd.f32 %v2260, %v2083
    %v2262 = vrot.slane %v2261, 4
    %v2263 = vmax.f32 %v2261, %v2262
    %v2264 = vrot.slane %v2263, 2
    %v2265 = vmax.f32 %v2263, %v2264
    %v2266 = vrot.slane %v2265, 1
    %v2267 = vmax.f32 %v2265, %v2266
    %vm2268 = vcmp.ge.f32.partialorder %v2261, %v2267
    %v2269 = vsel %vm2268, %v2085, 8
    %v2270 = vrot.slane %v2269, 4
    %vm2271 = vcmp.lt.s32.totalorder %v2269, %v2270
    %v2272 = vsel %vm2271, %v2269, %v2270
    %v2273 = vrot.slane %v2272, 2
    %vm2274 = vcmp.lt.s32.totalorder %v2272, %v2273
    %v2275 = vsel %vm2274, %v2272, %v2273
    %v2276 = vrot.slane %v2275, 1
    %vm2277 = vcmp.lt.s32.totalorder %v2275, %v2276
    %v2278 = vsel %vm2277, %v2275, %v2276
    %2279 = vst [vmem:[#allocation18 + $0x6] sm:$0x1] %v2278
    %v2280 = vld [vmem:[#allocation17 + $0x6] sm:$0x1]
    %v2281 = vadd.f32 %v2267, %v2280
    %v2282 = vlaneseq
    %v2283 = vshrl.u32 %v2282, 7
    %v2284 = vsub.s32 0, %v2283
    %v2285 = vrot.slane %v2281, %v2284
    %v2286 = vmul.f32 %v2285, %v2090
    %2287 = vadd.xlane.f32.xlu0 %v2286
    %v2288 = vpop.xlane.xlu0 %2287
    %v2289 = vadd.f32 %v2288, %v2083
    %v2290 = vrot.slane %v2289, 4
    %v2291 = vmax.f32 %v2289, %v2290
    %v2292 = vrot.slane %v2291, 2
    %v2293 = vmax.f32 %v2291, %v2292
    %v2294 = vrot.slane %v2293, 1
    %v2295 = vmax.f32 %v2293, %v2294
    %vm2296 = vcmp.ge.f32.partialorder %v2289, %v2295
    %v2297 = vsel %vm2296, %v2085, 8
    %v2298 = vrot.slane %v2297, 4
    %vm2299 = vcmp.lt.s32.totalorder %v2297, %v2298
    %v2300 = vsel %vm2299, %v2297, %v2298
    %v2301 = vrot.slane %v2300, 2
    %vm2302 = vcmp.lt.s32.totalorder %v2300, %v2301
    %v2303 = vsel %vm2302, %v2300, %v2301
    %v2304 = vrot.slane %v2303, 1
    %vm2305 = vcmp.lt.s32.totalorder %v2303, %v2304
    %v2306 = vsel %vm2305, %v2303, %v2304
    %2307 = vst [vmem:[#allocation18 + $0x7] sm:$0x1] %v2306
    %v2308 = vld [vmem:[#allocation17 + $0x7] sm:$0x1]
    %v2309 = vadd.f32 %v2295, %v2308
    %v2310 = vld [vmem:[%s11] sm:$0x1]
    %v2311 = vadd.f32 %v2309, %v2310
    %2312 = vst [vmem:[#allocation20] sm:$0x1] %v2311
    // Predicated region
    $region78: #{tpu_custom_call.1} parent=1 // pred_check
      _
    $region79: #{tpu_custom_call.1} parent=1 // pred_check_branch
      %2314 = sbr.rel (0) target = $region81
    $region80: #{tpu_custom_call.1} parent=1 // pred_region
      %s2316 = ssub.s32 128, 128
      %2317 = vsyncadd [#allocation7], %s2316
      %s2319 = sshll.u32 [#allocation17], 4
      %s2320 = int_to_ptr.vmem [resolvable:$true] %s2319
      %2322 = dma.vmem_to_hbm [thread:$0]  %s2320, 128, %s12, [#allocation7]
    $region81: #{tpu_custom_call.1} parent=1 // pred_fallthru
      _
    // Predicated region
    $region82: #{tpu_custom_call.1} parent=1 // pred_check
      _
    $region83: #{tpu_custom_call.1} parent=1 // pred_check_branch
      %2324 = sbr.rel (0) target = $region85
    $region84: #{tpu_custom_call.1} parent=1 // pred_region
      %s2326 = ssub.s32 128, 128
      %2327 = vsyncadd [#allocation19], %s2326
      %s2329 = sshll.u32 [#allocation18], 4
      %s2330 = int_to_ptr.vmem [resolvable:$true] %s2329
      %2332 = dma.vmem_to_hbm [thread:$0]  %s2330, 128, %s13, [#allocation19]
    $region85: #{tpu_custom_call.1} parent=1 // pred_fallthru
      _
    // Predicated region
    $region86: #{tpu_custom_call.1} parent=1 // pred_check
      _
    $region87: #{tpu_custom_call.1} parent=1 // pred_check_branch
      %2334 = sbr.rel (0) target = $region89
    $region88: #{tpu_custom_call.1} parent=1 // pred_region
      %s2336 = ssub.s32 16, 16
      %2337 = vsyncadd [#allocation19], %s2336
      %s2339 = sshll.u32 [#allocation20], 4
      %s2340 = int_to_ptr.vmem [resolvable:$true] %s2339
      %2342 = dma.vmem_to_hbm [thread:$0]  %s2340, 16, %s14, [#allocation19]
    $region89: #{tpu_custom_call.1} parent=1 // pred_fallthru
      _
    // Predicated region
    $region90: #{tpu_custom_call.1} parent=1 // pred_check
      _
    $region91: #{tpu_custom_call.1} parent=1 // pred_check_branch
      %2344 = sbr.rel (0) target = $region93
    $region92: #{tpu_custom_call.1} parent=1 // pred_region
      %2345 = dma.done [#allocation7], 128
    $region93: #{tpu_custom_call.1} parent=1 // pred_fallthru
      _
    // Predicated region
    $region94: #{tpu_custom_call.1} parent=1 // pred_check
      _
    $region95: #{tpu_custom_call.1} parent=1 // pred_check_branch
      %2347 = sbr.rel (0) target = $region97
    $region96: #{tpu_custom_call.1} parent=1 // pred_region
      %2348 = dma.done [#allocation19], 128
    $region97: #{tpu_custom_call.1} parent=1 // pred_fallthru
      _
    // Predicated region
    $region98: #{tpu_custom_call.1} parent=1 // pred_check
      _
    $region99: #{tpu_custom_call.1} parent=1 // pred_check_branch
      %2350 = sbr.rel (0) target = $region101
    $region100: #{tpu_custom_call.1} parent=1 // pred_region
      %2351 = dma.done [#allocation19], 16
    $region101: #{tpu_custom_call.1} parent=1 // pred_fallthru
      _
    %2352 = vsyncpa [#allocation6], 1
    %2353 = vsyncpa [#allocation9], 1
    %2354 = vsyncpa [#allocation12], 1
    %2355 = vsyncpa [#allocation15], 1
    %2356 = vsyncpa [#allocation7], 1
    %2357 = vsyncpa [#allocation19], 1

</llo_original>
